<compile_context>
chip_gen: v7x
topology: tpu7x:2x2x1
jax: 0.10.0
libtpu: 0.0.40
codegen_flags: <defaults>
</compile_context>

<pallas_src>
import functools

import jax
import jax.numpy as jnp
from jax import lax
from jax.experimental import pallas as pl
from jax.experimental.pallas import tpu as pltpu


def _tile(dim, pref, align):
    """Largest tile <= pref that divides dim and is a multiple of `align`
    (falls back to the full dim, which is always a legal block size)."""
    if dim <= pref:
        return dim
    t = (pref // align) * align
    while t >= align:
        if dim % t == 0:
            return t
        t -= align
    return dim


def _round_up(x, m):
    return ((x + m - 1) // m) * m


# ---------------------------------------------------------------------------
# Generic tiled linear kernel:  (M, K) @ (K, N) + b  [+ optional ReLU]
# Used for the CNN stand-in projection and the hoisted LSTM input projection.
# ---------------------------------------------------------------------------
def _linear_kernel(x_ref, w_ref, b_ref, o_ref, *, relu):
    y = jnp.dot(x_ref[...], w_ref[...], preferred_element_type=jnp.float32)
    y = y + b_ref[...]
    if relu:
        y = jnp.maximum(y, 0.0)
    o_ref[...] = y


def linear(x, w, b, *, relu=False, tm_max=256, tn_max=512):
    M, K = x.shape
    K2, N = w.shape
    assert K == K2
    tm = _tile(M, tm_max, 8)
    tn = _tile(N, tn_max, 128)
    grid = (M // tm, N // tn)
    cost = pl.CostEstimate(
        flops=2 * M * K * N,
        transcendentals=0,
        bytes_accessed=4 * (M * K + K * N + M * N + N),
    )
    return pl.pallas_call(
        functools.partial(_linear_kernel, relu=relu),
        out_shape=jax.ShapeDtypeStruct((M, N), jnp.float32),
        grid=grid,
        in_specs=[
            pl.BlockSpec((tm, K), lambda i, j: (i, 0)),
            pl.BlockSpec((K, tn), lambda i, j: (0, j)),
            pl.BlockSpec((1, tn), lambda i, j: (0, j)),
        ],
        out_specs=pl.BlockSpec((tm, tn), lambda i, j: (i, j)),
        compiler_params=pltpu.CompilerParams(
            dimension_semantics=("parallel", "parallel")),
        cost_estimate=cost,
    )(x, w, b)


# ---------------------------------------------------------------------------
# Bidirectional LSTM recurrence (input projection already applied).
#   gates_x: (T, N, 8H)  -- [..., :4H] forward gates_x, [..., 4H:] backward.
#   w_hh   : (2, H, 4H)  -- per-direction recurrent weights.
#   output : (T, N, 2H)  -- [..., :H] forward h_t, [..., H:] backward h_t.
# grid=(2,) over direction (parallel -> 2 TCs on v7x); the full time loop runs
# inside the kernel with lax.fori_loop, so there is no per-timestep grid
# overhead and no jnp.flip / concatenate outside.
# ---------------------------------------------------------------------------
def _lstm_rec_kernel(gx_ref, whh_ref, out_ref, h_s, c_s):
    d = pl.program_id(0)            # 0 = forward, 1 = backward
    T = out_ref.shape[0]
    H = h_s.shape[-1]
    last = T - 1

    h_s[...] = jnp.zeros_like(h_s)  # zero initial state (matches init_state)
    c_s[...] = jnp.zeros_like(c_s)

    def step(s, carry):
        # forward walks t = s; backward walks t = T-1-s (pure scalar math).
        t = s + d * (last - 2 * s)
        gates = gx_ref[t] + jnp.dot(h_s[...], whh_ref[0],
                                    preferred_element_type=jnp.float32)
        # PyTorch gate order: i, f, g, o
        i_g = jax.nn.sigmoid(gates[:, 0 * H:1 * H])
        f_g = jax.nn.sigmoid(gates[:, 1 * H:2 * H])
        g_g = jnp.tanh(gates[:, 2 * H:3 * H])
        o_g = jax.nn.sigmoid(gates[:, 3 * H:4 * H])
        c_new = f_g * c_s[...] + i_g * g_g
        h_new = o_g * jnp.tanh(c_new)
        c_s[...] = c_new
        h_s[...] = h_new
        out_ref[t] = h_new          # writes this direction's (T, N, H) half
        return carry

    lax.fori_loop(0, T, step, 0)


def bilstm_recurrence(gates_x, w_hh_stacked, hidden):
    T, N, G2 = gates_x.shape
    H = hidden
    assert G2 == 8 * H
    cost = pl.CostEstimate(
        flops=2 * (2 * T * N * H * 4 * H),
        transcendentals=2 * T * N * 4 * H,
        bytes_accessed=4 * (gates_x.size + w_hh_stacked.size + T * N * 2 * H),
    )
    return pl.pallas_call(
        _lstm_rec_kernel,
        out_shape=jax.ShapeDtypeStruct((T, N, 2 * H), jnp.float32),
        grid=(2,),
        in_specs=[
            pl.BlockSpec((T, N, 4 * H), lambda d: (0, 0, d)),   # per-dir gates
            pl.BlockSpec((1, H, 4 * H), lambda d: (d, 0, 0)),   # per-dir W_hh
        ],
        out_specs=pl.BlockSpec((T, N, H), lambda d: (0, 0, d)), # per-dir half
        scratch_shapes=[pltpu.VMEM((N, H), jnp.float32),        # h carry
                        pltpu.VMEM((N, H), jnp.float32)],       # c carry
        compiler_params=pltpu.CompilerParams(
            dimension_semantics=("parallel",)),
        cost_estimate=cost,
    )(gates_x, w_hh_stacked)


# ---------------------------------------------------------------------------
# Temporal mean pooling + final Linear:  (T, N, 2H) -> (N, Kp)  (Kp padded)
# ---------------------------------------------------------------------------
def _mean_fc_kernel(x_ref, w_ref, b_ref, o_ref):
    pooled = jnp.mean(x_ref[...], axis=0)                       # (N, 2H)
    o_ref[...] = (jnp.dot(pooled, w_ref[...],
                          preferred_element_type=jnp.float32) + b_ref[...])


def mean_fc(x_seq, w, b):
    T, N, F = x_seq.shape
    K = w.shape[1]                                              # 128-multiple
    return pl.pallas_call(
        _mean_fc_kernel,
        out_shape=jax.ShapeDtypeStruct((N, K), jnp.float32),
        grid=(1,),
        in_specs=[
            pl.BlockSpec((T, N, F), lambda i: (0, 0, 0)),
            pl.BlockSpec((F, K), lambda i: (0, 0)),
            pl.BlockSpec((1, K), lambda i: (0, 0)),
        ],
        out_specs=pl.BlockSpec((N, K), lambda i: (0, 0)),
        compiler_params=pltpu.CompilerParams(
            dimension_semantics=("arbitrary",)),
    )(x_seq, w, b)


# ---------------------------------------------------------------------------
# Parameters
# ---------------------------------------------------------------------------
def init_params(key, c_in, spatial, feat_dim, hidden, n_classes):
    """Deterministic parameter init (uniform(-k, k) like PyTorch defaults)."""
    params = {}
    ks = iter(jax.random.split(key, 32))

    def u(k, shape, scale):
        return jax.random.uniform(k, shape, jnp.float32, -scale, scale)

    # CNN stand-in: fold global-average-pool into the projection matrix,
    #   mean_s(x) @ W  ==  x_flat @ (repeat(W, S, axis=0) / S)
    cnn_w = u(next(ks), (c_in, feat_dim), 1.0 / jnp.sqrt(c_in))
    params["cnn_w"] = jnp.repeat(cnn_w, spatial, axis=0) / float(spatial)
    params["cnn_b"] = u(next(ks), (1, feat_dim), 1.0 / jnp.sqrt(c_in))

    # 2-layer bidirectional LSTM.  Layer 0 input = feat_dim, layer 1 = 2H.
    kH = 1.0 / jnp.sqrt(hidden)
    lstm = []
    for in_dim in (feat_dim, 2 * hidden):
        w_ih, w_hh, b = [], [], []
        for _direction in range(2):
            w_ih.append(u(next(ks), (in_dim, 4 * hidden), kH))
            w_hh.append(u(next(ks), (hidden, 4 * hidden), kH))
            # PyTorch adds b_ih + b_hh; fold into one bias.
            b.append(u(next(ks), (1, 4 * hidden), kH)
                     + u(next(ks), (1, 4 * hidden), kH))
        lstm.append({
            "w_ih": jnp.concatenate(w_ih, axis=1),              # (in_dim, 8H)
            "b": jnp.concatenate(b, axis=1),                    # (1, 8H)
            "w_hh": jnp.stack(w_hh, axis=0),                    # (2, H, 4H)
        })
    params["lstm"] = lstm

    # Final Linear (2H -> n_classes), zero-padded to a lane-dense output.
    kF = 1.0 / jnp.sqrt(2 * hidden)
    n_pad = _round_up(n_classes, 128)
    fc_w = u(next(ks), (2 * hidden, n_classes), kF)
    fc_b = u(next(ks), (1, n_classes), kF)
    params["fc_w"] = jnp.pad(fc_w, ((0, 0), (0, n_pad - n_classes)))
    params["fc_b"] = jnp.pad(fc_b, ((0, 0), (0, n_pad - n_classes)))
    return params


# ---------------------------------------------------------------------------
# Full model forward
# ---------------------------------------------------------------------------
@functools.partial(jax.jit, static_argnames=("hidden", "n_classes"))
def resnet_lstm_forward(x, params, *, hidden, n_classes):
    # x: (N, C, F, H, W) — same layout as the PyTorch module input
    n, c, f, h, w = x.shape
    x = jnp.transpose(x, (0, 2, 1, 3, 4)).reshape(n * f, c * h * w)

    # CNN stand-in: pool folded into one (NF, C*S) @ (C*S, D) matmul + ReLU
    feats = linear(x, params["cnn_w"], params["cnn_b"], relu=True)   # (NF, D)
    feat_dim = feats.shape[-1]

    # time-major sequence (F, N, D)
    seq = feats.reshape(n, f, feat_dim).transpose(1, 0, 2)

    # 2-layer bidirectional LSTM (zero initial state, matching init_state)
    for layer in params["lstm"]:
        in_dim = seq.shape[-1]
        # hoisted input projection for both directions: one big MXU matmul
        gx = linear(seq.reshape(f * n, in_dim), layer["w_ih"], layer["b"])
        gx = gx.reshape(f, n, 8 * hidden)
        seq = bilstm_recurrence(gx, layer["w_hh"], hidden)           # (F,N,2H)

    # temporal mean pooling + fc (lane-padded output), slice back to classes
    logits = mean_fc(seq, params["fc_w"], params["fc_b"])
    return logits[:, :n_classes]


if __name__ == "__main__":
    # Small shapes consistent with the module's forward pass.
    N, C, F, H, W = 2, 3, 8, 16, 16       # batch, channels, frames, spatial
    FEAT_DIM = 128                        # stands in for the 512-d ResNet feature
    HIDDEN = 128                          # stands in for hidden_size=1024
    N_CLASSES = 16                        # stands in for n_classes=600

    key = jax.random.PRNGKey(0)
    k_x, k_p = jax.random.split(key)
    x = jax.random.normal(k_x, (N, C, F, H, W), dtype=jnp.float32)
    params = init_params(k_p, C, H * W, FEAT_DIM, HIDDEN, N_CLASSES)

    out = resnet_lstm_forward(x, params, hidden=HIDDEN, n_classes=N_CLASSES)
    jax.block_until_ready(out)
    assert out.shape == (N, N_CLASSES), out.shape
    print("KERNEL_OK")
</pallas_src>

<mosaic_0001>
module attributes {stable_mosaic.version = 11 : i64} {
  func.func @_linear_kernel(%arg0: i32, %arg1: i32, %arg2: memref<16x768xf32, #tpu.memory_space<vmem>>, %arg3: memref<768x128xf32, #tpu.memory_space<vmem>>, %arg4: memref<1x128xf32, #tpu.memory_space<vmem>>, %arg5: memref<16x128xf32, #tpu.memory_space<vmem>>) attributes {dimension_semantics = [#tpu.dimension_semantics<parallel>, #tpu.dimension_semantics<parallel>], iteration_bounds = array<i64: 1, 1>, scalar_prefetch = 0 : i64, scratch_operands = 0 : i64, tpu.core_type = #tpu.core_type<tc>, window_params = [{transform_indices = @transform_0, window_bounds = array<i64: 16, 768>}, {transform_indices = @transform_1, window_bounds = array<i64: 768, 128>}, {transform_indices = @transform_2, window_bounds = array<i64: 1, 128>}, {transform_indices = @transform_3, window_bounds = array<i64: 16, 128>}]} {
    %c0 = arith.constant 0 : index
    %c0_0 = arith.constant 0 : index
    %0 = vector.load %arg2[%c0, %c0_0] : memref<16x768xf32, #tpu.memory_space<vmem>>, vector<16x768xf32>
    %c0_1 = arith.constant 0 : index
    %c0_2 = arith.constant 0 : index
    %1 = vector.load %arg3[%c0_1, %c0_2] : memref<768x128xf32, #tpu.memory_space<vmem>>, vector<768x128xf32>
    %cst = arith.constant dense<0.000000e+00> : vector<16x128xf32>
    %2 = tpu.matmul %0, %1, %cst {dimension_numbers = #tpu.dot_dimension_numbers<[1], [0], [0], [1], [0, 0, 1, 1], [], []>} : vector<16x768xf32>, vector<768x128xf32>, vector<16x128xf32> -> vector<16x128xf32>
    %c0_3 = arith.constant 0 : index
    %c0_4 = arith.constant 0 : index
    %3 = vector.load %arg4[%c0_3, %c0_4] : memref<1x128xf32, #tpu.memory_space<vmem>>, vector<1x128xf32>
    %4 = vector.broadcast %3 : vector<1x128xf32> to vector<16x128xf32>
    %5 = arith.addf %2, %4 : vector<16x128xf32>
    %cst_5 = arith.constant 0.000000e+00 : f32
    %6 = vector.broadcast %cst_5 : f32 to vector<16x128xf32>
    %7 = arith.maximumf %5, %6 : vector<16x128xf32>
    %c0_6 = arith.constant 0 : index
    %c0_7 = arith.constant 0 : index
    %8 = vector.load %arg5[%c0_6, %c0_7] : memref<16x128xf32, #tpu.memory_space<vmem>>, vector<16x128xf32>
    tpu.vector_store %arg5[%c0_6, %c0_7], %7 {strides = array<i32>} : memref<16x128xf32, #tpu.memory_space<vmem>>, vector<16x128xf32>,
    return
  }
  func.func @transform_0(%arg0: i32, %arg1: i32) -> (i32, i32) {
    %c0_i32 = arith.constant 0 : i32
    %c0_i32_0 = arith.constant 0 : i32
    return %arg0, %c0_i32 : i32, i32
  }
  func.func @transform_1(%arg0: i32, %arg1: i32) -> (i32, i32) {
    %c0_i32 = arith.constant 0 : i32
    %c0_i32_0 = arith.constant 0 : i32
    return %c0_i32, %arg1 : i32, i32
  }
  func.func @transform_2(%arg0: i32, %arg1: i32) -> (i32, i32) {
    %c0_i32 = arith.constant 0 : i32
    %c0_i32_0 = arith.constant 0 : i32
    return %c0_i32, %arg1 : i32, i32
  }
  func.func @transform_3(%arg0: i32, %arg1: i32) -> (i32, i32) {
    %c0_i32 = arith.constant 0 : i32
    return %arg0, %arg1 : i32, i32
  }
}

module attributes {stable_mosaic.version = 11 : i64} {
  func.func @_linear_kernel(%arg0: i32, %arg1: i32, %arg2: memref<16x128xf32, #tpu.memory_space<vmem>>, %arg3: memref<128x512xf32, #tpu.memory_space<vmem>>, %arg4: memref<1x512xf32, #tpu.memory_space<vmem>>, %arg5: memref<16x512xf32, #tpu.memory_space<vmem>>) attributes {dimension_semantics = [#tpu.dimension_semantics<parallel>, #tpu.dimension_semantics<parallel>], iteration_bounds = array<i64: 1, 2>, scalar_prefetch = 0 : i64, scratch_operands = 0 : i64, tpu.core_type = #tpu.core_type<tc>, window_params = [{transform_indices = @transform_0, window_bounds = array<i64: 16, 128>}, {transform_indices = @transform_1, window_bounds = array<i64: 128, 512>}, {transform_indices = @transform_2, window_bounds = array<i64: 1, 512>}, {transform_indices = @transform_3, window_bounds = array<i64: 16, 512>}]} {
    %c0 = arith.constant 0 : index
    %c0_0 = arith.constant 0 : index
    %0 = vector.load %arg2[%c0, %c0_0] : memref<16x128xf32, #tpu.memory_space<vmem>>, vector<16x128xf32>
    %c0_1 = arith.constant 0 : index
    %c0_2 = arith.constant 0 : index
    %1 = vector.load %arg3[%c0_1, %c0_2] : memref<128x512xf32, #tpu.memory_space<vmem>>, vector<128x512xf32>
    %cst = arith.constant dense<0.000000e+00> : vector<16x512xf32>
    %2 = tpu.matmul %0, %1, %cst {dimension_numbers = #tpu.dot_dimension_numbers<[1], [0], [0], [1], [0, 0, 1, 1], [], []>} : vector<16x128xf32>, vector<128x512xf32>, vector<16x512xf32> -> vector<16x512xf32>
    %c0_3 = arith.constant 0 : index
    %c0_4 = arith.constant 0 : index
    %3 = vector.load %arg4[%c0_3, %c0_4] : memref<1x512xf32, #tpu.memory_space<vmem>>, vector<1x512xf32>
    %4 = vector.broadcast %3 : vector<1x512xf32> to vector<16x512xf32>
    %5 = arith.addf %2, %4 : vector<16x512xf32>
    %c0_5 = arith.constant 0 : index
    %c0_6 = arith.constant 0 : index
    %6 = vector.load %arg5[%c0_5, %c0_6] : memref<16x512xf32, #tpu.memory_space<vmem>>, vector<16x512xf32>
    tpu.vector_store %arg5[%c0_5, %c0_6], %5 {strides = array<i32>} : memref<16x512xf32, #tpu.memory_space<vmem>>, vector<16x512xf32>,
    return
  }
  func.func @transform_0(%arg0: i32, %arg1: i32) -> (i32, i32) {
    %c0_i32 = arith.constant 0 : i32
    %c0_i32_0 = arith.constant 0 : i32
    return %arg0, %c0_i32 : i32, i32
  }
  func.func @transform_1(%arg0: i32, %arg1: i32) -> (i32, i32) {
    %c0_i32 = arith.constant 0 : i32
    %c0_i32_0 = arith.constant 0 : i32
    return %c0_i32, %arg1 : i32, i32
  }
  func.func @transform_2(%arg0: i32, %arg1: i32) -> (i32, i32) {
    %c0_i32 = arith.constant 0 : i32
    %c0_i32_0 = arith.constant 0 : i32
    return %c0_i32, %arg1 : i32, i32
  }
  func.func @transform_3(%arg0: i32, %arg1: i32) -> (i32, i32) {
    %c0_i32 = arith.constant 0 : i32
    return %arg0, %arg1 : i32, i32
  }
}

module attributes {stable_mosaic.version = 11 : i64} {
  func.func @_lstm_rec_kernel(%arg0: i32, %arg1: memref<8x2x512xf32, #tpu.memory_space<vmem>>, %arg2: memref<1x128x512xf32, #tpu.memory_space<vmem>>, %arg3: memref<8x2x128xf32, #tpu.memory_space<vmem>>, %arg4: memref<2x128xf32, #tpu.memory_space<vmem>>, %arg5: memref<2x128xf32, #tpu.memory_space<vmem>>) attributes {dimension_semantics = [#tpu.dimension_semantics<parallel>], iteration_bounds = array<i64: 2>, scalar_prefetch = 0 : i64, scratch_operands = 2 : i64, tpu.core_type = #tpu.core_type<tc>, window_params = [{transform_indices = @transform_0, window_bounds = array<i64: 8, 2, 512>}, {transform_indices = @transform_1, window_bounds = array<i64: 1, 128, 512>}, {transform_indices = @transform_2, window_bounds = array<i64: 8, 2, 128>}]} {
    %cst = arith.constant 0.000000e+00 : f32
    %0 = vector.broadcast %cst : f32 to vector<2x128xf32>
    %c0 = arith.constant 0 : index
    %c0_0 = arith.constant 0 : index
    %1 = vector.load %arg4[%c0, %c0_0] : memref<2x128xf32, #tpu.memory_space<vmem>>, vector<2x128xf32>
    tpu.vector_store %arg4[%c0, %c0_0], %0 {strides = array<i32>} : memref<2x128xf32, #tpu.memory_space<vmem>>, vector<2x128xf32>,
    %cst_1 = arith.constant 0.000000e+00 : f32
    %2 = vector.broadcast %cst_1 : f32 to vector<2x128xf32>
    %c0_2 = arith.constant 0 : index
    %c0_3 = arith.constant 0 : index
    %3 = vector.load %arg5[%c0_2, %c0_3] : memref<2x128xf32, #tpu.memory_space<vmem>>, vector<2x128xf32>
    tpu.vector_store %arg5[%c0_2, %c0_3], %2 {strides = array<i32>} : memref<2x128xf32, #tpu.memory_space<vmem>>, vector<2x128xf32>,
    %c0_i32 = arith.constant 0 : i32
    %c8_i32 = arith.constant 8 : i32
    %4 = arith.addi %c0_i32, %c8_i32 : i32
    %c1_i32 = arith.constant 1 : i32
    scf.for %arg6 = %c0_i32 to %4 step %c1_i32  : i32 {
      %c2_i32 = arith.constant 2 : i32
      %5 = arith.muli %c2_i32, %arg6 : i32
      %c7_i32 = arith.constant 7 : i32
      %6 = arith.subi %c7_i32, %5 : i32
      %7 = arith.muli %arg0, %6 : i32
      %8 = arith.addi %arg6, %7 : i32
      %9 = arith.index_cast %8 : i32 to index
      %c0_5 = arith.constant 0 : index
      %c0_6 = arith.constant 0 : index
      %10 = vector.load %arg1[%9, %c0_5, %c0_6] : memref<8x2x512xf32, #tpu.memory_space<vmem>>, vector<1x2x512xf32>
      %11 = vector.shape_cast %10 : vector<1x2x512xf32> to vector<2x512xf32>
      %c0_7 = arith.constant 0 : index
      %c0_8 = arith.constant 0 : index
      %12 = vector.load %arg4[%c0_7, %c0_8] : memref<2x128xf32, #tpu.memory_space<vmem>>, vector<2x128xf32>
      %c0_9 = arith.constant 0 : index
      %c0_10 = arith.constant 0 : index
      %c0_11 = arith.constant 0 : index
      %13 = vector.load %arg2[%c0_9, %c0_10, %c0_11] : memref<1x128x512xf32, #tpu.memory_space<vmem>>, vector<1x128x512xf32>
      %14 = vector.shape_cast %13 : vector<1x128x512xf32> to vector<128x512xf32>
      %cst_12 = arith.constant dense<0.000000e+00> : vector<2x512xf32>
      %15 = tpu.matmul %12, %14, %cst_12 {dimension_numbers = #tpu.dot_dimension_numbers<[1], [0], [0], [1], [0, 0, 1, 1], [], []>} : vector<2x128xf32>, vector<128x512xf32>, vector<2x512xf32> -> vector<2x512xf32>
      %16 = arith.addf %11, %15 : vector<2x512xf32>
      %17 = vector.extract_strided_slice %16 {offsets = [0, 0], sizes = [2, 128], strides = [1, 1]} : vector<2x512xf32> to vector<2x128xf32>
      %18 = arith.negf %17 : vector<2x128xf32>
      %19 = math.exp %18 : vector<2x128xf32>
      %cst_13 = arith.constant 1.000000e+00 : f32
      %20 = vector.broadcast %cst_13 : f32 to vector<2x128xf32>
      %21 = arith.addf %20, %19 : vector<2x128xf32>
      %22 = arith.divf %20, %21 : vector<2x128xf32>
      %23 = vector.extract_strided_slice %16 {offsets = [0, 128], sizes = [2, 128], strides = [1, 1]} : vector<2x512xf32> to vector<2x128xf32>
      %24 = arith.negf %23 : vector<2x128xf32>
      %25 = math.exp %24 : vector<2x128xf32>
      %cst_14 = arith.constant 1.000000e+00 : f32
      %26 = vector.broadcast %cst_14 : f32 to vector<2x128xf32>
      %27 = arith.addf %26, %25 : vector<2x128xf32>
      %28 = arith.divf %26, %27 : vector<2x128xf32>
      %29 = vector.extract_strided_slice %16 {offsets = [0, 256], sizes = [2, 128], strides = [1, 1]} : vector<2x512xf32> to vector<2x128xf32>
      %30 = math.tanh %29 : vector<2x128xf32>
      %31 = vector.extract_strided_slice %16 {offsets = [0, 384], sizes = [2, 128], strides = [1, 1]} : vector<2x512xf32> to vector<2x128xf32>
      %32 = arith.negf %31 : vector<2x128xf32>
      %33 = math.exp %32 : vector<2x128xf32>
      %cst_15 = arith.constant 1.000000e+00 : f32
      %34 = vector.broadcast %cst_15 : f32 to vector<2x128xf32>
      %35 = arith.addf %34, %33 : vector<2x128xf32>
      %36 = arith.divf %34, %35 : vector<2x128xf32>
      %c0_16 = arith.constant 0 : index
      %c0_17 = arith.constant 0 : index
      %37 = vector.load %arg5[%c0_16, %c0_17] : memref<2x128xf32, #tpu.memory_space<vmem>>, vector<2x128xf32>
      %38 = arith.mulf %28, %37 : vector<2x128xf32>
      %39 = arith.mulf %22, %30 : vector<2x128xf32>
      %40 = arith.addf %38, %39 : vector<2x128xf32>
      %41 = math.tanh %40 : vector<2x128xf32>
      %42 = arith.mulf %36, %41 : vector<2x128xf32>
      %c0_18 = arith.constant 0 : index
      %c0_19 = arith.constant 0 : index
      %43 = vector.load %arg5[%c0_18, %c0_19] : memref<2x128xf32, #tpu.memory_space<vmem>>, vector<2x128xf32>
      tpu.vector_store %arg5[%c0_18, %c0_19], %40 {strides = array<i32>} : memref<2x128xf32, #tpu.memory_space<vmem>>, vector<2x128xf32>,
      %c0_20 = arith.constant 0 : index
      %c0_21 = arith.constant 0 : index
      %44 = vector.load %arg4[%c0_20, %c0_21] : memref<2x128xf32, #tpu.memory_space<vmem>>, vector<2x128xf32>
      tpu.vector_store %arg4[%c0_20, %c0_21], %42 {strides = array<i32>} : memref<2x128xf32, #tpu.memory_space<vmem>>, vector<2x128xf32>,
      %45 = arith.index_cast %8 : i32 to index
      %c0_22 = arith.constant 0 : index
      %c0_23 = arith.constant 0 : index
      %46 = vector.load %arg3[%45, %c0_22, %c0_23] : memref<8x2x128xf32, #tpu.memory_space<vmem>>, vector<1x2x128xf32>
      %47 = vector.shape_cast %46 : vector<1x2x128xf32> to vector<2x128xf32>
      %48 = vector.shape_cast %42 : vector<2x128xf32> to vector<1x2x128xf32>
      tpu.vector_store %arg3[%45, %c0_22, %c0_23], %48 {strides = array<i32>} : memref<8x2x128xf32, #tpu.memory_space<vmem>>, vector<1x2x128xf32>,
    }
    %c8_i32_4 = arith.constant 8 : i32
    return
  }
  func.func @transform_0(%arg0: i32) -> (i32, i32, i32) {
    %c0_i32 = arith.constant 0 : i32
    %c0_i32_0 = arith.constant 0 : i32
    %c0_i32_1 = arith.constant 0 : i32
    return %c0_i32, %c0_i32_0, %arg0 : i32, i32, i32
  }
  func.func @transform_1(%arg0: i32) -> (i32, i32, i32) {
    %c0_i32 = arith.constant 0 : i32
    %c0_i32_0 = arith.constant 0 : i32
    %c0_i32_1 = arith.constant 0 : i32
    return %arg0, %c0_i32, %c0_i32_0 : i32, i32, i32
  }
  func.func @transform_2(%arg0: i32) -> (i32, i32, i32) {
    %c0_i32 = arith.constant 0 : i32
    %c0_i32_0 = arith.constant 0 : i32
    %c0_i32_1 = arith.constant 0 : i32
    return %c0_i32, %c0_i32_0, %arg0 : i32, i32, i32
  }
}

module attributes {stable_mosaic.version = 11 : i64} {
  func.func @_linear_kernel(%arg0: i32, %arg1: i32, %arg2: memref<16x256xf32, #tpu.memory_space<vmem>>, %arg3: memref<256x512xf32, #tpu.memory_space<vmem>>, %arg4: memref<1x512xf32, #tpu.memory_space<vmem>>, %arg5: memref<16x512xf32, #tpu.memory_space<vmem>>) attributes {dimension_semantics = [#tpu.dimension_semantics<parallel>, #tpu.dimension_semantics<parallel>], iteration_bounds = array<i64: 1, 2>, scalar_prefetch = 0 : i64, scratch_operands = 0 : i64, tpu.core_type = #tpu.core_type<tc>, window_params = [{transform_indices = @transform_0, window_bounds = array<i64: 16, 256>}, {transform_indices = @transform_1, window_bounds = array<i64: 256, 512>}, {transform_indices = @transform_2, window_bounds = array<i64: 1, 512>}, {transform_indices = @transform_3, window_bounds = array<i64: 16, 512>}]} {
    %c0 = arith.constant 0 : index
    %c0_0 = arith.constant 0 : index
    %0 = vector.load %arg2[%c0, %c0_0] : memref<16x256xf32, #tpu.memory_space<vmem>>, vector<16x256xf32>
    %c0_1 = arith.constant 0 : index
    %c0_2 = arith.constant 0 : index
    %1 = vector.load %arg3[%c0_1, %c0_2] : memref<256x512xf32, #tpu.memory_space<vmem>>, vector<256x512xf32>
    %cst = arith.constant dense<0.000000e+00> : vector<16x512xf32>
    %2 = tpu.matmul %0, %1, %cst {dimension_numbers = #tpu.dot_dimension_numbers<[1], [0], [0], [1], [0, 0, 1, 1], [], []>} : vector<16x256xf32>, vector<256x512xf32>, vector<16x512xf32> -> vector<16x512xf32>
    %c0_3 = arith.constant 0 : index
    %c0_4 = arith.constant 0 : index
    %3 = vector.load %arg4[%c0_3, %c0_4] : memref<1x512xf32, #tpu.memory_space<vmem>>, vector<1x512xf32>
    %4 = vector.broadcast %3 : vector<1x512xf32> to vector<16x512xf32>
    %5 = arith.addf %2, %4 : vector<16x512xf32>
    %c0_5 = arith.constant 0 : index
    %c0_6 = arith.constant 0 : index
    %6 = vector.load %arg5[%c0_5, %c0_6] : memref<16x512xf32, #tpu.memory_space<vmem>>, vector<16x512xf32>
    tpu.vector_store %arg5[%c0_5, %c0_6], %5 {strides = array<i32>} : memref<16x512xf32, #tpu.memory_space<vmem>>, vector<16x512xf32>,
    return
  }
  func.func @transform_0(%arg0: i32, %arg1: i32) -> (i32, i32) {
    %c0_i32 = arith.constant 0 : i32
    %c0_i32_0 = arith.constant 0 : i32
    return %arg0, %c0_i32 : i32, i32
  }
  func.func @transform_1(%arg0: i32, %arg1: i32) -> (i32, i32) {
    %c0_i32 = arith.constant 0 : i32
    %c0_i32_0 = arith.constant 0 : i32
    return %c0_i32, %arg1 : i32, i32
  }
  func.func @transform_2(%arg0: i32, %arg1: i32) -> (i32, i32) {
    %c0_i32 = arith.constant 0 : i32
    %c0_i32_0 = arith.constant 0 : i32
    return %c0_i32, %arg1 : i32, i32
  }
  func.func @transform_3(%arg0: i32, %arg1: i32) -> (i32, i32) {
    %c0_i32 = arith.constant 0 : i32
    return %arg0, %arg1 : i32, i32
  }
}

module attributes {stable_mosaic.version = 11 : i64} {
  func.func @_mean_fc_kernel(%arg0: i32, %arg1: memref<8x2x256xf32, #tpu.memory_space<vmem>>, %arg2: memref<256x128xf32, #tpu.memory_space<vmem>>, %arg3: memref<1x128xf32, #tpu.memory_space<vmem>>, %arg4: memref<2x128xf32, #tpu.memory_space<vmem>>) attributes {dimension_semantics = [#tpu.dimension_semantics<arbitrary>], iteration_bounds = array<i64: 1>, scalar_prefetch = 0 : i64, scratch_operands = 0 : i64, tpu.core_type = #tpu.core_type<tc>, window_params = [{pipeline_mode = #tpu.pipeline_mode<synchronous>, transform_indices = @transform_0, window_bounds = array<i64: 8, 2, 256>}, {pipeline_mode = #tpu.pipeline_mode<synchronous>, transform_indices = @transform_1, window_bounds = array<i64: 256, 128>}, {pipeline_mode = #tpu.pipeline_mode<synchronous>, transform_indices = @transform_2, window_bounds = array<i64: 1, 128>}, {pipeline_mode = #tpu.pipeline_mode<synchronous>, transform_indices = @transform_3, window_bounds = array<i64: 2, 128>}]} {
    %c0 = arith.constant 0 : index
    %c0_0 = arith.constant 0 : index
    %c0_1 = arith.constant 0 : index
    %0 = vector.load %arg1[%c0, %c0_0, %c0_1] : memref<8x2x256xf32, #tpu.memory_space<vmem>>, vector<8x2x256xf32>
    %cst = arith.constant dense<0.000000e+00> : vector<2x256xf32>
    %1 = vector.multi_reduction <add>, %0, %cst [0] : vector<8x2x256xf32> to vector<2x256xf32>
    %cst_2 = arith.constant 8.000000e+00 : f32
    %2 = vector.broadcast %cst_2 : f32 to vector<2x256xf32>
    %3 = arith.divf %1, %2 : vector<2x256xf32>
    %c0_3 = arith.constant 0 : index
    %c0_4 = arith.constant 0 : index
    %4 = vector.load %arg2[%c0_3, %c0_4] : memref<256x128xf32, #tpu.memory_space<vmem>>, vector<256x128xf32>
    %cst_5 = arith.constant dense<0.000000e+00> : vector<2x128xf32>
    %5 = tpu.matmul %3, %4, %cst_5 {dimension_numbers = #tpu.dot_dimension_numbers<[1], [0], [0], [1], [0, 0, 1, 1], [], []>} : vector<2x256xf32>, vector<256x128xf32>, vector<2x128xf32> -> vector<2x128xf32>
    %c0_6 = arith.constant 0 : index
    %c0_7 = arith.constant 0 : index
    %6 = vector.load %arg3[%c0_6, %c0_7] : memref<1x128xf32, #tpu.memory_space<vmem>>, vector<1x128xf32>
    %7 = vector.broadcast %6 : vector<1x128xf32> to vector<2x128xf32>
    %8 = arith.addf %5, %7 : vector<2x128xf32>
    %c0_8 = arith.constant 0 : index
    %c0_9 = arith.constant 0 : index
    %9 = vector.load %arg4[%c0_8, %c0_9] : memref<2x128xf32, #tpu.memory_space<vmem>>, vector<2x128xf32>
    tpu.vector_store %arg4[%c0_8, %c0_9], %8 {strides = array<i32>} : memref<2x128xf32, #tpu.memory_space<vmem>>, vector<2x128xf32>,
    return
  }
  func.func @transform_0(%arg0: i32) -> (i32, i32, i32) {
    %c0_i32 = arith.constant 0 : i32
    %c0_i32_0 = arith.constant 0 : i32
    %c0_i32_1 = arith.constant 0 : i32
    %c0_i32_2 = arith.constant 0 : i32
    return %c0_i32, %c0_i32_0, %c0_i32_1 : i32, i32, i32
  }
  func.func @transform_1(%arg0: i32) -> (i32, i32) {
    %c0_i32 = arith.constant 0 : i32
    %c0_i32_0 = arith.constant 0 : i32
    %c0_i32_1 = arith.constant 0 : i32
    return %c0_i32, %c0_i32_0 : i32, i32
  }
  func.func @transform_2(%arg0: i32) -> (i32, i32) {
    %c0_i32 = arith.constant 0 : i32
    %c0_i32_0 = arith.constant 0 : i32
    %c0_i32_1 = arith.constant 0 : i32
    return %c0_i32, %c0_i32_0 : i32, i32
  }
  func.func @transform_3(%arg0: i32) -> (i32, i32) {
    %c0_i32 = arith.constant 0 : i32
    %c0_i32_0 = arith.constant 0 : i32
    %c0_i32_1 = arith.constant 0 : i32
    return %c0_i32, %c0_i32_0 : i32, i32
  }
}

</mosaic_0001>

<llo_original>
// kernel: resnet_lstm_forward.6
$region0: #{resnet_lstm_forward.6}
  #allocation0 [shape = 'u32[]', space=smem, size = 0x4, offset = 0x4, fixed_abs, tag = 'smem constant byte address 0x4 - core index']
  #allocation1 [shape = 'u32[144,128]{1,0:T(1,128)}', space=vmem, size = 0x12000, scoped, tag = 'internal scratch']
  %s0 = inlined_call_operand.vmem [shape: f32[16,768], index: 0, kind: input, shape index: {}]
  %s1 = inlined_call_operand.hbm [shape: f32[768,128], index: 1, kind: input, shape index: {}]
  %s2 = inlined_call_operand.vmem [shape: f32[1,128], index: 2, kind: input, shape index: {}]
  %s3 = inlined_call_operand.vmem [shape: f32[16,128], index: 3, kind: output, shape index: {}]
  %s4 = sld [smem:[#allocation0]]
  $region26: #{resnet_lstm_forward.6} parent=0
    _
  %s6 = ssub.s32 1, %s4
  %s7 = scalar_select 0, %s6, %s4
  $region1: #{resnet_lstm_forward.6} parent=0
    #allocation2 [shape = 'u8[393216]{0}', space=vmem, size = 0x60000, scoped, tag = 'input window, operand 1, single buffered']
    #allocation3 [shape = 's32[1]{0}', space=sflag, size = 0x4, scoped, tag = 'scoped memory for resnet_lstm_forward.6']
    %8 = vsyncpa [#allocation3], 0
    // Predicated region
    $region2: #{resnet_lstm_forward.6} parent=1 // pred_check
      _
    $region3: #{resnet_lstm_forward.6} parent=1 // pred_check_branch
      %10 = sbr.rel (0) target = $region5
    $region4: #{resnet_lstm_forward.6} parent=1 // pred_region
      _
    $region5: #{resnet_lstm_forward.6} parent=1 // pred_fallthru
      _
    // Predicated region
    $region6: #{resnet_lstm_forward.6} parent=1 // pred_check
      _
    $region7: #{resnet_lstm_forward.6} parent=1 // pred_check_branch
      %12 = sbr.rel (0) target = $region9
    $region8: #{resnet_lstm_forward.6} parent=1 // pred_region
      %s14 = ssub.s32 12288, 12288
      %15 = vsyncadd [#allocation3], %s14
      %s16 = sshll.u32 [#allocation2], 4
      %s17 = int_to_ptr.vmem [resolvable:$true] %s16
      %22 = dma.hbm_to_vmem [thread:$0]  %s1, 12288, %s17, [#allocation3], 128, 128, 8
    $region9: #{resnet_lstm_forward.6} parent=1 // pred_fallthru
      _
    // Predicated region
    $region10: #{resnet_lstm_forward.6} parent=1 // pred_check
      _
    $region11: #{resnet_lstm_forward.6} parent=1 // pred_check_branch
      %24 = sbr.rel (0) target = $region13
    $region12: #{resnet_lstm_forward.6} parent=1 // pred_region
      _
    $region13: #{resnet_lstm_forward.6} parent=1 // pred_fallthru
      _
    // Predicated region
    $region14: #{resnet_lstm_forward.6} parent=1 // pred_check
      _
    $region15: #{resnet_lstm_forward.6} parent=1 // pred_check_branch
      %26 = sbr.rel (0) target = $region17
    $region16: #{resnet_lstm_forward.6} parent=1 // pred_region
      %27 = dma.done [#allocation3], 12288
    $region17: #{resnet_lstm_forward.6} parent=1 // pred_fallthru
      _
    %v28 = vld [vmem:[%s0] sm:$0xff]
    %v29 = vld [vmem:[%s0 + $0x8] sm:$0xff]
    %v30 = vld [vmem:[%s0 + $0x10] sm:$0xff]
    %v31 = vld [vmem:[%s0 + $0x18] sm:$0xff]
    %v32 = vld [vmem:[%s0 + $0x20] sm:$0xff]
    %v33 = vld [vmem:[%s0 + $0x28] sm:$0xff]
    %v34 = vld [vmem:[%s0 + $0x30] sm:$0xff]
    %v35 = vld [vmem:[%s0 + $0x38] sm:$0xff]
    %v36 = vld [vmem:[%s0 + $0x40] sm:$0xff]
    %v37 = vld [vmem:[%s0 + $0x48] sm:$0xff]
    %v38 = vld [vmem:[%s0 + $0x50] sm:$0xff]
    %v39 = vld [vmem:[%s0 + $0x58] sm:$0xff]
    %v40 = vld [vmem:[#allocation2] sm:$0xff]
    %v41 = vld [vmem:[#allocation2 + $0x8] sm:$0xff]
    %v42 = vld [vmem:[#allocation2 + $0x10] sm:$0xff]
    %v43 = vld [vmem:[#allocation2 + $0x18] sm:$0xff]
    %v44 = vld [vmem:[#allocation2 + $0x20] sm:$0xff]
    %v45 = vld [vmem:[#allocation2 + $0x28] sm:$0xff]
    %v46 = vld [vmem:[#allocation2 + $0x30] sm:$0xff]
    %v47 = vld [vmem:[#allocation2 + $0x38] sm:$0xff]
    %v48 = vld [vmem:[#allocation2 + $0x40] sm:$0xff]
    %v49 = vld [vmem:[#allocation2 + $0x48] sm:$0xff]
    %v50 = vld [vmem:[#allocation2 + $0x50] sm:$0xff]
    %v51 = vld [vmem:[#allocation2 + $0x58] sm:$0xff]
    %v52 = vld [vmem:[#allocation2 + $0x60] sm:$0xff]
    %v53 = vld [vmem:[#allocation2 + $0x68] sm:$0xff]
    %v54 = vld [vmem:[#allocation2 + $0x70] sm:$0xff]
    %v55 = vld [vmem:[#allocation2 + $0x78] sm:$0xff]
    %v56 = vld [vmem:[#allocation2 + $0x80] sm:$0xff]
    %v57 = vld [vmem:[#allocation2 + $0x88] sm:$0xff]
    %v58 = vld [vmem:[#allocation2 + $0x90] sm:$0xff]
    %v59 = vld [vmem:[#allocation2 + $0x98] sm:$0xff]
    %v60 = vld [vmem:[#allocation2 + $0xa0] sm:$0xff]
    %v61 = vld [vmem:[#allocation2 + $0xa8] sm:$0xff]
    %v62 = vld [vmem:[#allocation2 + $0xb0] sm:$0xff]
    %v63 = vld [vmem:[#allocation2 + $0xb8] sm:$0xff]
    %v64 = vld [vmem:[#allocation2 + $0xc0] sm:$0xff]
    %v65 = vld [vmem:[#allocation2 + $0xc8] sm:$0xff]
    %v66 = vld [vmem:[#allocation2 + $0xd0] sm:$0xff]
    %v67 = vld [vmem:[#allocation2 + $0xd8] sm:$0xff]
    %v68 = vld [vmem:[#allocation2 + $0xe0] sm:$0xff]
    %v69 = vld [vmem:[#allocation2 + $0xe8] sm:$0xff]
    %v70 = vld [vmem:[#allocation2 + $0xf0] sm:$0xff]
    %v71 = vld [vmem:[#allocation2 + $0xf8] sm:$0xff]
    %v72 = vld [vmem:[#allocation2 + $0x100] sm:$0xff]
    %v73 = vld [vmem:[#allocation2 + $0x108] sm:$0xff]
    %v74 = vld [vmem:[#allocation2 + $0x110] sm:$0xff]
    %v75 = vld [vmem:[#allocation2 + $0x118] sm:$0xff]
    %v76 = vld [vmem:[#allocation2 + $0x120] sm:$0xff]
    %v77 = vld [vmem:[#allocation2 + $0x128] sm:$0xff]
    %v78 = vld [vmem:[#allocation2 + $0x130] sm:$0xff]
    %v79 = vld [vmem:[#allocation2 + $0x138] sm:$0xff]
    %v80 = vld [vmem:[#allocation2 + $0x140] sm:$0xff]
    %v81 = vld [vmem:[#allocation2 + $0x148] sm:$0xff]
    %v82 = vld [vmem:[#allocation2 + $0x150] sm:$0xff]
    %v83 = vld [vmem:[#allocation2 + $0x158] sm:$0xff]
    %v84 = vld [vmem:[#allocation2 + $0x160] sm:$0xff]
    %v85 = vld [vmem:[#allocation2 + $0x168] sm:$0xff]
    %v86 = vld [vmem:[#allocation2 + $0x170] sm:$0xff]
    %v87 = vld [vmem:[#allocation2 + $0x178] sm:$0xff]
    %v88 = vld [vmem:[#allocation2 + $0x180] sm:$0xff]
    %v89 = vld [vmem:[#allocation2 + $0x188] sm:$0xff]
    %v90 = vld [vmem:[#allocation2 + $0x190] sm:$0xff]
    %v91 = vld [vmem:[#allocation2 + $0x198] sm:$0xff]
    %v92 = vld [vmem:[#allocation2 + $0x1a0] sm:$0xff]
    %v93 = vld [vmem:[#allocation2 + $0x1a8] sm:$0xff]
    %v94 = vld [vmem:[#allocation2 + $0x1b0] sm:$0xff]
    %v95 = vld [vmem:[#allocation2 + $0x1b8] sm:$0xff]
    %v96 = vld [vmem:[#allocation2 + $0x1c0] sm:$0xff]
    %v97 = vld [vmem:[#allocation2 + $0x1c8] sm:$0xff]
    %v98 = vld [vmem:[#allocation2 + $0x1d0] sm:$0xff]
    %v99 = vld [vmem:[#allocation2 + $0x1d8] sm:$0xff]
    %v100 = vld [vmem:[#allocation2 + $0x1e0] sm:$0xff]
    %v101 = vld [vmem:[#allocation2 + $0x1e8] sm:$0xff]
    %v102 = vld [vmem:[#allocation2 + $0x1f0] sm:$0xff]
    %v103 = vld [vmem:[#allocation2 + $0x1f8] sm:$0xff]
    %v104 = vld [vmem:[#allocation2 + $0x200] sm:$0xff]
    %v105 = vld [vmem:[#allocation2 + $0x208] sm:$0xff]
    %v106 = vld [vmem:[#allocation2 + $0x210] sm:$0xff]
    %v107 = vld [vmem:[#allocation2 + $0x218] sm:$0xff]
    %v108 = vld [vmem:[#allocation2 + $0x220] sm:$0xff]
    %v109 = vld [vmem:[#allocation2 + $0x228] sm:$0xff]
    %v110 = vld [vmem:[#allocation2 + $0x230] sm:$0xff]
    %v111 = vld [vmem:[#allocation2 + $0x238] sm:$0xff]
    %v112 = vld [vmem:[#allocation2 + $0x240] sm:$0xff]
    %v113 = vld [vmem:[#allocation2 + $0x248] sm:$0xff]
    %v114 = vld [vmem:[#allocation2 + $0x250] sm:$0xff]
    %v115 = vld [vmem:[#allocation2 + $0x258] sm:$0xff]
    %v116 = vld [vmem:[#allocation2 + $0x260] sm:$0xff]
    %v117 = vld [vmem:[#allocation2 + $0x268] sm:$0xff]
    %v118 = vld [vmem:[#allocation2 + $0x270] sm:$0xff]
    %v119 = vld [vmem:[#allocation2 + $0x278] sm:$0xff]
    %v120 = vld [vmem:[#allocation2 + $0x280] sm:$0xff]
    %v121 = vld [vmem:[#allocation2 + $0x288] sm:$0xff]
    %v122 = vld [vmem:[#allocation2 + $0x290] sm:$0xff]
    %v123 = vld [vmem:[#allocation2 + $0x298] sm:$0xff]
    %v124 = vld [vmem:[#allocation2 + $0x2a0] sm:$0xff]
    %v125 = vld [vmem:[#allocation2 + $0x2a8] sm:$0xff]
    %v126 = vld [vmem:[#allocation2 + $0x2b0] sm:$0xff]
    %v127 = vld [vmem:[#allocation2 + $0x2b8] sm:$0xff]
    %v128 = vld [vmem:[#allocation2 + $0x2c0] sm:$0xff]
    %v129 = vld [vmem:[#allocation2 + $0x2c8] sm:$0xff]
    %v130 = vld [vmem:[#allocation2 + $0x2d0] sm:$0xff]
    %v131 = vld [vmem:[#allocation2 + $0x2d8] sm:$0xff]
    %v132 = vld [vmem:[#allocation2 + $0x2e0] sm:$0xff]
    %v133 = vld [vmem:[#allocation2 + $0x2e8] sm:$0xff]
    %v134 = vld [vmem:[#allocation2 + $0x2f0] sm:$0xff]
    %v135 = vld [vmem:[#allocation2 + $0x2f8] sm:$0xff]
    %v136 = vld [vmem:[%s2] sm:$0x1]
    %v138 = vlaneseq
    %v139 = vshrl.u32 %v138, 7
    %v140 = vsub.s32 0, %v139
    %v141 = vrot.slane %v136, %v140
    %143 = vmatprep.subr.mxu0 0.0
    %144 = vmatpush1.msra.mxu0 %v40
    %145 = vmatprep.subr.mxu0 0.0
    %146 = vmatpush1.msra.mxu0 %v41
    %147 = vmatprep.subr.mxu0 0.0
    %148 = vmatpush1.msra.mxu0 %v42
    %149 = vmatprep.subr.mxu0 0.0
    %150 = vmatpush1.msra.mxu0 %v43
    %151 = vmatprep.subr.mxu0 0.0
    %152 = vmatpush1.msra.mxu0 %v44
    %153 = vmatprep.subr.mxu0 0.0
    %154 = vmatpush1.msra.mxu0 %v45
    %155 = vmatprep.subr.mxu0 0.0
    %156 = vmatpush1.msra.mxu0 %v46
    %157 = vmatprep.subr.mxu0 0.0
    %158 = vmatpush1.msra.mxu0 %v47
    %159 = vmatprep.subr.mxu0 0.0
    %160 = vmatpush1.msra.mxu0 %v48
    %161 = vmatprep.subr.mxu0 0.0
    %162 = vmatpush1.msra.mxu0 %v49
    %163 = vmatprep.subr.mxu0 0.0
    %164 = vmatpush1.msra.mxu0 %v50
    %165 = vmatprep.subr.mxu0 0.0
    %166 = vmatpush1.msra.mxu0 %v51
    %167 = vmatprep.subr.mxu0 0.0
    %168 = vmatpush1.msra.mxu0 %v52
    %169 = vmatprep.subr.mxu0 0.0
    %170 = vmatpush1.msra.mxu0 %v53
    %171 = vmatprep.subr.mxu0 0.0
    %172 = vmatpush1.msra.mxu0 %v54
    %173 = vmatprep.subr.mxu0 0.0
    %174 = vmatpush1.msra.mxu0 %v55
    %175 = vmatprep.subr.mxu0 0.0
    %176 = vmatpush1.msra.mxu0 %v56
    %177 = vmatprep.subr.mxu0 0.0
    %178 = vmatpush1.msra.mxu0 %v57
    %179 = vmatprep.subr.mxu0 0.0
    %180 = vmatpush1.msra.mxu0 %v58
    %181 = vmatprep.subr.mxu0 0.0
    %182 = vmatpush1.msra.mxu0 %v59
    %183 = vmatprep.subr.mxu0 0.0
    %184 = vmatpush1.msra.mxu0 %v60
    %185 = vmatprep.subr.mxu0 0.0
    %186 = vmatpush1.msra.mxu0 %v61
    %187 = vmatprep.subr.mxu0 0.0
    %188 = vmatpush1.msra.mxu0 %v62
    %189 = vmatprep.subr.mxu0 0.0
    %190 = vmatpush1.msra.mxu0 %v63
    %191 = vmatprep.subr.mxu0 0.0
    %192 = vmatpush1.msra.mxu0 %v64
    %193 = vmatprep.subr.mxu0 0.0
    %194 = vmatpush1.msra.mxu0 %v65
    %195 = vmatprep.subr.mxu0 0.0
    %196 = vmatpush1.msra.mxu0 %v66
    %197 = vmatprep.subr.mxu0 0.0
    %198 = vmatpush1.msra.mxu0 %v67
    %199 = vmatprep.subr.mxu0 0.0
    %200 = vmatpush1.msra.mxu0 %v68
    %201 = vmatprep.subr.mxu0 0.0
    %202 = vmatpush1.msra.mxu0 %v69
    %203 = vmatprep.subr.mxu0 0.0
    %204 = vmatpush1.msra.mxu0 %v70
    %205 = vmatprep.subr.mxu0 0.0
    %206 = vmatpush1.msra.mxu0 %v71
    %207 = vmatprep.mubr.f32.mxu0 %v29
    %208 = vmatmul.mubr.f32.gmra.mrb[0].mxu0 %v28
    %v209 = vpop.f32.mrb[0].mxu0
    %v210 = vadd.f32 %v141, %v209
    %v211 = vpop.f32.mrb[0].mxu0
    %212 = vmatprep.mubr.f32.mxu0 %v35
    %213 = vmatmul.mubr.f32.gmra.mrb[0].mxu0 %v34
    %v214 = vpop.f32.mrb[0].mxu0
    %v215 = vadd.f32 %v141, %v214
    %v216 = vpop.f32.mrb[0].mxu0
    %217 = vdwg.mxu0
    %218 = vmatprep.subr.mxu0 0.0
    %219 = vmatpush1.msra.mxu0 %v72
    %220 = vmatprep.subr.mxu0 0.0
    %221 = vmatpush1.msra.mxu0 %v73
    %222 = vmatprep.subr.mxu0 0.0
    %223 = vmatpush1.msra.mxu0 %v74
    %224 = vmatprep.subr.mxu0 0.0
    %225 = vmatpush1.msra.mxu0 %v75
    %226 = vmatprep.subr.mxu0 0.0
    %227 = vmatpush1.msra.mxu0 %v76
    %228 = vmatprep.subr.mxu0 0.0
    %229 = vmatpush1.msra.mxu0 %v77
    %230 = vmatprep.subr.mxu0 0.0
    %231 = vmatpush1.msra.mxu0 %v78
    %232 = vmatprep.subr.mxu0 0.0
    %233 = vmatpush1.msra.mxu0 %v79
    %234 = vmatprep.subr.mxu0 0.0
    %235 = vmatpush1.msra.mxu0 %v80
    %236 = vmatprep.subr.mxu0 0.0
    %237 = vmatpush1.msra.mxu0 %v81
    %238 = vmatprep.subr.mxu0 0.0
    %239 = vmatpush1.msra.mxu0 %v82
    %240 = vmatprep.subr.mxu0 0.0
    %241 = vmatpush1.msra.mxu0 %v83
    %242 = vmatprep.subr.mxu0 0.0
    %243 = vmatpush1.msra.mxu0 %v84
    %244 = vmatprep.subr.mxu0 0.0
    %245 = vmatpush1.msra.mxu0 %v85
    %246 = vmatprep.subr.mxu0 0.0
    %247 = vmatpush1.msra.mxu0 %v86
    %248 = vmatprep.subr.mxu0 0.0
    %249 = vmatpush1.msra.mxu0 %v87
    %250 = vmatprep.subr.mxu0 0.0
    %251 = vmatpush1.msra.mxu0 %v88
    %252 = vmatprep.subr.mxu0 0.0
    %253 = vmatpush1.msra.mxu0 %v89
    %254 = vmatprep.subr.mxu0 0.0
    %255 = vmatpush1.msra.mxu0 %v90
    %256 = vmatprep.subr.mxu0 0.0
    %257 = vmatpush1.msra.mxu0 %v91
    %258 = vmatprep.subr.mxu0 0.0
    %259 = vmatpush1.msra.mxu0 %v92
    %260 = vmatprep.subr.mxu0 0.0
    %261 = vmatpush1.msra.mxu0 %v93
    %262 = vmatprep.subr.mxu0 0.0
    %263 = vmatpush1.msra.mxu0 %v94
    %264 = vmatprep.subr.mxu0 0.0
    %265 = vmatpush1.msra.mxu0 %v95
    %266 = vmatprep.subr.mxu0 0.0
    %267 = vmatpush1.msra.mxu0 %v96
    %268 = vmatprep.subr.mxu0 0.0
    %269 = vmatpush1.msra.mxu0 %v97
    %270 = vmatprep.subr.mxu0 0.0
    %271 = vmatpush1.msra.mxu0 %v98
    %272 = vmatprep.subr.mxu0 0.0
    %273 = vmatpush1.msra.mxu0 %v99
    %274 = vmatprep.subr.mxu0 0.0
    %275 = vmatpush1.msra.mxu0 %v100
    %276 = vmatprep.subr.mxu0 0.0
    %277 = vmatpush1.msra.mxu0 %v101
    %278 = vmatprep.subr.mxu0 0.0
    %279 = vmatpush1.msra.mxu0 %v102
    %280 = vmatprep.subr.mxu0 0.0
    %281 = vmatpush1.msra.mxu0 %v103
    %282 = vmatprep.mubr.f32.mxu0 %v31
    %283 = vmatmul.mubr.f32.gmra.mrb[0].mxu0 %v30
    %v284 = vpop.f32.mrb[0].mxu0
    %v285 = vadd.f32 %v210, %v284
    %v286 = vpop.f32.mrb[0].mxu0
    %287 = vmatprep.mubr.f32.mxu0 %v37
    %288 = vmatmul.mubr.f32.gmra.mrb[0].mxu0 %v36
    %v289 = vpop.f32.mrb[0].mxu0
    %v290 = vadd.f32 %v215, %v289
    %v291 = vpop.f32.mrb[0].mxu0
    %292 = vdwg.mxu0
    %293 = vmatprep.subr.mxu0 0.0
    %294 = vmatpush1.msra.mxu0 %v104
    %295 = vmatprep.subr.mxu0 0.0
    %296 = vmatpush1.msra.mxu0 %v105
    %297 = vmatprep.subr.mxu0 0.0
    %298 = vmatpush1.msra.mxu0 %v106
    %299 = vmatprep.subr.mxu0 0.0
    %300 = vmatpush1.msra.mxu0 %v107
    %301 = vmatprep.subr.mxu0 0.0
    %302 = vmatpush1.msra.mxu0 %v108
    %303 = vmatprep.subr.mxu0 0.0
    %304 = vmatpush1.msra.mxu0 %v109
    %305 = vmatprep.subr.mxu0 0.0
    %306 = vmatpush1.msra.mxu0 %v110
    %307 = vmatprep.subr.mxu0 0.0
    %308 = vmatpush1.msra.mxu0 %v111
    %309 = vmatprep.subr.mxu0 0.0
    %310 = vmatpush1.msra.mxu0 %v112
    %311 = vmatprep.subr.mxu0 0.0
    %312 = vmatpush1.msra.mxu0 %v113
    %313 = vmatprep.subr.mxu0 0.0
    %314 = vmatpush1.msra.mxu0 %v114
    %315 = vmatprep.subr.mxu0 0.0
    %316 = vmatpush1.msra.mxu0 %v115
    %317 = vmatprep.subr.mxu0 0.0
    %318 = vmatpush1.msra.mxu0 %v116
    %319 = vmatprep.subr.mxu0 0.0
    %320 = vmatpush1.msra.mxu0 %v117
    %321 = vmatprep.subr.mxu0 0.0
    %322 = vmatpush1.msra.mxu0 %v118
    %323 = vmatprep.subr.mxu0 0.0
    %324 = vmatpush1.msra.mxu0 %v119
    %325 = vmatprep.subr.mxu0 0.0
    %326 = vmatpush1.msra.mxu0 %v120
    %327 = vmatprep.subr.mxu0 0.0
    %328 = vmatpush1.msra.mxu0 %v121
    %329 = vmatprep.subr.mxu0 0.0
    %330 = vmatpush1.msra.mxu0 %v122
    %331 = vmatprep.subr.mxu0 0.0
    %332 = vmatpush1.msra.mxu0 %v123
    %333 = vmatprep.subr.mxu0 0.0
    %334 = vmatpush1.msra.mxu0 %v124
    %335 = vmatprep.subr.mxu0 0.0
    %336 = vmatpush1.msra.mxu0 %v125
    %337 = vmatprep.subr.mxu0 0.0
    %338 = vmatpush1.msra.mxu0 %v126
    %339 = vmatprep.subr.mxu0 0.0
    %340 = vmatpush1.msra.mxu0 %v127
    %341 = vmatprep.subr.mxu0 0.0
    %342 = vmatpush1.msra.mxu0 %v128
    %343 = vmatprep.subr.mxu0 0.0
    %344 = vmatpush1.msra.mxu0 %v129
    %345 = vmatprep.subr.mxu0 0.0
    %346 = vmatpush1.msra.mxu0 %v130
    %347 = vmatprep.subr.mxu0 0.0
    %348 = vmatpush1.msra.mxu0 %v131
    %349 = vmatprep.subr.mxu0 0.0
    %350 = vmatpush1.msra.mxu0 %v132
    %351 = vmatprep.subr.mxu0 0.0
    %352 = vmatpush1.msra.mxu0 %v133
    %353 = vmatprep.subr.mxu0 0.0
    %354 = vmatpush1.msra.mxu0 %v134
    %355 = vmatprep.subr.mxu0 0.0
    %356 = vmatpush1.msra.mxu0 %v135
    %357 = vmatprep.mubr.f32.mxu0 %v33
    %358 = vmatmul.mubr.f32.gmra.mrb[0].mxu0 %v32
    %v359 = vpop.f32.mrb[0].mxu0
    %v360 = vadd.f32 %v285, %v359
    %v361 = vpop.f32.mrb[0].mxu0
    %362 = vmatprep.mubr.f32.mxu0 %v39
    %363 = vmatmul.mubr.f32.gmra.mrb[0].mxu0 %v38
    %v364 = vpop.f32.mrb[0].mxu0
    %v365 = vadd.f32 %v290, %v364
    %v366 = vpop.f32.mrb[0].mxu0
    %367 = vdwg.mxu0
    %v368 = vmax.f32 %v360, 0.0
    %v369 = vmax.f32 %v365, 0.0
    %370 = vst [vmem:[%s3] sm:$0xff] %v368
    %371 = vst [vmem:[%s3 + $0x8] sm:$0xff] %v369
    // Predicated region
    $region18: #{resnet_lstm_forward.6} parent=1 // pred_check
      _
    $region19: #{resnet_lstm_forward.6} parent=1 // pred_check_branch
      %373 = sbr.rel (0) target = $region21
    $region20: #{resnet_lstm_forward.6} parent=1 // pred_region
      _
    $region21: #{resnet_lstm_forward.6} parent=1 // pred_fallthru
      _
    // Predicated region
    $region22: #{resnet_lstm_forward.6} parent=1 // pred_check
      _
    $region23: #{resnet_lstm_forward.6} parent=1 // pred_check_branch
      %375 = sbr.rel (0) target = $region25
    $region24: #{resnet_lstm_forward.6} parent=1 // pred_region
      _
    $region25: #{resnet_lstm_forward.6} parent=1 // pred_fallthru
      _
    %376 = vsyncpa [#allocation3], 1

// kernel: resnet_lstm_forward.7
$region0: #{resnet_lstm_forward.7}
  #allocation0 [shape = 'u32[]', space=smem, size = 0x4, offset = 0x4, fixed_abs, tag = 'smem constant byte address 0x4 - core index']
  #allocation1 [shape = 'u32[144,128]{1,0:T(1,128)}', space=vmem, size = 0x12000, scoped, tag = 'internal scratch']
  %s0 = inlined_call_operand.vmem [shape: f32[16,128], index: 0, kind: input, shape index: {}]
  %s1 = inlined_call_operand.vmem [shape: f32[128,1024], index: 1, kind: input, shape index: {}]
  %s2 = inlined_call_operand.vmem [shape: f32[1,1024], index: 2, kind: input, shape index: {}]
  %s3 = inlined_call_operand.vmem [shape: f32[16,1024], index: 3, kind: output, shape index: {}]
  %s4 = sld [smem:[#allocation0]]
  $region87: #{resnet_lstm_forward.7} parent=0
    _
  %s6 = ssub.s32 1, %s4
  %s7 = scalar_select 0, %s6, %s4
  $region1: #{resnet_lstm_forward.7} parent=0
    #allocation2 [shape = 'u8[524288]{0}', space=vmem, size = 0x80000, scoped, tag = 'input window, operand 1']
    #allocation3 [shape = 'u8[65536]{0}', space=vmem, size = 0x10000, scoped, tag = 'output window, operand 0']
    loop: start=0, step=1, limit=4
    $region2: #{resnet_lstm_forward.7} parent=1 // loop_pre_header
      _
    $region3: #{resnet_lstm_forward.7} parent=1 // loop_header
      %s9 = sphi 0, %s13
      %p10 = scmp.ge.s32.totalorder %s9, 4
      %s16 = sphi 0, %s28
      %s17 = sphi 0, %s24
      %s18 = sphi 0, %s16
      %s19 = sphi 0, %s17
      %s20 = sphi 0, %s18
      %s21 = sphi 0, %s19
      %s31 = sphi 0, %s33
      %s34 = sphi 0, %s31
      %s35 = sphi 0, %s34
      %s51 = sphi 0, %s35
      %s57 = sphi 0, %s59
      %s60 = sphi 0, %s57
      %s61 = sphi 0, %s60
      %s77 = sphi 0, %s61
      %s83 = sphi 0, %s85
      %s86 = sphi 0, %s83
      %s87 = sphi 0, %s86
      %s103 = sphi 0, %s87
      %s111 = sphi 0, %s113
      %s114 = sphi 0, %s111
      %s115 = sphi 0, %s114
      %s131 = sphi 0, %s115
    $region4: #{resnet_lstm_forward.7} parent=1 // loop_header_branch
      %12 = sbr.rel (%p10) target = $region8
    $region5: #{resnet_lstm_forward.7} parent=1 // loop_body
      %s14 = ssub.s32 %s9, 1
      %s15 = ssub.s32 %s9, 2
      %s22 = sadd.s32 1, %s17
      %p23 = scmp.ge.s32.totalorder %s22, 2
      %s24 = scalar_select %p23, 0, %s22
      %s25 = sadd.s32 1, %s16
      %s26 = scalar_select %p23, %s25, %s16
      %p27 = scmp.ge.s32.totalorder %s26, 1
      %s28 = scalar_select %p27, 0, %s26
      %s29 = ssub.s32 %s16, %s28
      %p30 = scmp.eq.s32.totalorder %s29, 0
      %s32 = sadd.s32 %s31, 1
      %s33 = scalar_select %p30, %s31, %s32
      %p36 = pneg %p30
      %p37 = scmp.eq.s32.totalorder %s9, 1
      %p38 = por %p36, %p37
      %p39 = scmp.ne.s32.totalorder %s31, %s34
      %p40 = scmp.eq.s32.totalorder %s9, 0
      %p41 = por %p39, %p40
      %p42 = scmp.ne.s32.totalorder %s31, %s34
      %p43 = scmp.eq.s32.totalorder %s14, 1
      %p44 = por %p42, %p43
      %p45 = scmp.ne.s32.totalorder %s34, %s35
      %p46 = scmp.eq.s32.totalorder %s14, 0
      %p47 = por %p45, %p46
      %p48 = scmp.ne.s32.totalorder %s34, %s35
      %p49 = scmp.eq.s32.totalorder %s15, 1
      %p50 = por %p48, %p49
      %p52 = scmp.ne.s32.totalorder %s35, %s51
      %p53 = scmp.eq.s32.totalorder %s15, 0
      %p54 = por %p52, %p53
      %s55 = ssub.s32 %s17, %s24
      %p56 = scmp.eq.s32.totalorder %s55, 0
      %s58 = sadd.s32 %s57, 1
      %s59 = scalar_select %p56, %s57, %s58
      %p62 = pneg %p56
      %p63 = scmp.eq.s32.totalorder %s9, 1
      %p64 = por %p62, %p63
      %p65 = scmp.ne.s32.totalorder %s57, %s60
      %p66 = scmp.eq.s32.totalorder %s9, 0
      %p67 = por %p65, %p66
      %p68 = scmp.ne.s32.totalorder %s57, %s60
      %p69 = scmp.eq.s32.totalorder %s14, 1
      %p70 = por %p68, %p69
      %p71 = scmp.ne.s32.totalorder %s60, %s61
      %p72 = scmp.eq.s32.totalorder %s14, 0
      %p73 = por %p71, %p72
      %p74 = scmp.ne.s32.totalorder %s60, %s61
      %p75 = scmp.eq.s32.totalorder %s15, 1
      %p76 = por %p74, %p75
      %p78 = scmp.ne.s32.totalorder %s61, %s77
      %p79 = scmp.eq.s32.totalorder %s15, 0
      %p80 = por %p78, %p79
      %s81 = ssub.s32 %s17, %s24
      %p82 = scmp.eq.s32.totalorder %s81, 0
      %s84 = sadd.s32 %s83, 1
      %s85 = scalar_select %p82, %s83, %s84
      %p88 = pneg %p82
      %p89 = scmp.eq.s32.totalorder %s9, 1
      %p90 = por %p88, %p89
      %p91 = scmp.ne.s32.totalorder %s83, %s86
      %p92 = scmp.eq.s32.totalorder %s9, 0
      %p93 = por %p91, %p92
      %p94 = scmp.ne.s32.totalorder %s83, %s86
      %p95 = scmp.eq.s32.totalorder %s14, 1
      %p96 = por %p94, %p95
      %p97 = scmp.ne.s32.totalorder %s86, %s87
      %p98 = scmp.eq.s32.totalorder %s14, 0
      %p99 = por %p97, %p98
      %p100 = scmp.ne.s32.totalorder %s86, %s87
      %p101 = scmp.eq.s32.totalorder %s15, 1
      %p102 = por %p100, %p101
      %p104 = scmp.ne.s32.totalorder %s87, %s103
      %p105 = scmp.eq.s32.totalorder %s15, 0
      %p106 = por %p104, %p105
      %s107 = ssub.s32 %s16, %s28
      %s108 = ssub.s32 %s17, %s24
      %s109 = sor.u32 %s107, %s108
      %p110 = scmp.eq.s32.totalorder %s109, 0
      %s112 = sadd.s32 %s111, 1
      %s113 = scalar_select %p110, %s111, %s112
      %p116 = pneg %p110
      %p117 = scmp.eq.s32.totalorder %s9, 1
      %p118 = por %p116, %p117
      %p119 = scmp.ne.s32.totalorder %s111, %s114
      %p120 = scmp.eq.s32.totalorder %s9, 0
      %p121 = por %p119, %p120
      %p122 = scmp.ne.s32.totalorder %s111, %s114
      %p123 = scmp.eq.s32.totalorder %s14, 1
      %p124 = por %p122, %p123
      %p125 = scmp.ne.s32.totalorder %s114, %s115
      %p126 = scmp.eq.s32.totalorder %s14, 0
      %p127 = por %p125, %p126
      %p128 = scmp.ne.s32.totalorder %s114, %s115
      %p129 = scmp.eq.s32.totalorder %s15, 1
      %p130 = por %p128, %p129
      %p132 = scmp.ne.s32.totalorder %s115, %s131
      %p133 = scmp.eq.s32.totalorder %s15, 0
      %p134 = por %p132, %p133
      %p135 = scmp.le.s32.totalorder 1, %s9
      %p136 = scmp.lt.s32.totalorder %s9, 3
      %p137 = pnand %p135, %p136
      %p138 = pneg %p137
      // Predicated region
      $region9: #{resnet_lstm_forward.7} parent=5 // pred_check
        _
      $region10: #{resnet_lstm_forward.7} parent=5 // pred_check_branch
        %140 = sbr.rel (%p137) target = $region12
      $region11: #{resnet_lstm_forward.7} parent=5 // pred_region
        %s141 = ssub.s32 %s9, 1
        // Predicated region
        $region13: #{resnet_lstm_forward.7} parent=11 // pred_check
          %p142 = pneg %p47
        $region14: #{resnet_lstm_forward.7} parent=11 // pred_check_branch
          %144 = sbr.rel (%p142) target = $region16
        $region15: #{resnet_lstm_forward.7} parent=11 // pred_region
          %s145 = smul.u32 2, %s18
          %p146 = scmp.lt.s32.totalorder %s145, 1
          %s147 = scalar_select %p146, %s145, 1
          %s148 = smul.addr %s147, 8
          %s149 = scalar_lea.vmem %s0, %s148
          %s150 = smul.u32 2, %s18
        $region16: #{resnet_lstm_forward.7} parent=11 // pred_fallthru
          _
      $region12: #{resnet_lstm_forward.7} parent=5 // pred_fallthru
        _
      %p151 = scmp.lt.s32.totalorder %s9, 2
      // Predicated region
      $region17: #{resnet_lstm_forward.7} parent=5 // pred_check
        %p152 = pneg %p151
      $region18: #{resnet_lstm_forward.7} parent=5 // pred_check_branch
        %154 = sbr.rel (%p152) target = $region20
      $region19: #{resnet_lstm_forward.7} parent=5 // pred_region
        // Predicated region
        $region21: #{resnet_lstm_forward.7} parent=19 // pred_check
          %p155 = pneg %p67
        $region22: #{resnet_lstm_forward.7} parent=19 // pred_check_branch
          %157 = sbr.rel (%p155) target = $region24
        $region23: #{resnet_lstm_forward.7} parent=19 // pred_region
          %s158 = sand.u32 %s57, 1
          %s159 = sand.u32 %s57, 1
          %s160 = smul.addr %s159, 512
          %s161 = scalar_lea.vmem [#allocation2], %s160
          %s162 = smul.u32 4, %s17
          %s163 = smul.addr %s162, 8
          %s164 = scalar_lea.vmem %s1, %s163
          // Predicated region
          $region25: #{resnet_lstm_forward.7} parent=23 // pred_check
            _
          $region26: #{resnet_lstm_forward.7} parent=23 // pred_check_branch
            %166 = sbr.rel (0) target = $region28
          $region27: #{resnet_lstm_forward.7} parent=23 // pred_region
            // Predicated region
            $region29: #{resnet_lstm_forward.7} parent=27 // pred_check
              _
            $region30: #{resnet_lstm_forward.7} parent=27 // pred_check_branch
              %168 = sbr.rel (0) target = $region32
            $region31: #{resnet_lstm_forward.7} parent=27 // pred_region
              loop: start=0, step=1, limit=1
              $region33: #{resnet_lstm_forward.7} parent=31 // loop_pre_header
                _
              $region34: #{resnet_lstm_forward.7} parent=31 // loop_header
                %s170 = sphi 0, %s174
                %p171 = scmp.ge.s32.totalorder %s170, 1
                %s175 = sphi %s164, %s164
                %s176 = sphi %s161, %s161
              $region35: #{resnet_lstm_forward.7} parent=31 // loop_header_branch
                %173 = sbr.rel (%p171) target = $region39
              $region36: #{resnet_lstm_forward.7} parent=31 // loop_body
                %v177 = vld [vmem:[%s175] sm:$0xff]
                %178 = vst [vmem:[%s176] sm:$0xff] %v177
                %v179 = vld [vmem:[%s175 + $0x8] sm:$0xff]
                %180 = vst [vmem:[%s176 + $0x8] sm:$0xff] %v179
                %v181 = vld [vmem:[%s175 + $0x10] sm:$0xff]
                %182 = vst [vmem:[%s176 + $0x10] sm:$0xff] %v181
                %v183 = vld [vmem:[%s175 + $0x18] sm:$0xff]
                %184 = vst [vmem:[%s176 + $0x18] sm:$0xff] %v183
                %v185 = vld [vmem:[%s175 + $0x40] sm:$0xff]
                %186 = vst [vmem:[%s176 + $0x20] sm:$0xff] %v185
                %v187 = vld [vmem:[%s175 + $0x48] sm:$0xff]
                %188 = vst [vmem:[%s176 + $0x28] sm:$0xff] %v187
                %v189 = vld [vmem:[%s175 + $0x50] sm:$0xff]
                %190 = vst [vmem:[%s176 + $0x30] sm:$0xff] %v189
                %v191 = vld [vmem:[%s175 + $0x58] sm:$0xff]
                %192 = vst [vmem:[%s176 + $0x38] sm:$0xff] %v191
                %v193 = vld [vmem:[%s175 + $0x80] sm:$0xff]
                %194 = vst [vmem:[%s176 + $0x40] sm:$0xff] %v193
                %v195 = vld [vmem:[%s175 + $0x88] sm:$0xff]
                %196 = vst [vmem:[%s176 + $0x48] sm:$0xff] %v195
                %v197 = vld [vmem:[%s175 + $0x90] sm:$0xff]
                %198 = vst [vmem:[%s176 + $0x50] sm:$0xff] %v197
                %v199 = vld [vmem:[%s175 + $0x98] sm:$0xff]
                %200 = vst [vmem:[%s176 + $0x58] sm:$0xff] %v199
                %v201 = vld [vmem:[%s175 + $0xc0] sm:$0xff]
                %202 = vst [vmem:[%s176 + $0x60] sm:$0xff] %v201
                %v203 = vld [vmem:[%s175 + $0xc8] sm:$0xff]
                %204 = vst [vmem:[%s176 + $0x68] sm:$0xff] %v203
                %v205 = vld [vmem:[%s175 + $0xd0] sm:$0xff]
                %206 = vst [vmem:[%s176 + $0x70] sm:$0xff] %v205
                %v207 = vld [vmem:[%s175 + $0xd8] sm:$0xff]
                %208 = vst [vmem:[%s176 + $0x78] sm:$0xff] %v207
                %v209 = vld [vmem:[%s175 + $0x100] sm:$0xff]
                %210 = vst [vmem:[%s176 + $0x80] sm:$0xff] %v209
                %v211 = vld [vmem:[%s175 + $0x108] sm:$0xff]
                %212 = vst [vmem:[%s176 + $0x88] sm:$0xff] %v211
                %v213 = vld [vmem:[%s175 + $0x110] sm:$0xff]
                %214 = vst [vmem:[%s176 + $0x90] sm:$0xff] %v213
                %v215 = vld [vmem:[%s175 + $0x118] sm:$0xff]
                %216 = vst [vmem:[%s176 + $0x98] sm:$0xff] %v215
                %v217 = vld [vmem:[%s175 + $0x140] sm:$0xff]
                %218 = vst [vmem:[%s176 + $0xa0] sm:$0xff] %v217
                %v219 = vld [vmem:[%s175 + $0x148] sm:$0xff]
                %220 = vst [vmem:[%s176 + $0xa8] sm:$0xff] %v219
                %v221 = vld [vmem:[%s175 + $0x150] sm:$0xff]
                %222 = vst [vmem:[%s176 + $0xb0] sm:$0xff] %v221
                %v223 = vld [vmem:[%s175 + $0x158] sm:$0xff]
                %224 = vst [vmem:[%s176 + $0xb8] sm:$0xff] %v223
                %v225 = vld [vmem:[%s175 + $0x180] sm:$0xff]
                %226 = vst [vmem:[%s176 + $0xc0] sm:$0xff] %v225
                %v227 = vld [vmem:[%s175 + $0x188] sm:$0xff]
                %228 = vst [vmem:[%s176 + $0xc8] sm:$0xff] %v227
                %v229 = vld [vmem:[%s175 + $0x190] sm:$0xff]
                %230 = vst [vmem:[%s176 + $0xd0] sm:$0xff] %v229
                %v231 = vld [vmem:[%s175 + $0x198] sm:$0xff]
                %232 = vst [vmem:[%s176 + $0xd8] sm:$0xff] %v231
                %v233 = vld [vmem:[%s175 + $0x1c0] sm:$0xff]
                %234 = vst [vmem:[%s176 + $0xe0] sm:$0xff] %v233
                %v235 = vld [vmem:[%s175 + $0x1c8] sm:$0xff]
                %236 = vst [vmem:[%s176 + $0xe8] sm:$0xff] %v235
                %v237 = vld [vmem:[%s175 + $0x1d0] sm:$0xff]
                %238 = vst [vmem:[%s176 + $0xf0] sm:$0xff] %v237
                %v239 = vld [vmem:[%s175 + $0x1d8] sm:$0xff]
                %240 = vst [vmem:[%s176 + $0xf8] sm:$0xff] %v239
                %v241 = vld [vmem:[%s175 + $0x200] sm:$0xff]
                %242 = vst [vmem:[%s176 + $0x100] sm:$0xff] %v241
                %v243 = vld [vmem:[%s175 + $0x208] sm:$0xff]
                %244 = vst [vmem:[%s176 + $0x108] sm:$0xff] %v243
                %v245 = vld [vmem:[%s175 + $0x210] sm:$0xff]
                %246 = vst [vmem:[%s176 + $0x110] sm:$0xff] %v245
                %v247 = vld [vmem:[%s175 + $0x218] sm:$0xff]
                %248 = vst [vmem:[%s176 + $0x118] sm:$0xff] %v247
                %v249 = vld [vmem:[%s175 + $0x240] sm:$0xff]
                %250 = vst [vmem:[%s176 + $0x120] sm:$0xff] %v249
                %v251 = vld [vmem:[%s175 + $0x248] sm:$0xff]
                %252 = vst [vmem:[%s176 + $0x128] sm:$0xff] %v251
                %v253 = vld [vmem:[%s175 + $0x250] sm:$0xff]
                %254 = vst [vmem:[%s176 + $0x130] sm:$0xff] %v253
                %v255 = vld [vmem:[%s175 + $0x258] sm:$0xff]
                %256 = vst [vmem:[%s176 + $0x138] sm:$0xff] %v255
                %v257 = vld [vmem:[%s175 + $0x280] sm:$0xff]
                %258 = vst [vmem:[%s176 + $0x140] sm:$0xff] %v257
                %v259 = vld [vmem:[%s175 + $0x288] sm:$0xff]
                %260 = vst [vmem:[%s176 + $0x148] sm:$0xff] %v259
                %v261 = vld [vmem:[%s175 + $0x290] sm:$0xff]
                %262 = vst [vmem:[%s176 + $0x150] sm:$0xff] %v261
                %v263 = vld [vmem:[%s175 + $0x298] sm:$0xff]
                %264 = vst [vmem:[%s176 + $0x158] sm:$0xff] %v263
                %v265 = vld [vmem:[%s175 + $0x2c0] sm:$0xff]
                %266 = vst [vmem:[%s176 + $0x160] sm:$0xff] %v265
                %v267 = vld [vmem:[%s175 + $0x2c8] sm:$0xff]
                %268 = vst [vmem:[%s176 + $0x168] sm:$0xff] %v267
                %v269 = vld [vmem:[%s175 + $0x2d0] sm:$0xff]
                %270 = vst [vmem:[%s176 + $0x170] sm:$0xff] %v269
                %v271 = vld [vmem:[%s175 + $0x2d8] sm:$0xff]
                %272 = vst [vmem:[%s176 + $0x178] sm:$0xff] %v271
                %v273 = vld [vmem:[%s175 + $0x300] sm:$0xff]
                %274 = vst [vmem:[%s176 + $0x180] sm:$0xff] %v273
                %v275 = vld [vmem:[%s175 + $0x308] sm:$0xff]
                %276 = vst [vmem:[%s176 + $0x188] sm:$0xff] %v275
                %v277 = vld [vmem:[%s175 + $0x310] sm:$0xff]
                %278 = vst [vmem:[%s176 + $0x190] sm:$0xff] %v277
                %v279 = vld [vmem:[%s175 + $0x318] sm:$0xff]
                %280 = vst [vmem:[%s176 + $0x198] sm:$0xff] %v279
                %v281 = vld [vmem:[%s175 + $0x340] sm:$0xff]
                %282 = vst [vmem:[%s176 + $0x1a0] sm:$0xff] %v281
                %v283 = vld [vmem:[%s175 + $0x348] sm:$0xff]
                %284 = vst [vmem:[%s176 + $0x1a8] sm:$0xff] %v283
                %v285 = vld [vmem:[%s175 + $0x350] sm:$0xff]
                %286 = vst [vmem:[%s176 + $0x1b0] sm:$0xff] %v285
                %v287 = vld [vmem:[%s175 + $0x358] sm:$0xff]
                %288 = vst [vmem:[%s176 + $0x1b8] sm:$0xff] %v287
                %v289 = vld [vmem:[%s175 + $0x380] sm:$0xff]
                %290 = vst [vmem:[%s176 + $0x1c0] sm:$0xff] %v289
                %v291 = vld [vmem:[%s175 + $0x388] sm:$0xff]
                %292 = vst [vmem:[%s176 + $0x1c8] sm:$0xff] %v291
                %v293 = vld [vmem:[%s175 + $0x390] sm:$0xff]
                %294 = vst [vmem:[%s176 + $0x1d0] sm:$0xff] %v293
                %v295 = vld [vmem:[%s175 + $0x398] sm:$0xff]
                %296 = vst [vmem:[%s176 + $0x1d8] sm:$0xff] %v295
                %v297 = vld [vmem:[%s175 + $0x3c0] sm:$0xff]
                %298 = vst [vmem:[%s176 + $0x1e0] sm:$0xff] %v297
                %v299 = vld [vmem:[%s175 + $0x3c8] sm:$0xff]
                %300 = vst [vmem:[%s176 + $0x1e8] sm:$0xff] %v299
                %v301 = vld [vmem:[%s175 + $0x3d0] sm:$0xff]
                %302 = vst [vmem:[%s176 + $0x1f0] sm:$0xff] %v301
                %v303 = vld [vmem:[%s175 + $0x3d8] sm:$0xff]
                %304 = vst [vmem:[%s176 + $0x1f8] sm:$0xff] %v303
              $region37: #{resnet_lstm_forward.7} parent=31 // loop_footer
                %s174 = sadd.s32 1, %s170
              $region38: #{resnet_lstm_forward.7} parent=31 // loop_footer_branch
                %169 = sbr.rel target = $region34
              $region39: #{resnet_lstm_forward.7} parent=31 // loop_exit
                _
            $region32: #{resnet_lstm_forward.7} parent=27 // pred_fallthru
              _
            // Predicated region
            $region40: #{resnet_lstm_forward.7} parent=27 // pred_check
              _
            $region41: #{resnet_lstm_forward.7} parent=27 // pred_check_branch
              %306 = sbr.rel target = $region43
            $region42: #{resnet_lstm_forward.7} parent=27 // pred_region
              _
            $region43: #{resnet_lstm_forward.7} parent=27 // pred_fallthru
              _
          $region28: #{resnet_lstm_forward.7} parent=23 // pred_fallthru
            _
          %307 = vnop
        $region24: #{resnet_lstm_forward.7} parent=19 // pred_fallthru
          _
        // Predicated region
        $region44: #{resnet_lstm_forward.7} parent=19 // pred_check
          %p308 = pneg %p93
        $region45: #{resnet_lstm_forward.7} parent=19 // pred_check_branch
          %310 = sbr.rel (%p308) target = $region47
        $region46: #{resnet_lstm_forward.7} parent=19 // pred_region
          %s311 = smul.u32 4, %s17
          %p312 = scmp.lt.s32.totalorder %s311, 7
          %s313 = scalar_select %p312, %s311, 7
          %s314 = scalar_lea.vmem %s2, %s313
          %s315 = smul.u32 4, %s17
        $region47: #{resnet_lstm_forward.7} parent=19 // pred_fallthru
          _
      $region20: #{resnet_lstm_forward.7} parent=5 // pred_fallthru
        _
      %p316 = scmp.le.s32.totalorder 1, %s9
      %p317 = scmp.lt.s32.totalorder %s9, 3
      %p318 = pnand %p316, %p317
      %p319 = pneg %p318
      // Predicated region
      $region48: #{resnet_lstm_forward.7} parent=5 // pred_check
        _
      $region49: #{resnet_lstm_forward.7} parent=5 // pred_check_branch
        %321 = sbr.rel (%p318) target = $region51
      $region50: #{resnet_lstm_forward.7} parent=5 // pred_region
        %s322 = ssub.s32 %s9, 1
        %s323 = sand.u32 %s60, 1
        %s324 = sand.u32 %s60, 1
        %s325 = smul.addr %s324, 512
        %s326 = scalar_lea.vmem [#allocation2], %s325
        // Predicated region
        $region52: #{resnet_lstm_forward.7} parent=50 // pred_check
          %p327 = pneg %p73
        $region53: #{resnet_lstm_forward.7} parent=50 // pred_check_branch
          %329 = sbr.rel (%p327) target = $region55
        $region54: #{resnet_lstm_forward.7} parent=50 // pred_region
          _
        $region55: #{resnet_lstm_forward.7} parent=50 // pred_fallthru
          _
        %s330 = smul.u32 2, %s18
        %p331 = scmp.lt.s32.totalorder %s330, 1
        %s332 = scalar_select %p331, %s330, 1
        %s333 = smul.addr %s332, 8
        %s334 = scalar_lea.vmem %s0, %s333
        %p335 = pneg %p47
        %p336 = pneg %p44
        %s337 = sand.u32 %s60, 1
        %s338 = sand.u32 %s60, 1
        %s339 = smul.addr %s338, 512
        %s340 = scalar_lea.vmem [#allocation2], %s339
        %p341 = pneg %p73
        %p342 = pneg %p70
        %s343 = smul.u32 4, %s19
        %p344 = scmp.lt.s32.totalorder %s343, 7
        %s345 = scalar_select %p344, %s343, 7
        %s346 = scalar_lea.vmem %s2, %s345
        %p347 = pneg %p99
        %p348 = pneg %p96
        %p349 = pneg %p127
        %p350 = pneg %p124
        %s351 = sand.u32 %s114, 1
        %s352 = sand.u32 %s114, 1
        %s353 = smul.addr %s352, 64
        %s354 = scalar_lea.vmem [#allocation3], %s353
        %s355 = smul.u32 2, %s18
        %p356 = scmp.lt.s32.totalorder %s355, 1
        %s357 = scalar_select %p356, %s355, 1
        %s358 = smul.addr %s357, 8
        %s359 = scalar_lea.vmem %s0, %s358
        %s360 = smul.u32 2, %s18
        %s361 = smul.u32 4, %s19
        %s362 = smul.u32 4, %s19
        %p363 = scmp.lt.s32.totalorder %s362, 7
        %s364 = scalar_select %p363, %s362, 7
        %s365 = scalar_lea.vmem %s2, %s364
        %s366 = smul.u32 4, %s19
        %s367 = smul.u32 2, %s18
        %s368 = smul.u32 4, %s19
        %v369 = vld [vmem:[%s359] sm:$0xff]
        %v370 = vld [vmem:[%s359 + $0x8] sm:$0xff]
        %v371 = vld [vmem:[%s326] sm:$0xff]
        %v372 = vld [vmem:[%s326 + $0x8] sm:$0xff]
        %v373 = vld [vmem:[%s326 + $0x10] sm:$0xff]
        %v374 = vld [vmem:[%s326 + $0x18] sm:$0xff]
        %v375 = vld [vmem:[%s326 + $0x20] sm:$0xff]
        %v376 = vld [vmem:[%s326 + $0x28] sm:$0xff]
        %v377 = vld [vmem:[%s326 + $0x30] sm:$0xff]
        %v378 = vld [vmem:[%s326 + $0x38] sm:$0xff]
        %v379 = vld [vmem:[%s326 + $0x40] sm:$0xff]
        %v380 = vld [vmem:[%s326 + $0x48] sm:$0xff]
        %v381 = vld [vmem:[%s326 + $0x50] sm:$0xff]
        %v382 = vld [vmem:[%s326 + $0x58] sm:$0xff]
        %v383 = vld [vmem:[%s326 + $0x60] sm:$0xff]
        %v384 = vld [vmem:[%s326 + $0x68] sm:$0xff]
        %v385 = vld [vmem:[%s326 + $0x70] sm:$0xff]
        %v386 = vld [vmem:[%s326 + $0x78] sm:$0xff]
        %v387 = vld [vmem:[%s326 + $0x80] sm:$0xff]
        %v388 = vld [vmem:[%s326 + $0x88] sm:$0xff]
        %v389 = vld [vmem:[%s326 + $0x90] sm:$0xff]
        %v390 = vld [vmem:[%s326 + $0x98] sm:$0xff]
        %v391 = vld [vmem:[%s326 + $0xa0] sm:$0xff]
        %v392 = vld [vmem:[%s326 + $0xa8] sm:$0xff]
        %v393 = vld [vmem:[%s326 + $0xb0] sm:$0xff]
        %v394 = vld [vmem:[%s326 + $0xb8] sm:$0xff]
        %v395 = vld [vmem:[%s326 + $0xc0] sm:$0xff]
        %v396 = vld [vmem:[%s326 + $0xc8] sm:$0xff]
        %v397 = vld [vmem:[%s326 + $0xd0] sm:$0xff]
        %v398 = vld [vmem:[%s326 + $0xd8] sm:$0xff]
        %v399 = vld [vmem:[%s326 + $0xe0] sm:$0xff]
        %v400 = vld [vmem:[%s326 + $0xe8] sm:$0xff]
        %v401 = vld [vmem:[%s326 + $0xf0] sm:$0xff]
        %v402 = vld [vmem:[%s326 + $0xf8] sm:$0xff]
        %v403 = vld [vmem:[%s326 + $0x100] sm:$0xff]
        %v404 = vld [vmem:[%s326 + $0x108] sm:$0xff]
        %v405 = vld [vmem:[%s326 + $0x110] sm:$0xff]
        %v406 = vld [vmem:[%s326 + $0x118] sm:$0xff]
        %v407 = vld [vmem:[%s326 + $0x120] sm:$0xff]
        %v408 = vld [vmem:[%s326 + $0x128] sm:$0xff]
        %v409 = vld [vmem:[%s326 + $0x130] sm:$0xff]
        %v410 = vld [vmem:[%s326 + $0x138] sm:$0xff]
        %v411 = vld [vmem:[%s326 + $0x140] sm:$0xff]
        %v412 = vld [vmem:[%s326 + $0x148] sm:$0xff]
        %v413 = vld [vmem:[%s326 + $0x150] sm:$0xff]
        %v414 = vld [vmem:[%s326 + $0x158] sm:$0xff]
        %v415 = vld [vmem:[%s326 + $0x160] sm:$0xff]
        %v416 = vld [vmem:[%s326 + $0x168] sm:$0xff]
        %v417 = vld [vmem:[%s326 + $0x170] sm:$0xff]
        %v418 = vld [vmem:[%s326 + $0x178] sm:$0xff]
        %v419 = vld [vmem:[%s326 + $0x180] sm:$0xff]
        %v420 = vld [vmem:[%s326 + $0x188] sm:$0xff]
        %v421 = vld [vmem:[%s326 + $0x190] sm:$0xff]
        %v422 = vld [vmem:[%s326 + $0x198] sm:$0xff]
        %v423 = vld [vmem:[%s326 + $0x1a0] sm:$0xff]
        %v424 = vld [vmem:[%s326 + $0x1a8] sm:$0xff]
        %v425 = vld [vmem:[%s326 + $0x1b0] sm:$0xff]
        %v426 = vld [vmem:[%s326 + $0x1b8] sm:$0xff]
        %v427 = vld [vmem:[%s326 + $0x1c0] sm:$0xff]
        %v428 = vld [vmem:[%s326 + $0x1c8] sm:$0xff]
        %v429 = vld [vmem:[%s326 + $0x1d0] sm:$0xff]
        %v430 = vld [vmem:[%s326 + $0x1d8] sm:$0xff]
        %v431 = vld [vmem:[%s326 + $0x1e0] sm:$0xff]
        %v432 = vld [vmem:[%s326 + $0x1e8] sm:$0xff]
        %v433 = vld [vmem:[%s326 + $0x1f0] sm:$0xff]
        %v434 = vld [vmem:[%s326 + $0x1f8] sm:$0xff]
        %v435 = vld [vmem:[%s365] sm:$0xf]
        %v437 = vlaneseq
        %v438 = vshrl.u32 %v437, 7
        %v439 = vsub.s32 0, %v438
        %v440 = vrot.slane %v435, %v439
        %v441 = vlaneseq
        %v442 = vshrl.u32 %v441, 7
        %v443 = vsub.s32 1, %v442
        %v444 = vrot.slane %v435, %v443
        %v445 = vlaneseq
        %v446 = vshrl.u32 %v445, 7
        %v447 = vsub.s32 2, %v446
        %v448 = vrot.slane %v435, %v447
        %v449 = vlaneseq
        %v450 = vshrl.u32 %v449, 7
        %v451 = vsub.s32 3, %v450
        %v452 = vrot.slane %v435, %v451
        %457 = vmatprep.subr.mxu0 %v372
        %458 = vmatpush1.msra.mxu0 %v371
        %459 = vmatprep.subr.mxu0 %v376
        %460 = vmatpush1.msra.mxu0 %v375
        %461 = vmatprep.subr.mxu0 %v380
        %462 = vmatpush1.msra.mxu0 %v379
        %463 = vmatprep.subr.mxu0 %v384
        %464 = vmatpush1.msra.mxu0 %v383
        %465 = vmatprep.subr.mxu0 %v388
        %466 = vmatpush1.msra.mxu0 %v387
        %467 = vmatprep.subr.mxu0 %v392
        %468 = vmatpush1.msra.mxu0 %v391
        %469 = vmatprep.subr.mxu0 %v396
        %470 = vmatpush1.msra.mxu0 %v395
        %471 = vmatprep.subr.mxu0 %v400
        %472 = vmatpush1.msra.mxu0 %v399
        %473 = vmatprep.subr.mxu0 %v404
        %474 = vmatpush1.msra.mxu0 %v403
        %475 = vmatprep.subr.mxu0 %v408
        %476 = vmatpush1.msra.mxu0 %v407
        %477 = vmatprep.subr.mxu0 %v412
        %478 = vmatpush1.msra.mxu0 %v411
        %479 = vmatprep.subr.mxu0 %v416
        %480 = vmatpush1.msra.mxu0 %v415
        %481 = vmatprep.subr.mxu0 %v420
        %482 = vmatpush1.msra.mxu0 %v419
        %483 = vmatprep.subr.mxu0 %v424
        %484 = vmatpush1.msra.mxu0 %v423
        %485 = vmatprep.subr.mxu0 %v428
        %486 = vmatpush1.msra.mxu0 %v427
        %487 = vmatprep.subr.mxu0 %v432
        %488 = vmatpush1.msra.mxu0 %v431
        %489 = vmatprep.subr.mxu0 0.0
        %490 = vmatpush1.msra.mxu0 0.0
        %491 = vmatprep.subr.mxu0 0.0
        %492 = vmatpush1.msra.mxu0 0.0
        %493 = vmatprep.subr.mxu0 0.0
        %494 = vmatpush1.msra.mxu0 0.0
        %495 = vmatprep.subr.mxu0 0.0
        %496 = vmatpush1.msra.mxu0 0.0
        %497 = vmatprep.subr.mxu0 0.0
        %498 = vmatpush1.msra.mxu0 0.0
        %499 = vmatprep.subr.mxu0 0.0
        %500 = vmatpush1.msra.mxu0 0.0
        %501 = vmatprep.subr.mxu0 0.0
        %502 = vmatpush1.msra.mxu0 0.0
        %503 = vmatprep.subr.mxu0 0.0
        %504 = vmatpush1.msra.mxu0 0.0
        %505 = vmatprep.subr.mxu0 0.0
        %506 = vmatpush1.msra.mxu0 0.0
        %507 = vmatprep.subr.mxu0 0.0
        %508 = vmatpush1.msra.mxu0 0.0
        %509 = vmatprep.subr.mxu0 0.0
        %510 = vmatpush1.msra.mxu0 0.0
        %511 = vmatprep.subr.mxu0 0.0
        %512 = vmatpush1.msra.mxu0 0.0
        %513 = vmatprep.subr.mxu0 0.0
        %514 = vmatpush1.msra.mxu0 0.0
        %515 = vmatprep.subr.mxu0 0.0
        %516 = vmatpush1.msra.mxu0 0.0
        %517 = vmatprep.subr.mxu0 0.0
        %518 = vmatpush1.msra.mxu0 0.0
        %519 = vmatprep.subr.mxu0 0.0
        %520 = vmatpush1.msra.mxu0 0.0
        %521 = vmatprep.mubr.f32.mxu0 0.0
        %522 = vmatmul.mubr.f32.gmra.mrb[0].mxu0 %v369
        %v523 = vpop.f32.mrb[0].mxu0
        %v524 = vadd.f32 %v440, %v523
        %v525 = vpop.f32.mrb[0].mxu0
        %v526 = vadd.f32 %v444, %v525
        %527 = vmatprep.mubr.f32.mxu0 0.0
        %528 = vmatmul.mubr.f32.gmra.mrb[0].mxu0 %v370
        %v529 = vpop.f32.mrb[0].mxu0
        %v530 = vadd.f32 %v440, %v529
        %v531 = vpop.f32.mrb[0].mxu0
        %v532 = vadd.f32 %v444, %v531
        %533 = vdwg.mxu0
        %534 = vmatprep.subr.mxu0 %v374
        %535 = vmatpush1.msra.mxu0 %v373
        %536 = vmatprep.subr.mxu0 %v378
        %537 = vmatpush1.msra.mxu0 %v377
        %538 = vmatprep.subr.mxu0 %v382
        %539 = vmatpush1.msra.mxu0 %v381
        %540 = vmatprep.subr.mxu0 %v386
        %541 = vmatpush1.msra.mxu0 %v385
        %542 = vmatprep.subr.mxu0 %v390
        %543 = vmatpush1.msra.mxu0 %v389
        %544 = vmatprep.subr.mxu0 %v394
        %545 = vmatpush1.msra.mxu0 %v393
        %546 = vmatprep.subr.mxu0 %v398
        %547 = vmatpush1.msra.mxu0 %v397
        %548 = vmatprep.subr.mxu0 %v402
        %549 = vmatpush1.msra.mxu0 %v401
        %550 = vmatprep.subr.mxu0 %v406
        %551 = vmatpush1.msra.mxu0 %v405
        %552 = vmatprep.subr.mxu0 %v410
        %553 = vmatpush1.msra.mxu0 %v409
        %554 = vmatprep.subr.mxu0 %v414
        %555 = vmatpush1.msra.mxu0 %v413
        %556 = vmatprep.subr.mxu0 %v418
        %557 = vmatpush1.msra.mxu0 %v417
        %558 = vmatprep.subr.mxu0 %v422
        %559 = vmatpush1.msra.mxu0 %v421
        %560 = vmatprep.subr.mxu0 %v426
        %561 = vmatpush1.msra.mxu0 %v425
        %562 = vmatprep.subr.mxu0 %v430
        %563 = vmatpush1.msra.mxu0 %v429
        %564 = vmatprep.subr.mxu0 %v434
        %565 = vmatpush1.msra.mxu0 %v433
        %566 = vmatprep.subr.mxu0 0.0
        %567 = vmatpush1.msra.mxu0 0.0
        %568 = vmatprep.subr.mxu0 0.0
        %569 = vmatpush1.msra.mxu0 0.0
        %570 = vmatprep.subr.mxu0 0.0
        %571 = vmatpush1.msra.mxu0 0.0
        %572 = vmatprep.subr.mxu0 0.0
        %573 = vmatpush1.msra.mxu0 0.0
        %574 = vmatprep.subr.mxu0 0.0
        %575 = vmatpush1.msra.mxu0 0.0
        %576 = vmatprep.subr.mxu0 0.0
        %577 = vmatpush1.msra.mxu0 0.0
        %578 = vmatprep.subr.mxu0 0.0
        %579 = vmatpush1.msra.mxu0 0.0
        %580 = vmatprep.subr.mxu0 0.0
        %581 = vmatpush1.msra.mxu0 0.0
        %582 = vmatprep.subr.mxu0 0.0
        %583 = vmatpush1.msra.mxu0 0.0
        %584 = vmatprep.subr.mxu0 0.0
        %585 = vmatpush1.msra.mxu0 0.0
        %586 = vmatprep.subr.mxu0 0.0
        %587 = vmatpush1.msra.mxu0 0.0
        %588 = vmatprep.subr.mxu0 0.0
        %589 = vmatpush1.msra.mxu0 0.0
        %590 = vmatprep.subr.mxu0 0.0
        %591 = vmatpush1.msra.mxu0 0.0
        %592 = vmatprep.subr.mxu0 0.0
        %593 = vmatpush1.msra.mxu0 0.0
        %594 = vmatprep.subr.mxu0 0.0
        %595 = vmatpush1.msra.mxu0 0.0
        %596 = vmatprep.subr.mxu0 0.0
        %597 = vmatpush1.msra.mxu0 0.0
        %598 = vmatprep.mubr.f32.mxu0 0.0
        %599 = vmatmul.mubr.f32.gmra.mrb[0].mxu0 %v369
        %v600 = vpop.f32.mrb[0].mxu0
        %v601 = vadd.f32 %v448, %v600
        %v602 = vpop.f32.mrb[0].mxu0
        %v603 = vadd.f32 %v452, %v602
        %604 = vmatprep.mubr.f32.mxu0 0.0
        %605 = vmatmul.mubr.f32.gmra.mrb[0].mxu0 %v370
        %v606 = vpop.f32.mrb[0].mxu0
        %v607 = vadd.f32 %v448, %v606
        %v608 = vpop.f32.mrb[0].mxu0
        %v609 = vadd.f32 %v452, %v608
        %610 = vdwg.mxu0
        %611 = vst [vmem:[%s354] sm:$0xff] %v524
        %612 = vst [vmem:[%s354 + $0x8] sm:$0xff] %v526
        %613 = vst [vmem:[%s354 + $0x10] sm:$0xff] %v601
        %614 = vst [vmem:[%s354 + $0x18] sm:$0xff] %v603
        %615 = vst [vmem:[%s354 + $0x20] sm:$0xff] %v530
        %616 = vst [vmem:[%s354 + $0x28] sm:$0xff] %v532
        %617 = vst [vmem:[%s354 + $0x30] sm:$0xff] %v607
        %618 = vst [vmem:[%s354 + $0x38] sm:$0xff] %v609
        %s619 = sand.u32 %s114, 1
        %s620 = sand.u32 %s114, 1
        %s621 = smul.addr %s620, 64
        %s622 = scalar_lea.vmem [#allocation3], %s621
        // Predicated region
        $region56: #{resnet_lstm_forward.7} parent=50 // pred_check
          %p623 = pneg %p124
        $region57: #{resnet_lstm_forward.7} parent=50 // pred_check_branch
          %625 = sbr.rel (%p623) target = $region59
        $region58: #{resnet_lstm_forward.7} parent=50 // pred_region
          %s626 = smul.u32 2, %s18
          %s627 = smul.u32 4, %s19
          %s628 = smul.addr %s626, 8
          %s629 = sadd.s32 %s627, %s628
          %s630 = smul.addr %s629, 8
          %s631 = scalar_lea.vmem %s3, %s630
          // Predicated region
          $region60: #{resnet_lstm_forward.7} parent=58 // pred_check
            _
          $region61: #{resnet_lstm_forward.7} parent=58 // pred_check_branch
            %633 = sbr.rel (0) target = $region63
          $region62: #{resnet_lstm_forward.7} parent=58 // pred_region
            // Predicated region
            $region64: #{resnet_lstm_forward.7} parent=62 // pred_check
              _
            $region65: #{resnet_lstm_forward.7} parent=62 // pred_check_branch
              %635 = sbr.rel (0) target = $region67
            $region66: #{resnet_lstm_forward.7} parent=62 // pred_region
              loop: start=0, step=1, limit=1
              $region68: #{resnet_lstm_forward.7} parent=66 // loop_pre_header
                _
              $region69: #{resnet_lstm_forward.7} parent=66 // loop_header
                %s637 = sphi 0, %s641
                %p638 = scmp.ge.s32.totalorder %s637, 1
                %s642 = sphi %s622, %s622
                %s643 = sphi %s631, %s631
              $region70: #{resnet_lstm_forward.7} parent=66 // loop_header_branch
                %640 = sbr.rel (%p638) target = $region74
              $region71: #{resnet_lstm_forward.7} parent=66 // loop_body
                %v644 = vld [vmem:[%s642] sm:$0xff]
                %645 = vst [vmem:[%s643] sm:$0xff] %v644
                %v646 = vld [vmem:[%s642 + $0x8] sm:$0xff]
                %647 = vst [vmem:[%s643 + $0x8] sm:$0xff] %v646
                %v648 = vld [vmem:[%s642 + $0x10] sm:$0xff]
                %649 = vst [vmem:[%s643 + $0x10] sm:$0xff] %v648
                %v650 = vld [vmem:[%s642 + $0x18] sm:$0xff]
                %651 = vst [vmem:[%s643 + $0x18] sm:$0xff] %v650
                %v652 = vld [vmem:[%s642 + $0x20] sm:$0xff]
                %653 = vst [vmem:[%s643 + $0x40] sm:$0xff] %v652
                %v654 = vld [vmem:[%s642 + $0x28] sm:$0xff]
                %655 = vst [vmem:[%s643 + $0x48] sm:$0xff] %v654
                %v656 = vld [vmem:[%s642 + $0x30] sm:$0xff]
                %657 = vst [vmem:[%s643 + $0x50] sm:$0xff] %v656
                %v658 = vld [vmem:[%s642 + $0x38] sm:$0xff]
                %659 = vst [vmem:[%s643 + $0x58] sm:$0xff] %v658
              $region72: #{resnet_lstm_forward.7} parent=66 // loop_footer
                %s641 = sadd.s32 1, %s637
              $region73: #{resnet_lstm_forward.7} parent=66 // loop_footer_branch
                %636 = sbr.rel target = $region69
              $region74: #{resnet_lstm_forward.7} parent=66 // loop_exit
                _
            $region67: #{resnet_lstm_forward.7} parent=62 // pred_fallthru
              _
            // Predicated region
            $region75: #{resnet_lstm_forward.7} parent=62 // pred_check
              _
            $region76: #{resnet_lstm_forward.7} parent=62 // pred_check_branch
              %661 = sbr.rel target = $region78
            $region77: #{resnet_lstm_forward.7} parent=62 // pred_region
              _
            $region78: #{resnet_lstm_forward.7} parent=62 // pred_fallthru
              _
          $region63: #{resnet_lstm_forward.7} parent=58 // pred_fallthru
            _
          %662 = vnop
        $region59: #{resnet_lstm_forward.7} parent=50 // pred_fallthru
          _
      $region51: #{resnet_lstm_forward.7} parent=5 // pred_fallthru
        _
      %p663 = scmp.le.s32.totalorder 2, %s9
      // Predicated region
      $region79: #{resnet_lstm_forward.7} parent=5 // pred_check
        %p664 = pneg %p663
      $region80: #{resnet_lstm_forward.7} parent=5 // pred_check_branch
        %666 = sbr.rel (%p664) target = $region82
      $region81: #{resnet_lstm_forward.7} parent=5 // pred_region
        %s667 = ssub.s32 %s9, 2
        // Predicated region
        $region83: #{resnet_lstm_forward.7} parent=81 // pred_check
          %p668 = pneg %p130
        $region84: #{resnet_lstm_forward.7} parent=81 // pred_check_branch
          %670 = sbr.rel (%p668) target = $region86
        $region85: #{resnet_lstm_forward.7} parent=81 // pred_region
          %s671 = sand.u32 %s115, 1
          %s672 = sand.u32 %s115, 1
          %s673 = smul.addr %s672, 64
          %s674 = scalar_lea.vmem [#allocation3], %s673
        $region86: #{resnet_lstm_forward.7} parent=81 // pred_fallthru
          _
      $region82: #{resnet_lstm_forward.7} parent=5 // pred_fallthru
        _
    $region6: #{resnet_lstm_forward.7} parent=1 // loop_footer
      %s13 = sadd.s32 1, %s9
    $region7: #{resnet_lstm_forward.7} parent=1 // loop_footer_branch
      %8 = sbr.rel target = $region3
    $region8: #{resnet_lstm_forward.7} parent=1 // loop_exit
      _

// kernel: resnet_lstm_forward.8
$region0: #{resnet_lstm_forward.8}
  #allocation0 [shape = 'u32[]', space=smem, size = 0x4, offset = 0x4, fixed_abs, tag = 'smem constant byte address 0x4 - core index']
  #allocation1 [shape = 'u32[144,128]{1,0:T(1,128)}', space=vmem, size = 0x12000, scoped, tag = 'internal scratch']
  #allocation2 [shape = 'f32[2,128]{1,0:T(2,128)}', space=vmem, size = 0x400, scoped, tag = 'scratch operand']
  #allocation3 [shape = 'f32[2,128]{1,0:T(2,128)}', space=vmem, size = 0x400, scoped, tag = 'scratch operand']
  %s0 = inlined_call_operand.vmem [shape: f32[8,2,1024], index: 0, kind: input, shape index: {}]
  %s1 = inlined_call_operand.vmem [shape: f32[2,128,512], index: 1, kind: input, shape index: {}]
  %s2 = inlined_call_operand.vmem [shape: f32[8,2,256], index: 2, kind: output, shape index: {}]
  %s3 = sld [smem:[#allocation0]]
  $region123: #{resnet_lstm_forward.8} parent=0
    _
  %s5 = ssub.s32 1, %s3
  %s6 = scalar_select 0, %s5, %s3
  $region1: #{resnet_lstm_forward.8} parent=0
    #allocation4 [shape = 'u8[65536]{0}', space=vmem, size = 0x10000, scoped, tag = 'input window, operand 0']
    #allocation5 [shape = 'u8[16384]{0}', space=vmem, size = 0x4000, scoped, tag = 'output window, operand 0']
    loop: start=0, step=1, limit=4
    $region2: #{resnet_lstm_forward.8} parent=1 // loop_pre_header
      _
    $region3: #{resnet_lstm_forward.8} parent=1 // loop_header
      %s8 = sphi 0, %s12
      %p9 = scmp.ge.s32.totalorder %s8, 4
      %s18 = sphi 0, %s20
      %s21 = sphi 0, %s18
      %s22 = sphi 0, %s21
      %s38 = sphi 0, %s22
      %s44 = sphi 0, %s46
      %s47 = sphi 0, %s44
      %s48 = sphi 0, %s47
      %s64 = sphi 0, %s48
      %s70 = sphi 0, %s72
      %s73 = sphi 0, %s70
      %s74 = sphi 0, %s73
      %s90 = sphi 0, %s74
    $region4: #{resnet_lstm_forward.8} parent=1 // loop_header_branch
      %11 = sbr.rel (%p9) target = $region8
    $region5: #{resnet_lstm_forward.8} parent=1 // loop_body
      %s13 = ssub.s32 %s8, 1
      %s14 = ssub.s32 %s8, 2
      %s15 = sadd.s32 %s8, 1
      %s16 = ssub.s32 %s8, %s15
      %p17 = scmp.eq.s32.totalorder %s16, 0
      %s19 = sadd.s32 %s18, 1
      %s20 = scalar_select %p17, %s18, %s19
      %p23 = pneg %p17
      %p24 = scmp.eq.s32.totalorder %s8, 1
      %p25 = por %p23, %p24
      %p26 = scmp.ne.s32.totalorder %s18, %s21
      %p27 = scmp.eq.s32.totalorder %s8, 0
      %p28 = por %p26, %p27
      %p29 = scmp.ne.s32.totalorder %s18, %s21
      %p30 = scmp.eq.s32.totalorder %s13, 1
      %p31 = por %p29, %p30
      %p32 = scmp.ne.s32.totalorder %s21, %s22
      %p33 = scmp.eq.s32.totalorder %s13, 0
      %p34 = por %p32, %p33
      %p35 = scmp.ne.s32.totalorder %s21, %s22
      %p36 = scmp.eq.s32.totalorder %s14, 1
      %p37 = por %p35, %p36
      %p39 = scmp.ne.s32.totalorder %s22, %s38
      %p40 = scmp.eq.s32.totalorder %s14, 0
      %p41 = por %p39, %p40
      %s42 = ssub.s32 %s8, %s15
      %p43 = scmp.eq.s32.totalorder %s42, 0
      %s45 = sadd.s32 %s44, 1
      %s46 = scalar_select %p43, %s44, %s45
      %p49 = pneg %p43
      %p50 = scmp.eq.s32.totalorder %s8, 1
      %p51 = por %p49, %p50
      %p52 = scmp.ne.s32.totalorder %s44, %s47
      %p53 = scmp.eq.s32.totalorder %s8, 0
      %p54 = por %p52, %p53
      %p55 = scmp.ne.s32.totalorder %s44, %s47
      %p56 = scmp.eq.s32.totalorder %s13, 1
      %p57 = por %p55, %p56
      %p58 = scmp.ne.s32.totalorder %s47, %s48
      %p59 = scmp.eq.s32.totalorder %s13, 0
      %p60 = por %p58, %p59
      %p61 = scmp.ne.s32.totalorder %s47, %s48
      %p62 = scmp.eq.s32.totalorder %s14, 1
      %p63 = por %p61, %p62
      %p65 = scmp.ne.s32.totalorder %s48, %s64
      %p66 = scmp.eq.s32.totalorder %s14, 0
      %p67 = por %p65, %p66
      %s68 = ssub.s32 %s8, %s15
      %p69 = scmp.eq.s32.totalorder %s68, 0
      %s71 = sadd.s32 %s70, 1
      %s72 = scalar_select %p69, %s70, %s71
      %p75 = pneg %p69
      %p76 = scmp.eq.s32.totalorder %s8, 1
      %p77 = por %p75, %p76
      %p78 = scmp.ne.s32.totalorder %s70, %s73
      %p79 = scmp.eq.s32.totalorder %s8, 0
      %p80 = por %p78, %p79
      %p81 = scmp.ne.s32.totalorder %s70, %s73
      %p82 = scmp.eq.s32.totalorder %s13, 1
      %p83 = por %p81, %p82
      %p84 = scmp.ne.s32.totalorder %s73, %s74
      %p85 = scmp.eq.s32.totalorder %s13, 0
      %p86 = por %p84, %p85
      %p87 = scmp.ne.s32.totalorder %s73, %s74
      %p88 = scmp.eq.s32.totalorder %s14, 1
      %p89 = por %p87, %p88
      %p91 = scmp.ne.s32.totalorder %s74, %s90
      %p92 = scmp.eq.s32.totalorder %s14, 0
      %p93 = por %p91, %p92
      %p94 = scmp.le.s32.totalorder 1, %s8
      %p95 = scmp.lt.s32.totalorder %s8, 3
      %p96 = pnand %p94, %p95
      %p97 = pneg %p96
      // Predicated region
      $region9: #{resnet_lstm_forward.8} parent=5 // pred_check
        _
      $region10: #{resnet_lstm_forward.8} parent=5 // pred_check_branch
        %99 = sbr.rel (%p96) target = $region12
      $region11: #{resnet_lstm_forward.8} parent=5 // pred_region
        %s100 = ssub.s32 %s8, 1
      $region12: #{resnet_lstm_forward.8} parent=5 // pred_fallthru
        _
      %p101 = scmp.lt.s32.totalorder %s8, 2
      // Predicated region
      $region13: #{resnet_lstm_forward.8} parent=5 // pred_check
        %p102 = pneg %p101
      $region14: #{resnet_lstm_forward.8} parent=5 // pred_check_branch
        %104 = sbr.rel (%p102) target = $region16
      $region15: #{resnet_lstm_forward.8} parent=5 // pred_region
        // Predicated region
        $region17: #{resnet_lstm_forward.8} parent=15 // pred_check
          %p105 = pneg %p28
        $region18: #{resnet_lstm_forward.8} parent=15 // pred_check_branch
          %107 = sbr.rel (%p105) target = $region20
        $region19: #{resnet_lstm_forward.8} parent=15 // pred_region
          %s108 = sand.u32 %s18, 1
          %s109 = sand.u32 %s18, 1
          %s110 = smul.addr %s109, 64
          %s111 = scalar_lea.vmem [#allocation4], %s110
          %s112 = smul.u32 4, %s8
          %s113 = smul.addr %s112, 2
          %s114 = scalar_lea.vmem %s0, %s113
          // Predicated region
          $region21: #{resnet_lstm_forward.8} parent=19 // pred_check
            _
          $region22: #{resnet_lstm_forward.8} parent=19 // pred_check_branch
            %116 = sbr.rel (0) target = $region24
          $region23: #{resnet_lstm_forward.8} parent=19 // pred_region
            // Predicated region
            $region25: #{resnet_lstm_forward.8} parent=23 // pred_check
              _
            $region26: #{resnet_lstm_forward.8} parent=23 // pred_check_branch
              %118 = sbr.rel (0) target = $region28
            $region27: #{resnet_lstm_forward.8} parent=23 // pred_region
              // Predicated region
              $region40: #{resnet_lstm_forward.8} parent=27 // pred_check
                _
              $region41: #{resnet_lstm_forward.8} parent=27 // pred_check_branch
                %147 = sbr.rel (0) target = $region43
              $region42: #{resnet_lstm_forward.8} parent=27 // pred_region
                loop: start=0, step=1, limit=1
                $region44: #{resnet_lstm_forward.8} parent=42 // loop_pre_header
                  _
                $region45: #{resnet_lstm_forward.8} parent=42 // loop_header
                  %s149 = sphi 0, %s153
                  %p150 = scmp.ge.s32.totalorder %s149, 1
                  %s154 = sphi %s114, %s114
                  %s155 = sphi %s111, %s111
                $region46: #{resnet_lstm_forward.8} parent=42 // loop_header_branch
                  %152 = sbr.rel (%p150) target = $region50
                $region47: #{resnet_lstm_forward.8} parent=42 // loop_body
                  %v156 = vld [vmem:[%s154] sm:$0xff]
                  %157 = vst [vmem:[%s155] sm:$0xff] %v156
                  %v158 = vld [vmem:[%s154 + $0x10] sm:$0xff]
                  %159 = vst [vmem:[%s155 + $0x8] sm:$0xff] %v158
                  %v160 = vld [vmem:[%s154 + $0x20] sm:$0xff]
                  %161 = vst [vmem:[%s155 + $0x10] sm:$0xff] %v160
                  %v162 = vld [vmem:[%s154 + $0x30] sm:$0xff]
                  %163 = vst [vmem:[%s155 + $0x18] sm:$0xff] %v162
                  %v164 = vld [vmem:[%s154 + $0x40] sm:$0xff]
                  %165 = vst [vmem:[%s155 + $0x20] sm:$0xff] %v164
                  %v166 = vld [vmem:[%s154 + $0x50] sm:$0xff]
                  %167 = vst [vmem:[%s155 + $0x28] sm:$0xff] %v166
                  %v168 = vld [vmem:[%s154 + $0x60] sm:$0xff]
                  %169 = vst [vmem:[%s155 + $0x30] sm:$0xff] %v168
                  %v170 = vld [vmem:[%s154 + $0x70] sm:$0xff]
                  %171 = vst [vmem:[%s155 + $0x38] sm:$0xff] %v170
                $region48: #{resnet_lstm_forward.8} parent=42 // loop_footer
                  %s153 = sadd.s32 1, %s149
                $region49: #{resnet_lstm_forward.8} parent=42 // loop_footer_branch
                  %148 = sbr.rel target = $region45
                $region50: #{resnet_lstm_forward.8} parent=42 // loop_exit
                  _
              $region43: #{resnet_lstm_forward.8} parent=27 // pred_fallthru
                _
              // Predicated region
              $region51: #{resnet_lstm_forward.8} parent=27 // pred_check
                _
              $region52: #{resnet_lstm_forward.8} parent=27 // pred_check_branch
                %173 = sbr.rel target = $region54
              $region53: #{resnet_lstm_forward.8} parent=27 // pred_region
                _
              $region54: #{resnet_lstm_forward.8} parent=27 // pred_fallthru
                _
            $region28: #{resnet_lstm_forward.8} parent=23 // pred_fallthru
              _
            // Predicated region
            $region29: #{resnet_lstm_forward.8} parent=23 // pred_check
              _
            $region30: #{resnet_lstm_forward.8} parent=23 // pred_check_branch
              %120 = sbr.rel target = $region32
            $region31: #{resnet_lstm_forward.8} parent=23 // pred_region
              loop: start=0, step=1, limit=1
              $region33: #{resnet_lstm_forward.8} parent=31 // loop_pre_header
                _
              $region34: #{resnet_lstm_forward.8} parent=31 // loop_header
                %s123 = sphi 0, %s127
                %p124 = scmp.ge.s32.totalorder %s123, 1
                %s128 = sphi %s114, %s114
                %s129 = sphi %s111, %s111
              $region35: #{resnet_lstm_forward.8} parent=31 // loop_header_branch
                %126 = sbr.rel (%p124) target = $region39
              $region36: #{resnet_lstm_forward.8} parent=31 // loop_body
                %v130 = vld [vmem:[%s128] sm:$0xff]
                %131 = vst [vmem:[%s129] sm:$0xff] %v130
                %v132 = vld [vmem:[%s128 + $0x10] sm:$0xff]
                %133 = vst [vmem:[%s129 + $0x8] sm:$0xff] %v132
                %v134 = vld [vmem:[%s128 + $0x20] sm:$0xff]
                %135 = vst [vmem:[%s129 + $0x10] sm:$0xff] %v134
                %v136 = vld [vmem:[%s128 + $0x30] sm:$0xff]
                %137 = vst [vmem:[%s129 + $0x18] sm:$0xff] %v136
                %v138 = vld [vmem:[%s128 + $0x40] sm:$0xff]
                %139 = vst [vmem:[%s129 + $0x20] sm:$0xff] %v138
                %v140 = vld [vmem:[%s128 + $0x50] sm:$0xff]
                %141 = vst [vmem:[%s129 + $0x28] sm:$0xff] %v140
                %v142 = vld [vmem:[%s128 + $0x60] sm:$0xff]
                %143 = vst [vmem:[%s129 + $0x30] sm:$0xff] %v142
                %v144 = vld [vmem:[%s128 + $0x70] sm:$0xff]
                %145 = vst [vmem:[%s129 + $0x38] sm:$0xff] %v144
              $region37: #{resnet_lstm_forward.8} parent=31 // loop_footer
                %s127 = sadd.s32 1, %s123
              $region38: #{resnet_lstm_forward.8} parent=31 // loop_footer_branch
                %122 = sbr.rel target = $region34
              $region39: #{resnet_lstm_forward.8} parent=31 // loop_exit
                _
            $region32: #{resnet_lstm_forward.8} parent=23 // pred_fallthru
              _
          $region24: #{resnet_lstm_forward.8} parent=19 // pred_fallthru
            _
          %174 = vnop
        $region20: #{resnet_lstm_forward.8} parent=15 // pred_fallthru
          _
        // Predicated region
        $region55: #{resnet_lstm_forward.8} parent=15 // pred_check
          %p175 = pneg %p54
        $region56: #{resnet_lstm_forward.8} parent=15 // pred_check_branch
          %177 = sbr.rel (%p175) target = $region58
        $region57: #{resnet_lstm_forward.8} parent=15 // pred_region
          %p178 = scmp.lt.s32.totalorder %s8, 1
          %s179 = scalar_select %p178, %s8, 1
          %s180 = smul.addr %s179, 64
          %s181 = smul.addr %s180, 8
          %s182 = scalar_lea.vmem %s1, %s181
        $region58: #{resnet_lstm_forward.8} parent=15 // pred_fallthru
          _
      $region16: #{resnet_lstm_forward.8} parent=5 // pred_fallthru
        _
      %p183 = scmp.le.s32.totalorder 1, %s8
      %p184 = scmp.lt.s32.totalorder %s8, 3
      %p185 = pnand %p183, %p184
      %p186 = pneg %p185
      // Predicated region
      $region59: #{resnet_lstm_forward.8} parent=5 // pred_check
        _
      $region60: #{resnet_lstm_forward.8} parent=5 // pred_check_branch
        %188 = sbr.rel (%p185) target = $region62
      $region61: #{resnet_lstm_forward.8} parent=5 // pred_region
        %s189 = ssub.s32 %s8, 1
        %s190 = sand.u32 %s21, 1
        %s191 = sand.u32 %s21, 1
        %s192 = smul.addr %s191, 64
        %s193 = scalar_lea.vmem [#allocation4], %s192
        // Predicated region
        $region63: #{resnet_lstm_forward.8} parent=61 // pred_check
          %p194 = pneg %p34
        $region64: #{resnet_lstm_forward.8} parent=61 // pred_check_branch
          %196 = sbr.rel (%p194) target = $region66
        $region65: #{resnet_lstm_forward.8} parent=61 // pred_region
          _
        $region66: #{resnet_lstm_forward.8} parent=61 // pred_fallthru
          _
        %s197 = sand.u32 %s21, 1
        %s198 = sand.u32 %s21, 1
        %s199 = smul.addr %s198, 64
        %s200 = scalar_lea.vmem [#allocation4], %s199
        %p201 = pneg %p34
        %p202 = pneg %p31
        %p203 = scmp.lt.s32.totalorder %s13, 1
        %s204 = scalar_select %p203, %s13, 1
        %s205 = smul.addr %s204, 64
        %s206 = smul.addr %s205, 8
        %s207 = scalar_lea.vmem %s1, %s206
        %p208 = pneg %p60
        %p209 = pneg %p57
        %p210 = pneg %p86
        %p211 = pneg %p83
        %s212 = sand.u32 %s73, 1
        %s213 = sand.u32 %s73, 1
        %s214 = smul.addr %s213, 16
        %s215 = scalar_lea.vmem [#allocation5], %s214
        %s216 = smul.u32 4, %s13
        %p217 = scmp.lt.s32.totalorder %s13, 1
        %s218 = scalar_select %p217, %s13, 1
        %s219 = smul.addr %s218, 64
        %s220 = smul.addr %s219, 8
        %s221 = scalar_lea.vmem %s1, %s220
        %222 = vst [vmem:[#allocation2] sm:$0x3] 0.0
        %223 = vst [vmem:[#allocation3] sm:$0x3] 0.0
        loop: start=0, step=1, limit=8
        $region67: #{resnet_lstm_forward.8} parent=61 // loop_pre_header
          _
        $region68: #{resnet_lstm_forward.8} parent=61 // loop_header
          %s225 = sphi 0, %s229
          %p226 = scmp.ge.s32.totalorder %s225, 8
        $region69: #{resnet_lstm_forward.8} parent=61 // loop_header_branch
          %228 = sbr.rel (%p226) target = $region73
        $region70: #{resnet_lstm_forward.8} parent=61 // loop_body
          %s230 = smul.u32 %s225, 2
          %s231 = ssub.s32 7, %s230
          %s232 = smul.u32 %s13, %s231
          %s233 = sadd.s32 %s225, %s232
          %s234 = smul.u32 %s233, 4
          %s235 = smul.addr %s234, 2
          %s236 = scalar_lea.vmem %s193, %s235 [#allocation4]
          %v237 = vld [vmem:[%s236] sm:$0xff]
          %v238 = vld [vmem:[#allocation2] sm:$0x3]
          %v239 = vld [vmem:[%s221] sm:$0xff]
          %v240 = vld [vmem:[%s221 + $0x8] sm:$0xff]
          %v241 = vld [vmem:[%s221 + $0x10] sm:$0xff]
          %v242 = vld [vmem:[%s221 + $0x18] sm:$0xff]
          %v243 = vld [vmem:[%s221 + $0x20] sm:$0xff]
          %v244 = vld [vmem:[%s221 + $0x28] sm:$0xff]
          %v245 = vld [vmem:[%s221 + $0x30] sm:$0xff]
          %v246 = vld [vmem:[%s221 + $0x38] sm:$0xff]
          %v247 = vld [vmem:[%s221 + $0x40] sm:$0xff]
          %v248 = vld [vmem:[%s221 + $0x48] sm:$0xff]
          %v249 = vld [vmem:[%s221 + $0x50] sm:$0xff]
          %v250 = vld [vmem:[%s221 + $0x58] sm:$0xff]
          %v251 = vld [vmem:[%s221 + $0x60] sm:$0xff]
          %v252 = vld [vmem:[%s221 + $0x68] sm:$0xff]
          %v253 = vld [vmem:[%s221 + $0x70] sm:$0xff]
          %v254 = vld [vmem:[%s221 + $0x78] sm:$0xff]
          %v255 = vld [vmem:[%s221 + $0x80] sm:$0xff]
          %v256 = vld [vmem:[%s221 + $0x88] sm:$0xff]
          %v257 = vld [vmem:[%s221 + $0x90] sm:$0xff]
          %v258 = vld [vmem:[%s221 + $0x98] sm:$0xff]
          %v259 = vld [vmem:[%s221 + $0xa0] sm:$0xff]
          %v260 = vld [vmem:[%s221 + $0xa8] sm:$0xff]
          %v261 = vld [vmem:[%s221 + $0xb0] sm:$0xff]
          %v262 = vld [vmem:[%s221 + $0xb8] sm:$0xff]
          %v263 = vld [vmem:[%s221 + $0xc0] sm:$0xff]
          %v264 = vld [vmem:[%s221 + $0xc8] sm:$0xff]
          %v265 = vld [vmem:[%s221 + $0xd0] sm:$0xff]
          %v266 = vld [vmem:[%s221 + $0xd8] sm:$0xff]
          %v267 = vld [vmem:[%s221 + $0xe0] sm:$0xff]
          %v268 = vld [vmem:[%s221 + $0xe8] sm:$0xff]
          %v269 = vld [vmem:[%s221 + $0xf0] sm:$0xff]
          %v270 = vld [vmem:[%s221 + $0xf8] sm:$0xff]
          %v271 = vld [vmem:[%s221 + $0x100] sm:$0xff]
          %v272 = vld [vmem:[%s221 + $0x108] sm:$0xff]
          %v273 = vld [vmem:[%s221 + $0x110] sm:$0xff]
          %v274 = vld [vmem:[%s221 + $0x118] sm:$0xff]
          %v275 = vld [vmem:[%s221 + $0x120] sm:$0xff]
          %v276 = vld [vmem:[%s221 + $0x128] sm:$0xff]
          %v277 = vld [vmem:[%s221 + $0x130] sm:$0xff]
          %v278 = vld [vmem:[%s221 + $0x138] sm:$0xff]
          %v279 = vld [vmem:[%s221 + $0x140] sm:$0xff]
          %v280 = vld [vmem:[%s221 + $0x148] sm:$0xff]
          %v281 = vld [vmem:[%s221 + $0x150] sm:$0xff]
          %v282 = vld [vmem:[%s221 + $0x158] sm:$0xff]
          %v283 = vld [vmem:[%s221 + $0x160] sm:$0xff]
          %v284 = vld [vmem:[%s221 + $0x168] sm:$0xff]
          %v285 = vld [vmem:[%s221 + $0x170] sm:$0xff]
          %v286 = vld [vmem:[%s221 + $0x178] sm:$0xff]
          %v287 = vld [vmem:[%s221 + $0x180] sm:$0xff]
          %v288 = vld [vmem:[%s221 + $0x188] sm:$0xff]
          %v289 = vld [vmem:[%s221 + $0x190] sm:$0xff]
          %v290 = vld [vmem:[%s221 + $0x198] sm:$0xff]
          %v291 = vld [vmem:[%s221 + $0x1a0] sm:$0xff]
          %v292 = vld [vmem:[%s221 + $0x1a8] sm:$0xff]
          %v293 = vld [vmem:[%s221 + $0x1b0] sm:$0xff]
          %v294 = vld [vmem:[%s221 + $0x1b8] sm:$0xff]
          %v295 = vld [vmem:[%s221 + $0x1c0] sm:$0xff]
          %v296 = vld [vmem:[%s221 + $0x1c8] sm:$0xff]
          %v297 = vld [vmem:[%s221 + $0x1d0] sm:$0xff]
          %v298 = vld [vmem:[%s221 + $0x1d8] sm:$0xff]
          %v299 = vld [vmem:[%s221 + $0x1e0] sm:$0xff]
          %v300 = vld [vmem:[%s221 + $0x1e8] sm:$0xff]
          %v301 = vld [vmem:[%s221 + $0x1f0] sm:$0xff]
          %v302 = vld [vmem:[%s221 + $0x1f8] sm:$0xff]
          %303 = vmatprep.subr.mxu0 %v240
          %304 = vmatpush1.msra.mxu0 %v239
          %305 = vmatprep.subr.mxu0 %v244
          %306 = vmatpush1.msra.mxu0 %v243
          %307 = vmatprep.subr.mxu0 %v248
          %308 = vmatpush1.msra.mxu0 %v247
          %309 = vmatprep.subr.mxu0 %v252
          %310 = vmatpush1.msra.mxu0 %v251
          %311 = vmatprep.subr.mxu0 %v256
          %312 = vmatpush1.msra.mxu0 %v255
          %313 = vmatprep.subr.mxu0 %v260
          %314 = vmatpush1.msra.mxu0 %v259
          %315 = vmatprep.subr.mxu0 %v264
          %316 = vmatpush1.msra.mxu0 %v263
          %317 = vmatprep.subr.mxu0 %v268
          %318 = vmatpush1.msra.mxu0 %v267
          %319 = vmatprep.subr.mxu0 %v272
          %320 = vmatpush1.msra.mxu0 %v271
          %321 = vmatprep.subr.mxu0 %v276
          %322 = vmatpush1.msra.mxu0 %v275
          %323 = vmatprep.subr.mxu0 %v280
          %324 = vmatpush1.msra.mxu0 %v279
          %325 = vmatprep.subr.mxu0 %v284
          %326 = vmatpush1.msra.mxu0 %v283
          %327 = vmatprep.subr.mxu0 %v288
          %328 = vmatpush1.msra.mxu0 %v287
          %329 = vmatprep.subr.mxu0 %v292
          %330 = vmatpush1.msra.mxu0 %v291
          %331 = vmatprep.subr.mxu0 %v296
          %332 = vmatpush1.msra.mxu0 %v295
          %333 = vmatprep.subr.mxu0 %v300
          %334 = vmatpush1.msra.mxu0 %v299
          %335 = vmatprep.subr.mxu0 0.0
          %336 = vmatpush1.msra.mxu0 0.0
          %337 = vmatprep.subr.mxu0 0.0
          %338 = vmatpush1.msra.mxu0 0.0
          %339 = vmatprep.subr.mxu0 0.0
          %340 = vmatpush1.msra.mxu0 0.0
          %341 = vmatprep.subr.mxu0 0.0
          %342 = vmatpush1.msra.mxu0 0.0
          %343 = vmatprep.subr.mxu0 0.0
          %344 = vmatpush1.msra.mxu0 0.0
          %345 = vmatprep.subr.mxu0 0.0
          %346 = vmatpush1.msra.mxu0 0.0
          %347 = vmatprep.subr.mxu0 0.0
          %348 = vmatpush1.msra.mxu0 0.0
          %349 = vmatprep.subr.mxu0 0.0
          %350 = vmatpush1.msra.mxu0 0.0
          %351 = vmatprep.subr.mxu0 0.0
          %352 = vmatpush1.msra.mxu0 0.0
          %353 = vmatprep.subr.mxu0 0.0
          %354 = vmatpush1.msra.mxu0 0.0
          %355 = vmatprep.subr.mxu0 0.0
          %356 = vmatpush1.msra.mxu0 0.0
          %357 = vmatprep.subr.mxu0 0.0
          %358 = vmatpush1.msra.mxu0 0.0
          %359 = vmatprep.subr.mxu0 0.0
          %360 = vmatpush1.msra.mxu0 0.0
          %361 = vmatprep.subr.mxu0 0.0
          %362 = vmatpush1.msra.mxu0 0.0
          %363 = vmatprep.subr.mxu0 0.0
          %364 = vmatpush1.msra.mxu0 0.0
          %365 = vmatprep.subr.mxu0 0.0
          %366 = vmatpush1.msra.mxu0 0.0
          %367 = vmatprep.mubr.f32.mxu0 0.0
          %368 = vmatmul.mubr.f32.gmra.mrb[0].mxu0 %v238
          %v369 = vpop.f32.mrb[0].mxu0
          %v370 = vadd.f32 0.0, %v369
          %v371 = vpop.f32.mrb[0].mxu0
          %v372 = vadd.f32 0.0, %v371
          %373 = vdwg.mxu0
          %374 = vmatprep.subr.mxu0 %v242
          %375 = vmatpush1.msra.mxu0 %v241
          %376 = vmatprep.subr.mxu0 %v246
          %377 = vmatpush1.msra.mxu0 %v245
          %378 = vmatprep.subr.mxu0 %v250
          %379 = vmatpush1.msra.mxu0 %v249
          %380 = vmatprep.subr.mxu0 %v254
          %381 = vmatpush1.msra.mxu0 %v253
          %382 = vmatprep.subr.mxu0 %v258
          %383 = vmatpush1.msra.mxu0 %v257
          %384 = vmatprep.subr.mxu0 %v262
          %385 = vmatpush1.msra.mxu0 %v261
          %386 = vmatprep.subr.mxu0 %v266
          %387 = vmatpush1.msra.mxu0 %v265
          %388 = vmatprep.subr.mxu0 %v270
          %389 = vmatpush1.msra.mxu0 %v269
          %390 = vmatprep.subr.mxu0 %v274
          %391 = vmatpush1.msra.mxu0 %v273
          %392 = vmatprep.subr.mxu0 %v278
          %393 = vmatpush1.msra.mxu0 %v277
          %394 = vmatprep.subr.mxu0 %v282
          %395 = vmatpush1.msra.mxu0 %v281
          %396 = vmatprep.subr.mxu0 %v286
          %397 = vmatpush1.msra.mxu0 %v285
          %398 = vmatprep.subr.mxu0 %v290
          %399 = vmatpush1.msra.mxu0 %v289
          %400 = vmatprep.subr.mxu0 %v294
          %401 = vmatpush1.msra.mxu0 %v293
          %402 = vmatprep.subr.mxu0 %v298
          %403 = vmatpush1.msra.mxu0 %v297
          %404 = vmatprep.subr.mxu0 %v302
          %405 = vmatpush1.msra.mxu0 %v301
          %406 = vmatprep.subr.mxu0 0.0
          %407 = vmatpush1.msra.mxu0 0.0
          %408 = vmatprep.subr.mxu0 0.0
          %409 = vmatpush1.msra.mxu0 0.0
          %410 = vmatprep.subr.mxu0 0.0
          %411 = vmatpush1.msra.mxu0 0.0
          %412 = vmatprep.subr.mxu0 0.0
          %413 = vmatpush1.msra.mxu0 0.0
          %414 = vmatprep.subr.mxu0 0.0
          %415 = vmatpush1.msra.mxu0 0.0
          %416 = vmatprep.subr.mxu0 0.0
          %417 = vmatpush1.msra.mxu0 0.0
          %418 = vmatprep.subr.mxu0 0.0
          %419 = vmatpush1.msra.mxu0 0.0
          %420 = vmatprep.subr.mxu0 0.0
          %421 = vmatpush1.msra.mxu0 0.0
          %422 = vmatprep.subr.mxu0 0.0
          %423 = vmatpush1.msra.mxu0 0.0
          %424 = vmatprep.subr.mxu0 0.0
          %425 = vmatpush1.msra.mxu0 0.0
          %426 = vmatprep.subr.mxu0 0.0
          %427 = vmatpush1.msra.mxu0 0.0
          %428 = vmatprep.subr.mxu0 0.0
          %429 = vmatpush1.msra.mxu0 0.0
          %430 = vmatprep.subr.mxu0 0.0
          %431 = vmatpush1.msra.mxu0 0.0
          %432 = vmatprep.subr.mxu0 0.0
          %433 = vmatpush1.msra.mxu0 0.0
          %434 = vmatprep.subr.mxu0 0.0
          %435 = vmatpush1.msra.mxu0 0.0
          %436 = vmatprep.subr.mxu0 0.0
          %437 = vmatpush1.msra.mxu0 0.0
          %438 = vmatprep.mubr.f32.mxu0 0.0
          %439 = vmatmul.mubr.f32.gmra.mrb[0].mxu0 %v238
          %v440 = vpop.f32.mrb[0].mxu0
          %v441 = vadd.f32 0.0, %v440
          %v442 = vpop.f32.mrb[0].mxu0
          %v443 = vadd.f32 0.0, %v442
          %444 = vdwg.mxu0
          %v449 = vcombine.low %v370, %v372
          %v450 = vcombine.low %v441, %v443
          %v452 = vunpack.c.l.s4 1983009808
          %v453 = vunpack.c.0.s8 %v452
          %v454 = vlaneseq
          %v455 = vshrl.u32 %v454, 7
          %v456 = vsub.s32 %v453, %v455
          %v457 = vrot.slane %v449, %v456
          %v459 = vunpack.c.l.s4 1983009808
          %v460 = vunpack.c.0.s8 %v459
          %v461 = vlaneseq
          %v462 = vshrl.u32 %v461, 7
          %v463 = vsub.s32 %v460, %v462
          %v464 = vrot.slane %v450, %v463
          %v465 = vcombine.low %v457, %v464
          %v467 = vadd.f32 %v237, %v465
          %v468 = vxor.u32 %v467, 2147483648
          %v469 = vmul.f32 %v468, 1.442695
          %v470 = vpow.pop %v469
          %v471 = vadd.f32 %v470, 1.0
          %v472 = vrcp.pop %v471
          %v473 = vmul.f32 1.0, %v472
          %v475 = vrot.slane %v467, 2
          %v477 = vxor.u32 %v475, 2147483648
          %v478 = vmul.f32 %v477, 1.442695
          %v479 = vpow.pop %v478
          %v480 = vadd.f32 %v479, 1.0
          %v481 = vrcp.pop %v480
          %v482 = vmul.f32 1.0, %v481
          %v483 = vrot.slane %v467, 4
          %v485 = vtanh.pop %v483
          %v486 = vrot.slane %v467, 6
          %v488 = vxor.u32 %v486, 2147483648
          %v489 = vmul.f32 %v488, 1.442695
          %v490 = vpow.pop %v489
          %v491 = vadd.f32 %v490, 1.0
          %v492 = vrcp.pop %v491
          %v493 = vmul.f32 1.0, %v492
          %v494 = vld [vmem:[#allocation3] sm:$0x3]
          %v495 = vmul.f32 %v482, %v494
          %v496 = vmul.f32 %v473, %v485
          %v497 = vadd.f32 %v495, %v496
          %v498 = vtanh.pop %v497
          %v499 = vmul.f32 %v493, %v498
          %500 = vst [vmem:[#allocation3] sm:$0x3] %v497
          %501 = vst [vmem:[#allocation2] sm:$0x3] %v499
          %s502 = smul.u32 %s233, 2
          %s503 = scalar_lea.vmem %s215, %s502 [#allocation5]
          %504 = vst [vmem:[%s503] sm:$0x3] %v499
        $region71: #{resnet_lstm_forward.8} parent=61 // loop_footer
          %s229 = sadd.s32 1, %s225
        $region72: #{resnet_lstm_forward.8} parent=61 // loop_footer_branch
          %224 = sbr.rel target = $region68
        $region73: #{resnet_lstm_forward.8} parent=61 // loop_exit
          _
        %s505 = sand.u32 %s73, 1
        %s506 = sand.u32 %s73, 1
        %s507 = smul.addr %s506, 16
        %s508 = scalar_lea.vmem [#allocation5], %s507
        // Predicated region
        $region74: #{resnet_lstm_forward.8} parent=61 // pred_check
          %p509 = pneg %p83
        $region75: #{resnet_lstm_forward.8} parent=61 // pred_check_branch
          %511 = sbr.rel (%p509) target = $region77
        $region76: #{resnet_lstm_forward.8} parent=61 // pred_region
          %s512 = smul.addr %s13, 2
          %s513 = scalar_lea.vmem %s2, %s512
          // Predicated region
          $region78: #{resnet_lstm_forward.8} parent=76 // pred_check
            _
          $region79: #{resnet_lstm_forward.8} parent=76 // pred_check_branch
            %515 = sbr.rel (0) target = $region81
          $region80: #{resnet_lstm_forward.8} parent=76 // pred_region
            // Predicated region
            $region82: #{resnet_lstm_forward.8} parent=80 // pred_check
              _
            $region83: #{resnet_lstm_forward.8} parent=80 // pred_check_branch
              %517 = sbr.rel target = $region85
            $region84: #{resnet_lstm_forward.8} parent=80 // pred_region
              // Predicated region
              $region97: #{resnet_lstm_forward.8} parent=84 // pred_check
                _
              $region98: #{resnet_lstm_forward.8} parent=84 // pred_check_branch
                %546 = sbr.rel (0) target = $region100
              $region99: #{resnet_lstm_forward.8} parent=84 // pred_region
                loop: start=0, step=1, limit=1
                $region101: #{resnet_lstm_forward.8} parent=99 // loop_pre_header
                  _
                $region102: #{resnet_lstm_forward.8} parent=99 // loop_header
                  %s548 = sphi 0, %s552
                  %p549 = scmp.ge.s32.totalorder %s548, 1
                  %s553 = sphi %s508, %s508
                  %s554 = sphi %s513, %s513
                $region103: #{resnet_lstm_forward.8} parent=99 // loop_header_branch
                  %551 = sbr.rel (%p549) target = $region107
                $region104: #{resnet_lstm_forward.8} parent=99 // loop_body
                  _
                $region105: #{resnet_lstm_forward.8} parent=99 // loop_footer
                  %s552 = sadd.s32 1, %s548
                $region106: #{resnet_lstm_forward.8} parent=99 // loop_footer_branch
                  %547 = sbr.rel target = $region102
                $region107: #{resnet_lstm_forward.8} parent=99 // loop_exit
                  _
                loop: start=0, step=1, limit=1
                $region108: #{resnet_lstm_forward.8} parent=99 // loop_pre_header
                  _
                $region109: #{resnet_lstm_forward.8} parent=99 // loop_header
                  %s557 = sphi 0, %s561
                  %p558 = scmp.ge.s32.totalorder %s557, 1
                  %s562 = sphi %s508, %s508
                  %s563 = sphi %s513, %s513
                $region110: #{resnet_lstm_forward.8} parent=99 // loop_header_branch
                  %560 = sbr.rel (%p558) target = $region114
                $region111: #{resnet_lstm_forward.8} parent=99 // loop_body
                  %v564 = vld [vmem:[%s562] sm:$0x3]
                  %565 = vst [vmem:[%s563] sm:$0x3] %v564
                  %v566 = vld [vmem:[%s562 + $0x2] sm:$0x3]
                  %567 = vst [vmem:[%s563 + $0x4] sm:$0x3] %v566
                  %v568 = vld [vmem:[%s562 + $0x4] sm:$0x3]
                  %569 = vst [vmem:[%s563 + $0x8] sm:$0x3] %v568
                  %v570 = vld [vmem:[%s562 + $0x6] sm:$0x3]
                  %571 = vst [vmem:[%s563 + $0xc] sm:$0x3] %v570
                  %v572 = vld [vmem:[%s562 + $0x8] sm:$0x3]
                  %573 = vst [vmem:[%s563 + $0x10] sm:$0x3] %v572
                  %v574 = vld [vmem:[%s562 + $0xa] sm:$0x3]
                  %575 = vst [vmem:[%s563 + $0x14] sm:$0x3] %v574
                  %v576 = vld [vmem:[%s562 + $0xc] sm:$0x3]
                  %577 = vst [vmem:[%s563 + $0x18] sm:$0x3] %v576
                  %v578 = vld [vmem:[%s562 + $0xe] sm:$0x3]
                  %579 = vst [vmem:[%s563 + $0x1c] sm:$0x3] %v578
                $region112: #{resnet_lstm_forward.8} parent=99 // loop_footer
                  %s561 = sadd.s32 1, %s557
                $region113: #{resnet_lstm_forward.8} parent=99 // loop_footer_branch
                  %556 = sbr.rel target = $region109
                $region114: #{resnet_lstm_forward.8} parent=99 // loop_exit
                  _
              $region100: #{resnet_lstm_forward.8} parent=84 // pred_fallthru
                _
            $region85: #{resnet_lstm_forward.8} parent=80 // pred_fallthru
              _
            // Predicated region
            $region86: #{resnet_lstm_forward.8} parent=80 // pred_check
              _
            $region87: #{resnet_lstm_forward.8} parent=80 // pred_check_branch
              %519 = sbr.rel (0) target = $region89
            $region88: #{resnet_lstm_forward.8} parent=80 // pred_region
              loop: start=0, step=1, limit=1
              $region90: #{resnet_lstm_forward.8} parent=88 // loop_pre_header
                _
              $region91: #{resnet_lstm_forward.8} parent=88 // loop_header
                %s522 = sphi 0, %s526
                %p523 = scmp.ge.s32.totalorder %s522, 1
                %s527 = sphi %s508, %s508
                %s528 = sphi %s513, %s513
              $region92: #{resnet_lstm_forward.8} parent=88 // loop_header_branch
                %525 = sbr.rel (%p523) target = $region96
              $region93: #{resnet_lstm_forward.8} parent=88 // loop_body
                %v529 = vld [vmem:[%s527] sm:$0x3]
                %530 = vst [vmem:[%s528] sm:$0x3] %v529
                %v531 = vld [vmem:[%s527 + $0x2] sm:$0x3]
                %532 = vst [vmem:[%s528 + $0x4] sm:$0x3] %v531
                %v533 = vld [vmem:[%s527 + $0x4] sm:$0x3]
                %534 = vst [vmem:[%s528 + $0x8] sm:$0x3] %v533
                %v535 = vld [vmem:[%s527 + $0x6] sm:$0x3]
                %536 = vst [vmem:[%s528 + $0xc] sm:$0x3] %v535
                %v537 = vld [vmem:[%s527 + $0x8] sm:$0x3]
                %538 = vst [vmem:[%s528 + $0x10] sm:$0x3] %v537
                %v539 = vld [vmem:[%s527 + $0xa] sm:$0x3]
                %540 = vst [vmem:[%s528 + $0x14] sm:$0x3] %v539
                %v541 = vld [vmem:[%s527 + $0xc] sm:$0x3]
                %542 = vst [vmem:[%s528 + $0x18] sm:$0x3] %v541
                %v543 = vld [vmem:[%s527 + $0xe] sm:$0x3]
                %544 = vst [vmem:[%s528 + $0x1c] sm:$0x3] %v543
              $region94: #{resnet_lstm_forward.8} parent=88 // loop_footer
                %s526 = sadd.s32 1, %s522
              $region95: #{resnet_lstm_forward.8} parent=88 // loop_footer_branch
                %521 = sbr.rel target = $region91
              $region96: #{resnet_lstm_forward.8} parent=88 // loop_exit
                _
            $region89: #{resnet_lstm_forward.8} parent=80 // pred_fallthru
              _
          $region81: #{resnet_lstm_forward.8} parent=76 // pred_fallthru
            _
          %580 = vnop
        $region77: #{resnet_lstm_forward.8} parent=61 // pred_fallthru
          _
      $region62: #{resnet_lstm_forward.8} parent=5 // pred_fallthru
        _
      %p581 = scmp.le.s32.totalorder 2, %s8
      // Predicated region
      $region115: #{resnet_lstm_forward.8} parent=5 // pred_check
        %p582 = pneg %p581
      $region116: #{resnet_lstm_forward.8} parent=5 // pred_check_branch
        %584 = sbr.rel (%p582) target = $region118
      $region117: #{resnet_lstm_forward.8} parent=5 // pred_region
        %s585 = ssub.s32 %s8, 2
        // Predicated region
        $region119: #{resnet_lstm_forward.8} parent=117 // pred_check
          %p586 = pneg %p89
        $region120: #{resnet_lstm_forward.8} parent=117 // pred_check_branch
          %588 = sbr.rel (%p586) target = $region122
        $region121: #{resnet_lstm_forward.8} parent=117 // pred_region
          %s589 = sand.u32 %s74, 1
          %s590 = sand.u32 %s74, 1
          %s591 = smul.addr %s590, 16
          %s592 = scalar_lea.vmem [#allocation5], %s591
        $region122: #{resnet_lstm_forward.8} parent=117 // pred_fallthru
          _
      $region118: #{resnet_lstm_forward.8} parent=5 // pred_fallthru
        _
    $region6: #{resnet_lstm_forward.8} parent=1 // loop_footer
      %s12 = sadd.s32 1, %s8
    $region7: #{resnet_lstm_forward.8} parent=1 // loop_footer_branch
      %7 = sbr.rel target = $region3
    $region8: #{resnet_lstm_forward.8} parent=1 // loop_exit
      _

// kernel: resnet_lstm_forward.9
$region0: #{resnet_lstm_forward.9}
  #allocation0 [shape = 'u32[]', space=smem, size = 0x4, offset = 0x4, fixed_abs, tag = 'smem constant byte address 0x4 - core index']
  #allocation1 [shape = 'u32[144,128]{1,0:T(1,128)}', space=vmem, size = 0x12000, scoped, tag = 'internal scratch']
  %s0 = inlined_call_operand.vmem [shape: f32[16,256], index: 0, kind: input, shape index: {}]
  %s1 = inlined_call_operand.vmem [shape: f32[256,1024], index: 1, kind: input, shape index: {}]
  %s2 = inlined_call_operand.vmem [shape: f32[1,1024], index: 2, kind: input, shape index: {}]
  %s3 = inlined_call_operand.vmem [shape: f32[16,1024], index: 3, kind: output, shape index: {}]
  %s4 = sld [smem:[#allocation0]]
  $region87: #{resnet_lstm_forward.9} parent=0
    _
  %s6 = ssub.s32 1, %s4
  %s7 = scalar_select 0, %s6, %s4
  $region1: #{resnet_lstm_forward.9} parent=0
    #allocation2 [shape = 'u8[1048576]{0}', space=vmem, size = 0x100000, scoped, tag = 'input window, operand 1']
    #allocation3 [shape = 'u8[65536]{0}', space=vmem, size = 0x10000, scoped, tag = 'output window, operand 0']
    loop: start=0, step=1, limit=4
    $region2: #{resnet_lstm_forward.9} parent=1 // loop_pre_header
      _
    $region3: #{resnet_lstm_forward.9} parent=1 // loop_header
      %s9 = sphi 0, %s13
      %p10 = scmp.ge.s32.totalorder %s9, 4
      %s16 = sphi 0, %s28
      %s17 = sphi 0, %s24
      %s18 = sphi 0, %s16
      %s19 = sphi 0, %s17
      %s20 = sphi 0, %s18
      %s21 = sphi 0, %s19
      %s31 = sphi 0, %s33
      %s34 = sphi 0, %s31
      %s35 = sphi 0, %s34
      %s51 = sphi 0, %s35
      %s57 = sphi 0, %s59
      %s60 = sphi 0, %s57
      %s61 = sphi 0, %s60
      %s77 = sphi 0, %s61
      %s83 = sphi 0, %s85
      %s86 = sphi 0, %s83
      %s87 = sphi 0, %s86
      %s103 = sphi 0, %s87
      %s111 = sphi 0, %s113
      %s114 = sphi 0, %s111
      %s115 = sphi 0, %s114
      %s131 = sphi 0, %s115
    $region4: #{resnet_lstm_forward.9} parent=1 // loop_header_branch
      %12 = sbr.rel (%p10) target = $region8
    $region5: #{resnet_lstm_forward.9} parent=1 // loop_body
      %s14 = ssub.s32 %s9, 1
      %s15 = ssub.s32 %s9, 2
      %s22 = sadd.s32 1, %s17
      %p23 = scmp.ge.s32.totalorder %s22, 2
      %s24 = scalar_select %p23, 0, %s22
      %s25 = sadd.s32 1, %s16
      %s26 = scalar_select %p23, %s25, %s16
      %p27 = scmp.ge.s32.totalorder %s26, 1
      %s28 = scalar_select %p27, 0, %s26
      %s29 = ssub.s32 %s16, %s28
      %p30 = scmp.eq.s32.totalorder %s29, 0
      %s32 = sadd.s32 %s31, 1
      %s33 = scalar_select %p30, %s31, %s32
      %p36 = pneg %p30
      %p37 = scmp.eq.s32.totalorder %s9, 1
      %p38 = por %p36, %p37
      %p39 = scmp.ne.s32.totalorder %s31, %s34
      %p40 = scmp.eq.s32.totalorder %s9, 0
      %p41 = por %p39, %p40
      %p42 = scmp.ne.s32.totalorder %s31, %s34
      %p43 = scmp.eq.s32.totalorder %s14, 1
      %p44 = por %p42, %p43
      %p45 = scmp.ne.s32.totalorder %s34, %s35
      %p46 = scmp.eq.s32.totalorder %s14, 0
      %p47 = por %p45, %p46
      %p48 = scmp.ne.s32.totalorder %s34, %s35
      %p49 = scmp.eq.s32.totalorder %s15, 1
      %p50 = por %p48, %p49
      %p52 = scmp.ne.s32.totalorder %s35, %s51
      %p53 = scmp.eq.s32.totalorder %s15, 0
      %p54 = por %p52, %p53
      %s55 = ssub.s32 %s17, %s24
      %p56 = scmp.eq.s32.totalorder %s55, 0
      %s58 = sadd.s32 %s57, 1
      %s59 = scalar_select %p56, %s57, %s58
      %p62 = pneg %p56
      %p63 = scmp.eq.s32.totalorder %s9, 1
      %p64 = por %p62, %p63
      %p65 = scmp.ne.s32.totalorder %s57, %s60
      %p66 = scmp.eq.s32.totalorder %s9, 0
      %p67 = por %p65, %p66
      %p68 = scmp.ne.s32.totalorder %s57, %s60
      %p69 = scmp.eq.s32.totalorder %s14, 1
      %p70 = por %p68, %p69
      %p71 = scmp.ne.s32.totalorder %s60, %s61
      %p72 = scmp.eq.s32.totalorder %s14, 0
      %p73 = por %p71, %p72
      %p74 = scmp.ne.s32.totalorder %s60, %s61
      %p75 = scmp.eq.s32.totalorder %s15, 1
      %p76 = por %p74, %p75
      %p78 = scmp.ne.s32.totalorder %s61, %s77
      %p79 = scmp.eq.s32.totalorder %s15, 0
      %p80 = por %p78, %p79
      %s81 = ssub.s32 %s17, %s24
      %p82 = scmp.eq.s32.totalorder %s81, 0
      %s84 = sadd.s32 %s83, 1
      %s85 = scalar_select %p82, %s83, %s84
      %p88 = pneg %p82
      %p89 = scmp.eq.s32.totalorder %s9, 1
      %p90 = por %p88, %p89
      %p91 = scmp.ne.s32.totalorder %s83, %s86
      %p92 = scmp.eq.s32.totalorder %s9, 0
      %p93 = por %p91, %p92
      %p94 = scmp.ne.s32.totalorder %s83, %s86
      %p95 = scmp.eq.s32.totalorder %s14, 1
      %p96 = por %p94, %p95
      %p97 = scmp.ne.s32.totalorder %s86, %s87
      %p98 = scmp.eq.s32.totalorder %s14, 0
      %p99 = por %p97, %p98
      %p100 = scmp.ne.s32.totalorder %s86, %s87
      %p101 = scmp.eq.s32.totalorder %s15, 1
      %p102 = por %p100, %p101
      %p104 = scmp.ne.s32.totalorder %s87, %s103
      %p105 = scmp.eq.s32.totalorder %s15, 0
      %p106 = por %p104, %p105
      %s107 = ssub.s32 %s16, %s28
      %s108 = ssub.s32 %s17, %s24
      %s109 = sor.u32 %s107, %s108
      %p110 = scmp.eq.s32.totalorder %s109, 0
      %s112 = sadd.s32 %s111, 1
      %s113 = scalar_select %p110, %s111, %s112
      %p116 = pneg %p110
      %p117 = scmp.eq.s32.totalorder %s9, 1
      %p118 = por %p116, %p117
      %p119 = scmp.ne.s32.totalorder %s111, %s114
      %p120 = scmp.eq.s32.totalorder %s9, 0
      %p121 = por %p119, %p120
      %p122 = scmp.ne.s32.totalorder %s111, %s114
      %p123 = scmp.eq.s32.totalorder %s14, 1
      %p124 = por %p122, %p123
      %p125 = scmp.ne.s32.totalorder %s114, %s115
      %p126 = scmp.eq.s32.totalorder %s14, 0
      %p127 = por %p125, %p126
      %p128 = scmp.ne.s32.totalorder %s114, %s115
      %p129 = scmp.eq.s32.totalorder %s15, 1
      %p130 = por %p128, %p129
      %p132 = scmp.ne.s32.totalorder %s115, %s131
      %p133 = scmp.eq.s32.totalorder %s15, 0
      %p134 = por %p132, %p133
      %p135 = scmp.le.s32.totalorder 1, %s9
      %p136 = scmp.lt.s32.totalorder %s9, 3
      %p137 = pnand %p135, %p136
      %p138 = pneg %p137
      // Predicated region
      $region9: #{resnet_lstm_forward.9} parent=5 // pred_check
        _
      $region10: #{resnet_lstm_forward.9} parent=5 // pred_check_branch
        %140 = sbr.rel (%p137) target = $region12
      $region11: #{resnet_lstm_forward.9} parent=5 // pred_region
        %s141 = ssub.s32 %s9, 1
        // Predicated region
        $region13: #{resnet_lstm_forward.9} parent=11 // pred_check
          %p142 = pneg %p47
        $region14: #{resnet_lstm_forward.9} parent=11 // pred_check_branch
          %144 = sbr.rel (%p142) target = $region16
        $region15: #{resnet_lstm_forward.9} parent=11 // pred_region
          %s145 = smul.u32 2, %s18
          %p146 = scmp.lt.s32.totalorder %s145, 1
          %s147 = scalar_select %p146, %s145, 1
          %s148 = smul.addr %s147, 2
          %s149 = smul.addr %s148, 8
          %s150 = scalar_lea.vmem %s0, %s149
          %s151 = smul.u32 2, %s18
        $region16: #{resnet_lstm_forward.9} parent=11 // pred_fallthru
          _
      $region12: #{resnet_lstm_forward.9} parent=5 // pred_fallthru
        _
      %p152 = scmp.lt.s32.totalorder %s9, 2
      // Predicated region
      $region17: #{resnet_lstm_forward.9} parent=5 // pred_check
        %p153 = pneg %p152
      $region18: #{resnet_lstm_forward.9} parent=5 // pred_check_branch
        %155 = sbr.rel (%p153) target = $region20
      $region19: #{resnet_lstm_forward.9} parent=5 // pred_region
        // Predicated region
        $region21: #{resnet_lstm_forward.9} parent=19 // pred_check
          %p156 = pneg %p67
        $region22: #{resnet_lstm_forward.9} parent=19 // pred_check_branch
          %158 = sbr.rel (%p156) target = $region24
        $region23: #{resnet_lstm_forward.9} parent=19 // pred_region
          %s159 = sand.u32 %s57, 1
          %s160 = sand.u32 %s57, 1
          %s161 = smul.addr %s160, 1024
          %s162 = scalar_lea.vmem [#allocation2], %s161
          %s163 = smul.u32 4, %s17
          %s164 = smul.addr %s163, 8
          %s165 = scalar_lea.vmem %s1, %s164
          // Predicated region
          $region25: #{resnet_lstm_forward.9} parent=23 // pred_check
            _
          $region26: #{resnet_lstm_forward.9} parent=23 // pred_check_branch
            %167 = sbr.rel (0) target = $region28
          $region27: #{resnet_lstm_forward.9} parent=23 // pred_region
            // Predicated region
            $region29: #{resnet_lstm_forward.9} parent=27 // pred_check
              _
            $region30: #{resnet_lstm_forward.9} parent=27 // pred_check_branch
              %169 = sbr.rel (0) target = $region32
            $region31: #{resnet_lstm_forward.9} parent=27 // pred_region
              loop: start=0, step=1, limit=1
              $region33: #{resnet_lstm_forward.9} parent=31 // loop_pre_header
                _
              $region34: #{resnet_lstm_forward.9} parent=31 // loop_header
                %s171 = sphi 0, %s175
                %p172 = scmp.ge.s32.totalorder %s171, 1
                %s176 = sphi %s165, %s165
                %s177 = sphi %s162, %s162
              $region35: #{resnet_lstm_forward.9} parent=31 // loop_header_branch
                %174 = sbr.rel (%p172) target = $region39
              $region36: #{resnet_lstm_forward.9} parent=31 // loop_body
                %v178 = vld [vmem:[%s176] sm:$0xff]
                %179 = vst [vmem:[%s177] sm:$0xff] %v178
                %v180 = vld [vmem:[%s176 + $0x8] sm:$0xff]
                %181 = vst [vmem:[%s177 + $0x8] sm:$0xff] %v180
                %v182 = vld [vmem:[%s176 + $0x10] sm:$0xff]
                %183 = vst [vmem:[%s177 + $0x10] sm:$0xff] %v182
                %v184 = vld [vmem:[%s176 + $0x18] sm:$0xff]
                %185 = vst [vmem:[%s177 + $0x18] sm:$0xff] %v184
                %v186 = vld [vmem:[%s176 + $0x40] sm:$0xff]
                %187 = vst [vmem:[%s177 + $0x20] sm:$0xff] %v186
                %v188 = vld [vmem:[%s176 + $0x48] sm:$0xff]
                %189 = vst [vmem:[%s177 + $0x28] sm:$0xff] %v188
                %v190 = vld [vmem:[%s176 + $0x50] sm:$0xff]
                %191 = vst [vmem:[%s177 + $0x30] sm:$0xff] %v190
                %v192 = vld [vmem:[%s176 + $0x58] sm:$0xff]
                %193 = vst [vmem:[%s177 + $0x38] sm:$0xff] %v192
                %v194 = vld [vmem:[%s176 + $0x80] sm:$0xff]
                %195 = vst [vmem:[%s177 + $0x40] sm:$0xff] %v194
                %v196 = vld [vmem:[%s176 + $0x88] sm:$0xff]
                %197 = vst [vmem:[%s177 + $0x48] sm:$0xff] %v196
                %v198 = vld [vmem:[%s176 + $0x90] sm:$0xff]
                %199 = vst [vmem:[%s177 + $0x50] sm:$0xff] %v198
                %v200 = vld [vmem:[%s176 + $0x98] sm:$0xff]
                %201 = vst [vmem:[%s177 + $0x58] sm:$0xff] %v200
                %v202 = vld [vmem:[%s176 + $0xc0] sm:$0xff]
                %203 = vst [vmem:[%s177 + $0x60] sm:$0xff] %v202
                %v204 = vld [vmem:[%s176 + $0xc8] sm:$0xff]
                %205 = vst [vmem:[%s177 + $0x68] sm:$0xff] %v204
                %v206 = vld [vmem:[%s176 + $0xd0] sm:$0xff]
                %207 = vst [vmem:[%s177 + $0x70] sm:$0xff] %v206
                %v208 = vld [vmem:[%s176 + $0xd8] sm:$0xff]
                %209 = vst [vmem:[%s177 + $0x78] sm:$0xff] %v208
                %v210 = vld [vmem:[%s176 + $0x100] sm:$0xff]
                %211 = vst [vmem:[%s177 + $0x80] sm:$0xff] %v210
                %v212 = vld [vmem:[%s176 + $0x108] sm:$0xff]
                %213 = vst [vmem:[%s177 + $0x88] sm:$0xff] %v212
                %v214 = vld [vmem:[%s176 + $0x110] sm:$0xff]
                %215 = vst [vmem:[%s177 + $0x90] sm:$0xff] %v214
                %v216 = vld [vmem:[%s176 + $0x118] sm:$0xff]
                %217 = vst [vmem:[%s177 + $0x98] sm:$0xff] %v216
                %v218 = vld [vmem:[%s176 + $0x140] sm:$0xff]
                %219 = vst [vmem:[%s177 + $0xa0] sm:$0xff] %v218
                %v220 = vld [vmem:[%s176 + $0x148] sm:$0xff]
                %221 = vst [vmem:[%s177 + $0xa8] sm:$0xff] %v220
                %v222 = vld [vmem:[%s176 + $0x150] sm:$0xff]
                %223 = vst [vmem:[%s177 + $0xb0] sm:$0xff] %v222
                %v224 = vld [vmem:[%s176 + $0x158] sm:$0xff]
                %225 = vst [vmem:[%s177 + $0xb8] sm:$0xff] %v224
                %v226 = vld [vmem:[%s176 + $0x180] sm:$0xff]
                %227 = vst [vmem:[%s177 + $0xc0] sm:$0xff] %v226
                %v228 = vld [vmem:[%s176 + $0x188] sm:$0xff]
                %229 = vst [vmem:[%s177 + $0xc8] sm:$0xff] %v228
                %v230 = vld [vmem:[%s176 + $0x190] sm:$0xff]
                %231 = vst [vmem:[%s177 + $0xd0] sm:$0xff] %v230
                %v232 = vld [vmem:[%s176 + $0x198] sm:$0xff]
                %233 = vst [vmem:[%s177 + $0xd8] sm:$0xff] %v232
                %v234 = vld [vmem:[%s176 + $0x1c0] sm:$0xff]
                %235 = vst [vmem:[%s177 + $0xe0] sm:$0xff] %v234
                %v236 = vld [vmem:[%s176 + $0x1c8] sm:$0xff]
                %237 = vst [vmem:[%s177 + $0xe8] sm:$0xff] %v236
                %v238 = vld [vmem:[%s176 + $0x1d0] sm:$0xff]
                %239 = vst [vmem:[%s177 + $0xf0] sm:$0xff] %v238
                %v240 = vld [vmem:[%s176 + $0x1d8] sm:$0xff]
                %241 = vst [vmem:[%s177 + $0xf8] sm:$0xff] %v240
                %v242 = vld [vmem:[%s176 + $0x200] sm:$0xff]
                %243 = vst [vmem:[%s177 + $0x100] sm:$0xff] %v242
                %v244 = vld [vmem:[%s176 + $0x208] sm:$0xff]
                %245 = vst [vmem:[%s177 + $0x108] sm:$0xff] %v244
                %v246 = vld [vmem:[%s176 + $0x210] sm:$0xff]
                %247 = vst [vmem:[%s177 + $0x110] sm:$0xff] %v246
                %v248 = vld [vmem:[%s176 + $0x218] sm:$0xff]
                %249 = vst [vmem:[%s177 + $0x118] sm:$0xff] %v248
                %v250 = vld [vmem:[%s176 + $0x240] sm:$0xff]
                %251 = vst [vmem:[%s177 + $0x120] sm:$0xff] %v250
                %v252 = vld [vmem:[%s176 + $0x248] sm:$0xff]
                %253 = vst [vmem:[%s177 + $0x128] sm:$0xff] %v252
                %v254 = vld [vmem:[%s176 + $0x250] sm:$0xff]
                %255 = vst [vmem:[%s177 + $0x130] sm:$0xff] %v254
                %v256 = vld [vmem:[%s176 + $0x258] sm:$0xff]
                %257 = vst [vmem:[%s177 + $0x138] sm:$0xff] %v256
                %v258 = vld [vmem:[%s176 + $0x280] sm:$0xff]
                %259 = vst [vmem:[%s177 + $0x140] sm:$0xff] %v258
                %v260 = vld [vmem:[%s176 + $0x288] sm:$0xff]
                %261 = vst [vmem:[%s177 + $0x148] sm:$0xff] %v260
                %v262 = vld [vmem:[%s176 + $0x290] sm:$0xff]
                %263 = vst [vmem:[%s177 + $0x150] sm:$0xff] %v262
                %v264 = vld [vmem:[%s176 + $0x298] sm:$0xff]
                %265 = vst [vmem:[%s177 + $0x158] sm:$0xff] %v264
                %v266 = vld [vmem:[%s176 + $0x2c0] sm:$0xff]
                %267 = vst [vmem:[%s177 + $0x160] sm:$0xff] %v266
                %v268 = vld [vmem:[%s176 + $0x2c8] sm:$0xff]
                %269 = vst [vmem:[%s177 + $0x168] sm:$0xff] %v268
                %v270 = vld [vmem:[%s176 + $0x2d0] sm:$0xff]
                %271 = vst [vmem:[%s177 + $0x170] sm:$0xff] %v270
                %v272 = vld [vmem:[%s176 + $0x2d8] sm:$0xff]
                %273 = vst [vmem:[%s177 + $0x178] sm:$0xff] %v272
                %v274 = vld [vmem:[%s176 + $0x300] sm:$0xff]
                %275 = vst [vmem:[%s177 + $0x180] sm:$0xff] %v274
                %v276 = vld [vmem:[%s176 + $0x308] sm:$0xff]
                %277 = vst [vmem:[%s177 + $0x188] sm:$0xff] %v276
                %v278 = vld [vmem:[%s176 + $0x310] sm:$0xff]
                %279 = vst [vmem:[%s177 + $0x190] sm:$0xff] %v278
                %v280 = vld [vmem:[%s176 + $0x318] sm:$0xff]
                %281 = vst [vmem:[%s177 + $0x198] sm:$0xff] %v280
                %v282 = vld [vmem:[%s176 + $0x340] sm:$0xff]
                %283 = vst [vmem:[%s177 + $0x1a0] sm:$0xff] %v282
                %v284 = vld [vmem:[%s176 + $0x348] sm:$0xff]
                %285 = vst [vmem:[%s177 + $0x1a8] sm:$0xff] %v284
                %v286 = vld [vmem:[%s176 + $0x350] sm:$0xff]
                %287 = vst [vmem:[%s177 + $0x1b0] sm:$0xff] %v286
                %v288 = vld [vmem:[%s176 + $0x358] sm:$0xff]
                %289 = vst [vmem:[%s177 + $0x1b8] sm:$0xff] %v288
                %v290 = vld [vmem:[%s176 + $0x380] sm:$0xff]
                %291 = vst [vmem:[%s177 + $0x1c0] sm:$0xff] %v290
                %v292 = vld [vmem:[%s176 + $0x388] sm:$0xff]
                %293 = vst [vmem:[%s177 + $0x1c8] sm:$0xff] %v292
                %v294 = vld [vmem:[%s176 + $0x390] sm:$0xff]
                %295 = vst [vmem:[%s177 + $0x1d0] sm:$0xff] %v294
                %v296 = vld [vmem:[%s176 + $0x398] sm:$0xff]
                %297 = vst [vmem:[%s177 + $0x1d8] sm:$0xff] %v296
                %v298 = vld [vmem:[%s176 + $0x3c0] sm:$0xff]
                %299 = vst [vmem:[%s177 + $0x1e0] sm:$0xff] %v298
                %v300 = vld [vmem:[%s176 + $0x3c8] sm:$0xff]
                %301 = vst [vmem:[%s177 + $0x1e8] sm:$0xff] %v300
                %v302 = vld [vmem:[%s176 + $0x3d0] sm:$0xff]
                %303 = vst [vmem:[%s177 + $0x1f0] sm:$0xff] %v302
                %v304 = vld [vmem:[%s176 + $0x3d8] sm:$0xff]
                %305 = vst [vmem:[%s177 + $0x1f8] sm:$0xff] %v304
                %v306 = vld [vmem:[%s176 + $0x400] sm:$0xff]
                %307 = vst [vmem:[%s177 + $0x200] sm:$0xff] %v306
                %v308 = vld [vmem:[%s176 + $0x408] sm:$0xff]
                %309 = vst [vmem:[%s177 + $0x208] sm:$0xff] %v308
                %v310 = vld [vmem:[%s176 + $0x410] sm:$0xff]
                %311 = vst [vmem:[%s177 + $0x210] sm:$0xff] %v310
                %v312 = vld [vmem:[%s176 + $0x418] sm:$0xff]
                %313 = vst [vmem:[%s177 + $0x218] sm:$0xff] %v312
                %v314 = vld [vmem:[%s176 + $0x440] sm:$0xff]
                %315 = vst [vmem:[%s177 + $0x220] sm:$0xff] %v314
                %v316 = vld [vmem:[%s176 + $0x448] sm:$0xff]
                %317 = vst [vmem:[%s177 + $0x228] sm:$0xff] %v316
                %v318 = vld [vmem:[%s176 + $0x450] sm:$0xff]
                %319 = vst [vmem:[%s177 + $0x230] sm:$0xff] %v318
                %v320 = vld [vmem:[%s176 + $0x458] sm:$0xff]
                %321 = vst [vmem:[%s177 + $0x238] sm:$0xff] %v320
                %v322 = vld [vmem:[%s176 + $0x480] sm:$0xff]
                %323 = vst [vmem:[%s177 + $0x240] sm:$0xff] %v322
                %v324 = vld [vmem:[%s176 + $0x488] sm:$0xff]
                %325 = vst [vmem:[%s177 + $0x248] sm:$0xff] %v324
                %v326 = vld [vmem:[%s176 + $0x490] sm:$0xff]
                %327 = vst [vmem:[%s177 + $0x250] sm:$0xff] %v326
                %v328 = vld [vmem:[%s176 + $0x498] sm:$0xff]
                %329 = vst [vmem:[%s177 + $0x258] sm:$0xff] %v328
                %v330 = vld [vmem:[%s176 + $0x4c0] sm:$0xff]
                %331 = vst [vmem:[%s177 + $0x260] sm:$0xff] %v330
                %v332 = vld [vmem:[%s176 + $0x4c8] sm:$0xff]
                %333 = vst [vmem:[%s177 + $0x268] sm:$0xff] %v332
                %v334 = vld [vmem:[%s176 + $0x4d0] sm:$0xff]
                %335 = vst [vmem:[%s177 + $0x270] sm:$0xff] %v334
                %v336 = vld [vmem:[%s176 + $0x4d8] sm:$0xff]
                %337 = vst [vmem:[%s177 + $0x278] sm:$0xff] %v336
                %v338 = vld [vmem:[%s176 + $0x500] sm:$0xff]
                %339 = vst [vmem:[%s177 + $0x280] sm:$0xff] %v338
                %v340 = vld [vmem:[%s176 + $0x508] sm:$0xff]
                %341 = vst [vmem:[%s177 + $0x288] sm:$0xff] %v340
                %v342 = vld [vmem:[%s176 + $0x510] sm:$0xff]
                %343 = vst [vmem:[%s177 + $0x290] sm:$0xff] %v342
                %v344 = vld [vmem:[%s176 + $0x518] sm:$0xff]
                %345 = vst [vmem:[%s177 + $0x298] sm:$0xff] %v344
                %v346 = vld [vmem:[%s176 + $0x540] sm:$0xff]
                %347 = vst [vmem:[%s177 + $0x2a0] sm:$0xff] %v346
                %v348 = vld [vmem:[%s176 + $0x548] sm:$0xff]
                %349 = vst [vmem:[%s177 + $0x2a8] sm:$0xff] %v348
                %v350 = vld [vmem:[%s176 + $0x550] sm:$0xff]
                %351 = vst [vmem:[%s177 + $0x2b0] sm:$0xff] %v350
                %v352 = vld [vmem:[%s176 + $0x558] sm:$0xff]
                %353 = vst [vmem:[%s177 + $0x2b8] sm:$0xff] %v352
                %v354 = vld [vmem:[%s176 + $0x580] sm:$0xff]
                %355 = vst [vmem:[%s177 + $0x2c0] sm:$0xff] %v354
                %v356 = vld [vmem:[%s176 + $0x588] sm:$0xff]
                %357 = vst [vmem:[%s177 + $0x2c8] sm:$0xff] %v356
                %v358 = vld [vmem:[%s176 + $0x590] sm:$0xff]
                %359 = vst [vmem:[%s177 + $0x2d0] sm:$0xff] %v358
                %v360 = vld [vmem:[%s176 + $0x598] sm:$0xff]
                %361 = vst [vmem:[%s177 + $0x2d8] sm:$0xff] %v360
                %v362 = vld [vmem:[%s176 + $0x5c0] sm:$0xff]
                %363 = vst [vmem:[%s177 + $0x2e0] sm:$0xff] %v362
                %v364 = vld [vmem:[%s176 + $0x5c8] sm:$0xff]
                %365 = vst [vmem:[%s177 + $0x2e8] sm:$0xff] %v364
                %v366 = vld [vmem:[%s176 + $0x5d0] sm:$0xff]
                %367 = vst [vmem:[%s177 + $0x2f0] sm:$0xff] %v366
                %v368 = vld [vmem:[%s176 + $0x5d8] sm:$0xff]
                %369 = vst [vmem:[%s177 + $0x2f8] sm:$0xff] %v368
                %v370 = vld [vmem:[%s176 + $0x600] sm:$0xff]
                %371 = vst [vmem:[%s177 + $0x300] sm:$0xff] %v370
                %v372 = vld [vmem:[%s176 + $0x608] sm:$0xff]
                %373 = vst [vmem:[%s177 + $0x308] sm:$0xff] %v372
                %v374 = vld [vmem:[%s176 + $0x610] sm:$0xff]
                %375 = vst [vmem:[%s177 + $0x310] sm:$0xff] %v374
                %v376 = vld [vmem:[%s176 + $0x618] sm:$0xff]
                %377 = vst [vmem:[%s177 + $0x318] sm:$0xff] %v376
                %v378 = vld [vmem:[%s176 + $0x640] sm:$0xff]
                %379 = vst [vmem:[%s177 + $0x320] sm:$0xff] %v378
                %v380 = vld [vmem:[%s176 + $0x648] sm:$0xff]
                %381 = vst [vmem:[%s177 + $0x328] sm:$0xff] %v380
                %v382 = vld [vmem:[%s176 + $0x650] sm:$0xff]
                %383 = vst [vmem:[%s177 + $0x330] sm:$0xff] %v382
                %v384 = vld [vmem:[%s176 + $0x658] sm:$0xff]
                %385 = vst [vmem:[%s177 + $0x338] sm:$0xff] %v384
                %v386 = vld [vmem:[%s176 + $0x680] sm:$0xff]
                %387 = vst [vmem:[%s177 + $0x340] sm:$0xff] %v386
                %v388 = vld [vmem:[%s176 + $0x688] sm:$0xff]
                %389 = vst [vmem:[%s177 + $0x348] sm:$0xff] %v388
                %v390 = vld [vmem:[%s176 + $0x690] sm:$0xff]
                %391 = vst [vmem:[%s177 + $0x350] sm:$0xff] %v390
                %v392 = vld [vmem:[%s176 + $0x698] sm:$0xff]
                %393 = vst [vmem:[%s177 + $0x358] sm:$0xff] %v392
                %v394 = vld [vmem:[%s176 + $0x6c0] sm:$0xff]
                %395 = vst [vmem:[%s177 + $0x360] sm:$0xff] %v394
                %v396 = vld [vmem:[%s176 + $0x6c8] sm:$0xff]
                %397 = vst [vmem:[%s177 + $0x368] sm:$0xff] %v396
                %v398 = vld [vmem:[%s176 + $0x6d0] sm:$0xff]
                %399 = vst [vmem:[%s177 + $0x370] sm:$0xff] %v398
                %v400 = vld [vmem:[%s176 + $0x6d8] sm:$0xff]
                %401 = vst [vmem:[%s177 + $0x378] sm:$0xff] %v400
                %v402 = vld [vmem:[%s176 + $0x700] sm:$0xff]
                %403 = vst [vmem:[%s177 + $0x380] sm:$0xff] %v402
                %v404 = vld [vmem:[%s176 + $0x708] sm:$0xff]
                %405 = vst [vmem:[%s177 + $0x388] sm:$0xff] %v404
                %v406 = vld [vmem:[%s176 + $0x710] sm:$0xff]
                %407 = vst [vmem:[%s177 + $0x390] sm:$0xff] %v406
                %v408 = vld [vmem:[%s176 + $0x718] sm:$0xff]
                %409 = vst [vmem:[%s177 + $0x398] sm:$0xff] %v408
                %v410 = vld [vmem:[%s176 + $0x740] sm:$0xff]
                %411 = vst [vmem:[%s177 + $0x3a0] sm:$0xff] %v410
                %v412 = vld [vmem:[%s176 + $0x748] sm:$0xff]
                %413 = vst [vmem:[%s177 + $0x3a8] sm:$0xff] %v412
                %v414 = vld [vmem:[%s176 + $0x750] sm:$0xff]
                %415 = vst [vmem:[%s177 + $0x3b0] sm:$0xff] %v414
                %v416 = vld [vmem:[%s176 + $0x758] sm:$0xff]
                %417 = vst [vmem:[%s177 + $0x3b8] sm:$0xff] %v416
                %v418 = vld [vmem:[%s176 + $0x780] sm:$0xff]
                %419 = vst [vmem:[%s177 + $0x3c0] sm:$0xff] %v418
                %v420 = vld [vmem:[%s176 + $0x788] sm:$0xff]
                %421 = vst [vmem:[%s177 + $0x3c8] sm:$0xff] %v420
                %v422 = vld [vmem:[%s176 + $0x790] sm:$0xff]
                %423 = vst [vmem:[%s177 + $0x3d0] sm:$0xff] %v422
                %v424 = vld [vmem:[%s176 + $0x798] sm:$0xff]
                %425 = vst [vmem:[%s177 + $0x3d8] sm:$0xff] %v424
                %v426 = vld [vmem:[%s176 + $0x7c0] sm:$0xff]
                %427 = vst [vmem:[%s177 + $0x3e0] sm:$0xff] %v426
                %v428 = vld [vmem:[%s176 + $0x7c8] sm:$0xff]
                %429 = vst [vmem:[%s177 + $0x3e8] sm:$0xff] %v428
                %v430 = vld [vmem:[%s176 + $0x7d0] sm:$0xff]
                %431 = vst [vmem:[%s177 + $0x3f0] sm:$0xff] %v430
                %v432 = vld [vmem:[%s176 + $0x7d8] sm:$0xff]
                %433 = vst [vmem:[%s177 + $0x3f8] sm:$0xff] %v432
              $region37: #{resnet_lstm_forward.9} parent=31 // loop_footer
                %s175 = sadd.s32 1, %s171
              $region38: #{resnet_lstm_forward.9} parent=31 // loop_footer_branch
                %170 = sbr.rel target = $region34
              $region39: #{resnet_lstm_forward.9} parent=31 // loop_exit
                _
            $region32: #{resnet_lstm_forward.9} parent=27 // pred_fallthru
              _
            // Predicated region
            $region40: #{resnet_lstm_forward.9} parent=27 // pred_check
              _
            $region41: #{resnet_lstm_forward.9} parent=27 // pred_check_branch
              %435 = sbr.rel target = $region43
            $region42: #{resnet_lstm_forward.9} parent=27 // pred_region
              _
            $region43: #{resnet_lstm_forward.9} parent=27 // pred_fallthru
              _
          $region28: #{resnet_lstm_forward.9} parent=23 // pred_fallthru
            _
          %436 = vnop
        $region24: #{resnet_lstm_forward.9} parent=19 // pred_fallthru
          _
        // Predicated region
        $region44: #{resnet_lstm_forward.9} parent=19 // pred_check
          %p437 = pneg %p93
        $region45: #{resnet_lstm_forward.9} parent=19 // pred_check_branch
          %439 = sbr.rel (%p437) target = $region47
        $region46: #{resnet_lstm_forward.9} parent=19 // pred_region
          %s440 = smul.u32 4, %s17
          %p441 = scmp.lt.s32.totalorder %s440, 7
          %s442 = scalar_select %p441, %s440, 7
          %s443 = scalar_lea.vmem %s2, %s442
          %s444 = smul.u32 4, %s17
        $region47: #{resnet_lstm_forward.9} parent=19 // pred_fallthru
          _
      $region20: #{resnet_lstm_forward.9} parent=5 // pred_fallthru
        _
      %p445 = scmp.le.s32.totalorder 1, %s9
      %p446 = scmp.lt.s32.totalorder %s9, 3
      %p447 = pnand %p445, %p446
      %p448 = pneg %p447
      // Predicated region
      $region48: #{resnet_lstm_forward.9} parent=5 // pred_check
        _
      $region49: #{resnet_lstm_forward.9} parent=5 // pred_check_branch
        %450 = sbr.rel (%p447) target = $region51
      $region50: #{resnet_lstm_forward.9} parent=5 // pred_region
        %s451 = ssub.s32 %s9, 1
        %s452 = sand.u32 %s60, 1
        %s453 = sand.u32 %s60, 1
        %s454 = smul.addr %s453, 1024
        %s455 = scalar_lea.vmem [#allocation2], %s454
        // Predicated region
        $region52: #{resnet_lstm_forward.9} parent=50 // pred_check
          %p456 = pneg %p73
        $region53: #{resnet_lstm_forward.9} parent=50 // pred_check_branch
          %458 = sbr.rel (%p456) target = $region55
        $region54: #{resnet_lstm_forward.9} parent=50 // pred_region
          _
        $region55: #{resnet_lstm_forward.9} parent=50 // pred_fallthru
          _
        %s459 = smul.u32 2, %s18
        %p460 = scmp.lt.s32.totalorder %s459, 1
        %s461 = scalar_select %p460, %s459, 1
        %s462 = smul.addr %s461, 2
        %s463 = smul.addr %s462, 8
        %s464 = scalar_lea.vmem %s0, %s463
        %p465 = pneg %p47
        %p466 = pneg %p44
        %s467 = sand.u32 %s60, 1
        %s468 = sand.u32 %s60, 1
        %s469 = smul.addr %s468, 1024
        %s470 = scalar_lea.vmem [#allocation2], %s469
        %p471 = pneg %p73
        %p472 = pneg %p70
        %s473 = smul.u32 4, %s19
        %p474 = scmp.lt.s32.totalorder %s473, 7
        %s475 = scalar_select %p474, %s473, 7
        %s476 = scalar_lea.vmem %s2, %s475
        %p477 = pneg %p99
        %p478 = pneg %p96
        %p479 = pneg %p127
        %p480 = pneg %p124
        %s481 = sand.u32 %s114, 1
        %s482 = sand.u32 %s114, 1
        %s483 = smul.addr %s482, 64
        %s484 = scalar_lea.vmem [#allocation3], %s483
        %s485 = smul.u32 2, %s18
        %p486 = scmp.lt.s32.totalorder %s485, 1
        %s487 = scalar_select %p486, %s485, 1
        %s488 = smul.addr %s487, 2
        %s489 = smul.addr %s488, 8
        %s490 = scalar_lea.vmem %s0, %s489
        %s491 = smul.u32 2, %s18
        %s492 = smul.u32 4, %s19
        %s493 = smul.u32 4, %s19
        %p494 = scmp.lt.s32.totalorder %s493, 7
        %s495 = scalar_select %p494, %s493, 7
        %s496 = scalar_lea.vmem %s2, %s495
        %s497 = smul.u32 4, %s19
        %s498 = smul.u32 2, %s18
        %s499 = smul.u32 4, %s19
        %v500 = vld [vmem:[%s490] sm:$0xff]
        %v501 = vld [vmem:[%s490 + $0x8] sm:$0xff]
        %v502 = vld [vmem:[%s490 + $0x10] sm:$0xff]
        %v503 = vld [vmem:[%s490 + $0x18] sm:$0xff]
        %v504 = vld [vmem:[%s455] sm:$0xff]
        %v505 = vld [vmem:[%s455 + $0x8] sm:$0xff]
        %v506 = vld [vmem:[%s455 + $0x10] sm:$0xff]
        %v507 = vld [vmem:[%s455 + $0x18] sm:$0xff]
        %v508 = vld [vmem:[%s455 + $0x20] sm:$0xff]
        %v509 = vld [vmem:[%s455 + $0x28] sm:$0xff]
        %v510 = vld [vmem:[%s455 + $0x30] sm:$0xff]
        %v511 = vld [vmem:[%s455 + $0x38] sm:$0xff]
        %v512 = vld [vmem:[%s455 + $0x40] sm:$0xff]
        %v513 = vld [vmem:[%s455 + $0x48] sm:$0xff]
        %v514 = vld [vmem:[%s455 + $0x50] sm:$0xff]
        %v515 = vld [vmem:[%s455 + $0x58] sm:$0xff]
        %v516 = vld [vmem:[%s455 + $0x60] sm:$0xff]
        %v517 = vld [vmem:[%s455 + $0x68] sm:$0xff]
        %v518 = vld [vmem:[%s455 + $0x70] sm:$0xff]
        %v519 = vld [vmem:[%s455 + $0x78] sm:$0xff]
        %v520 = vld [vmem:[%s455 + $0x80] sm:$0xff]
        %v521 = vld [vmem:[%s455 + $0x88] sm:$0xff]
        %v522 = vld [vmem:[%s455 + $0x90] sm:$0xff]
        %v523 = vld [vmem:[%s455 + $0x98] sm:$0xff]
        %v524 = vld [vmem:[%s455 + $0xa0] sm:$0xff]
        %v525 = vld [vmem:[%s455 + $0xa8] sm:$0xff]
        %v526 = vld [vmem:[%s455 + $0xb0] sm:$0xff]
        %v527 = vld [vmem:[%s455 + $0xb8] sm:$0xff]
        %v528 = vld [vmem:[%s455 + $0xc0] sm:$0xff]
        %v529 = vld [vmem:[%s455 + $0xc8] sm:$0xff]
        %v530 = vld [vmem:[%s455 + $0xd0] sm:$0xff]
        %v531 = vld [vmem:[%s455 + $0xd8] sm:$0xff]
        %v532 = vld [vmem:[%s455 + $0xe0] sm:$0xff]
        %v533 = vld [vmem:[%s455 + $0xe8] sm:$0xff]
        %v534 = vld [vmem:[%s455 + $0xf0] sm:$0xff]
        %v535 = vld [vmem:[%s455 + $0xf8] sm:$0xff]
        %v536 = vld [vmem:[%s455 + $0x100] sm:$0xff]
        %v537 = vld [vmem:[%s455 + $0x108] sm:$0xff]
        %v538 = vld [vmem:[%s455 + $0x110] sm:$0xff]
        %v539 = vld [vmem:[%s455 + $0x118] sm:$0xff]
        %v540 = vld [vmem:[%s455 + $0x120] sm:$0xff]
        %v541 = vld [vmem:[%s455 + $0x128] sm:$0xff]
        %v542 = vld [vmem:[%s455 + $0x130] sm:$0xff]
        %v543 = vld [vmem:[%s455 + $0x138] sm:$0xff]
        %v544 = vld [vmem:[%s455 + $0x140] sm:$0xff]
        %v545 = vld [vmem:[%s455 + $0x148] sm:$0xff]
        %v546 = vld [vmem:[%s455 + $0x150] sm:$0xff]
        %v547 = vld [vmem:[%s455 + $0x158] sm:$0xff]
        %v548 = vld [vmem:[%s455 + $0x160] sm:$0xff]
        %v549 = vld [vmem:[%s455 + $0x168] sm:$0xff]
        %v550 = vld [vmem:[%s455 + $0x170] sm:$0xff]
        %v551 = vld [vmem:[%s455 + $0x178] sm:$0xff]
        %v552 = vld [vmem:[%s455 + $0x180] sm:$0xff]
        %v553 = vld [vmem:[%s455 + $0x188] sm:$0xff]
        %v554 = vld [vmem:[%s455 + $0x190] sm:$0xff]
        %v555 = vld [vmem:[%s455 + $0x198] sm:$0xff]
        %v556 = vld [vmem:[%s455 + $0x1a0] sm:$0xff]
        %v557 = vld [vmem:[%s455 + $0x1a8] sm:$0xff]
        %v558 = vld [vmem:[%s455 + $0x1b0] sm:$0xff]
        %v559 = vld [vmem:[%s455 + $0x1b8] sm:$0xff]
        %v560 = vld [vmem:[%s455 + $0x1c0] sm:$0xff]
        %v561 = vld [vmem:[%s455 + $0x1c8] sm:$0xff]
        %v562 = vld [vmem:[%s455 + $0x1d0] sm:$0xff]
        %v563 = vld [vmem:[%s455 + $0x1d8] sm:$0xff]
        %v564 = vld [vmem:[%s455 + $0x1e0] sm:$0xff]
        %v565 = vld [vmem:[%s455 + $0x1e8] sm:$0xff]
        %v566 = vld [vmem:[%s455 + $0x1f0] sm:$0xff]
        %v567 = vld [vmem:[%s455 + $0x1f8] sm:$0xff]
        %v568 = vld [vmem:[%s455 + $0x200] sm:$0xff]
        %v569 = vld [vmem:[%s455 + $0x208] sm:$0xff]
        %v570 = vld [vmem:[%s455 + $0x210] sm:$0xff]
        %v571 = vld [vmem:[%s455 + $0x218] sm:$0xff]
        %v572 = vld [vmem:[%s455 + $0x220] sm:$0xff]
        %v573 = vld [vmem:[%s455 + $0x228] sm:$0xff]
        %v574 = vld [vmem:[%s455 + $0x230] sm:$0xff]
        %v575 = vld [vmem:[%s455 + $0x238] sm:$0xff]
        %v576 = vld [vmem:[%s455 + $0x240] sm:$0xff]
        %v577 = vld [vmem:[%s455 + $0x248] sm:$0xff]
        %v578 = vld [vmem:[%s455 + $0x250] sm:$0xff]
        %v579 = vld [vmem:[%s455 + $0x258] sm:$0xff]
        %v580 = vld [vmem:[%s455 + $0x260] sm:$0xff]
        %v581 = vld [vmem:[%s455 + $0x268] sm:$0xff]
        %v582 = vld [vmem:[%s455 + $0x270] sm:$0xff]
        %v583 = vld [vmem:[%s455 + $0x278] sm:$0xff]
        %v584 = vld [vmem:[%s455 + $0x280] sm:$0xff]
        %v585 = vld [vmem:[%s455 + $0x288] sm:$0xff]
        %v586 = vld [vmem:[%s455 + $0x290] sm:$0xff]
        %v587 = vld [vmem:[%s455 + $0x298] sm:$0xff]
        %v588 = vld [vmem:[%s455 + $0x2a0] sm:$0xff]
        %v589 = vld [vmem:[%s455 + $0x2a8] sm:$0xff]
        %v590 = vld [vmem:[%s455 + $0x2b0] sm:$0xff]
        %v591 = vld [vmem:[%s455 + $0x2b8] sm:$0xff]
        %v592 = vld [vmem:[%s455 + $0x2c0] sm:$0xff]
        %v593 = vld [vmem:[%s455 + $0x2c8] sm:$0xff]
        %v594 = vld [vmem:[%s455 + $0x2d0] sm:$0xff]
        %v595 = vld [vmem:[%s455 + $0x2d8] sm:$0xff]
        %v596 = vld [vmem:[%s455 + $0x2e0] sm:$0xff]
        %v597 = vld [vmem:[%s455 + $0x2e8] sm:$0xff]
        %v598 = vld [vmem:[%s455 + $0x2f0] sm:$0xff]
        %v599 = vld [vmem:[%s455 + $0x2f8] sm:$0xff]
        %v600 = vld [vmem:[%s455 + $0x300] sm:$0xff]
        %v601 = vld [vmem:[%s455 + $0x308] sm:$0xff]
        %v602 = vld [vmem:[%s455 + $0x310] sm:$0xff]
        %v603 = vld [vmem:[%s455 + $0x318] sm:$0xff]
        %v604 = vld [vmem:[%s455 + $0x320] sm:$0xff]
        %v605 = vld [vmem:[%s455 + $0x328] sm:$0xff]
        %v606 = vld [vmem:[%s455 + $0x330] sm:$0xff]
        %v607 = vld [vmem:[%s455 + $0x338] sm:$0xff]
        %v608 = vld [vmem:[%s455 + $0x340] sm:$0xff]
        %v609 = vld [vmem:[%s455 + $0x348] sm:$0xff]
        %v610 = vld [vmem:[%s455 + $0x350] sm:$0xff]
        %v611 = vld [vmem:[%s455 + $0x358] sm:$0xff]
        %v612 = vld [vmem:[%s455 + $0x360] sm:$0xff]
        %v613 = vld [vmem:[%s455 + $0x368] sm:$0xff]
        %v614 = vld [vmem:[%s455 + $0x370] sm:$0xff]
        %v615 = vld [vmem:[%s455 + $0x378] sm:$0xff]
        %v616 = vld [vmem:[%s455 + $0x380] sm:$0xff]
        %v617 = vld [vmem:[%s455 + $0x388] sm:$0xff]
        %v618 = vld [vmem:[%s455 + $0x390] sm:$0xff]
        %v619 = vld [vmem:[%s455 + $0x398] sm:$0xff]
        %v620 = vld [vmem:[%s455 + $0x3a0] sm:$0xff]
        %v621 = vld [vmem:[%s455 + $0x3a8] sm:$0xff]
        %v622 = vld [vmem:[%s455 + $0x3b0] sm:$0xff]
        %v623 = vld [vmem:[%s455 + $0x3b8] sm:$0xff]
        %v624 = vld [vmem:[%s455 + $0x3c0] sm:$0xff]
        %v625 = vld [vmem:[%s455 + $0x3c8] sm:$0xff]
        %v626 = vld [vmem:[%s455 + $0x3d0] sm:$0xff]
        %v627 = vld [vmem:[%s455 + $0x3d8] sm:$0xff]
        %v628 = vld [vmem:[%s455 + $0x3e0] sm:$0xff]
        %v629 = vld [vmem:[%s455 + $0x3e8] sm:$0xff]
        %v630 = vld [vmem:[%s455 + $0x3f0] sm:$0xff]
        %v631 = vld [vmem:[%s455 + $0x3f8] sm:$0xff]
        %v632 = vld [vmem:[%s496] sm:$0xf]
        %v634 = vlaneseq
        %v635 = vshrl.u32 %v634, 7
        %v636 = vsub.s32 0, %v635
        %v637 = vrot.slane %v632, %v636
        %v638 = vlaneseq
        %v639 = vshrl.u32 %v638, 7
        %v640 = vsub.s32 1, %v639
        %v641 = vrot.slane %v632, %v640
        %v642 = vlaneseq
        %v643 = vshrl.u32 %v642, 7
        %v644 = vsub.s32 2, %v643
        %v645 = vrot.slane %v632, %v644
        %v646 = vlaneseq
        %v647 = vshrl.u32 %v646, 7
        %v648 = vsub.s32 3, %v647
        %v649 = vrot.slane %v632, %v648
        %654 = vmatprep.subr.mxu0 %v505
        %655 = vmatpush1.msra.mxu0 %v504
        %656 = vmatprep.subr.mxu0 %v509
        %657 = vmatpush1.msra.mxu0 %v508
        %658 = vmatprep.subr.mxu0 %v513
        %659 = vmatpush1.msra.mxu0 %v512
        %660 = vmatprep.subr.mxu0 %v517
        %661 = vmatpush1.msra.mxu0 %v516
        %662 = vmatprep.subr.mxu0 %v521
        %663 = vmatpush1.msra.mxu0 %v520
        %664 = vmatprep.subr.mxu0 %v525
        %665 = vmatpush1.msra.mxu0 %v524
        %666 = vmatprep.subr.mxu0 %v529
        %667 = vmatpush1.msra.mxu0 %v528
        %668 = vmatprep.subr.mxu0 %v533
        %669 = vmatpush1.msra.mxu0 %v532
        %670 = vmatprep.subr.mxu0 %v537
        %671 = vmatpush1.msra.mxu0 %v536
        %672 = vmatprep.subr.mxu0 %v541
        %673 = vmatpush1.msra.mxu0 %v540
        %674 = vmatprep.subr.mxu0 %v545
        %675 = vmatpush1.msra.mxu0 %v544
        %676 = vmatprep.subr.mxu0 %v549
        %677 = vmatpush1.msra.mxu0 %v548
        %678 = vmatprep.subr.mxu0 %v553
        %679 = vmatpush1.msra.mxu0 %v552
        %680 = vmatprep.subr.mxu0 %v557
        %681 = vmatpush1.msra.mxu0 %v556
        %682 = vmatprep.subr.mxu0 %v561
        %683 = vmatpush1.msra.mxu0 %v560
        %684 = vmatprep.subr.mxu0 %v565
        %685 = vmatpush1.msra.mxu0 %v564
        %686 = vmatprep.subr.mxu0 %v569
        %687 = vmatpush1.msra.mxu0 %v568
        %688 = vmatprep.subr.mxu0 %v573
        %689 = vmatpush1.msra.mxu0 %v572
        %690 = vmatprep.subr.mxu0 %v577
        %691 = vmatpush1.msra.mxu0 %v576
        %692 = vmatprep.subr.mxu0 %v581
        %693 = vmatpush1.msra.mxu0 %v580
        %694 = vmatprep.subr.mxu0 %v585
        %695 = vmatpush1.msra.mxu0 %v584
        %696 = vmatprep.subr.mxu0 %v589
        %697 = vmatpush1.msra.mxu0 %v588
        %698 = vmatprep.subr.mxu0 %v593
        %699 = vmatpush1.msra.mxu0 %v592
        %700 = vmatprep.subr.mxu0 %v597
        %701 = vmatpush1.msra.mxu0 %v596
        %702 = vmatprep.subr.mxu0 %v601
        %703 = vmatpush1.msra.mxu0 %v600
        %704 = vmatprep.subr.mxu0 %v605
        %705 = vmatpush1.msra.mxu0 %v604
        %706 = vmatprep.subr.mxu0 %v609
        %707 = vmatpush1.msra.mxu0 %v608
        %708 = vmatprep.subr.mxu0 %v613
        %709 = vmatpush1.msra.mxu0 %v612
        %710 = vmatprep.subr.mxu0 %v617
        %711 = vmatpush1.msra.mxu0 %v616
        %712 = vmatprep.subr.mxu0 %v621
        %713 = vmatpush1.msra.mxu0 %v620
        %714 = vmatprep.subr.mxu0 %v625
        %715 = vmatpush1.msra.mxu0 %v624
        %716 = vmatprep.subr.mxu0 %v629
        %717 = vmatpush1.msra.mxu0 %v628
        %718 = vmatprep.mubr.f32.mxu0 %v501
        %719 = vmatmul.mubr.f32.gmra.mrb[0].mxu0 %v500
        %v720 = vpop.f32.mrb[0].mxu0
        %v721 = vadd.f32 %v637, %v720
        %v722 = vpop.f32.mrb[0].mxu0
        %v723 = vadd.f32 %v641, %v722
        %724 = vmatprep.mubr.f32.mxu0 %v503
        %725 = vmatmul.mubr.f32.gmra.mrb[0].mxu0 %v502
        %v726 = vpop.f32.mrb[0].mxu0
        %v727 = vadd.f32 %v637, %v726
        %v728 = vpop.f32.mrb[0].mxu0
        %v729 = vadd.f32 %v641, %v728
        %730 = vdwg.mxu0
        %731 = vmatprep.subr.mxu0 %v507
        %732 = vmatpush1.msra.mxu0 %v506
        %733 = vmatprep.subr.mxu0 %v511
        %734 = vmatpush1.msra.mxu0 %v510
        %735 = vmatprep.subr.mxu0 %v515
        %736 = vmatpush1.msra.mxu0 %v514
        %737 = vmatprep.subr.mxu0 %v519
        %738 = vmatpush1.msra.mxu0 %v518
        %739 = vmatprep.subr.mxu0 %v523
        %740 = vmatpush1.msra.mxu0 %v522
        %741 = vmatprep.subr.mxu0 %v527
        %742 = vmatpush1.msra.mxu0 %v526
        %743 = vmatprep.subr.mxu0 %v531
        %744 = vmatpush1.msra.mxu0 %v530
        %745 = vmatprep.subr.mxu0 %v535
        %746 = vmatpush1.msra.mxu0 %v534
        %747 = vmatprep.subr.mxu0 %v539
        %748 = vmatpush1.msra.mxu0 %v538
        %749 = vmatprep.subr.mxu0 %v543
        %750 = vmatpush1.msra.mxu0 %v542
        %751 = vmatprep.subr.mxu0 %v547
        %752 = vmatpush1.msra.mxu0 %v546
        %753 = vmatprep.subr.mxu0 %v551
        %754 = vmatpush1.msra.mxu0 %v550
        %755 = vmatprep.subr.mxu0 %v555
        %756 = vmatpush1.msra.mxu0 %v554
        %757 = vmatprep.subr.mxu0 %v559
        %758 = vmatpush1.msra.mxu0 %v558
        %759 = vmatprep.subr.mxu0 %v563
        %760 = vmatpush1.msra.mxu0 %v562
        %761 = vmatprep.subr.mxu0 %v567
        %762 = vmatpush1.msra.mxu0 %v566
        %763 = vmatprep.subr.mxu0 %v571
        %764 = vmatpush1.msra.mxu0 %v570
        %765 = vmatprep.subr.mxu0 %v575
        %766 = vmatpush1.msra.mxu0 %v574
        %767 = vmatprep.subr.mxu0 %v579
        %768 = vmatpush1.msra.mxu0 %v578
        %769 = vmatprep.subr.mxu0 %v583
        %770 = vmatpush1.msra.mxu0 %v582
        %771 = vmatprep.subr.mxu0 %v587
        %772 = vmatpush1.msra.mxu0 %v586
        %773 = vmatprep.subr.mxu0 %v591
        %774 = vmatpush1.msra.mxu0 %v590
        %775 = vmatprep.subr.mxu0 %v595
        %776 = vmatpush1.msra.mxu0 %v594
        %777 = vmatprep.subr.mxu0 %v599
        %778 = vmatpush1.msra.mxu0 %v598
        %779 = vmatprep.subr.mxu0 %v603
        %780 = vmatpush1.msra.mxu0 %v602
        %781 = vmatprep.subr.mxu0 %v607
        %782 = vmatpush1.msra.mxu0 %v606
        %783 = vmatprep.subr.mxu0 %v611
        %784 = vmatpush1.msra.mxu0 %v610
        %785 = vmatprep.subr.mxu0 %v615
        %786 = vmatpush1.msra.mxu0 %v614
        %787 = vmatprep.subr.mxu0 %v619
        %788 = vmatpush1.msra.mxu0 %v618
        %789 = vmatprep.subr.mxu0 %v623
        %790 = vmatpush1.msra.mxu0 %v622
        %791 = vmatprep.subr.mxu0 %v627
        %792 = vmatpush1.msra.mxu0 %v626
        %793 = vmatprep.subr.mxu0 %v631
        %794 = vmatpush1.msra.mxu0 %v630
        %795 = vmatprep.mubr.f32.mxu0 %v501
        %796 = vmatmul.mubr.f32.gmra.mrb[0].mxu0 %v500
        %v797 = vpop.f32.mrb[0].mxu0
        %v798 = vadd.f32 %v645, %v797
        %v799 = vpop.f32.mrb[0].mxu0
        %v800 = vadd.f32 %v649, %v799
        %801 = vmatprep.mubr.f32.mxu0 %v503
        %802 = vmatmul.mubr.f32.gmra.mrb[0].mxu0 %v502
        %v803 = vpop.f32.mrb[0].mxu0
        %v804 = vadd.f32 %v645, %v803
        %v805 = vpop.f32.mrb[0].mxu0
        %v806 = vadd.f32 %v649, %v805
        %807 = vdwg.mxu0
        %808 = vst [vmem:[%s484] sm:$0xff] %v721
        %809 = vst [vmem:[%s484 + $0x8] sm:$0xff] %v723
        %810 = vst [vmem:[%s484 + $0x10] sm:$0xff] %v798
        %811 = vst [vmem:[%s484 + $0x18] sm:$0xff] %v800
        %812 = vst [vmem:[%s484 + $0x20] sm:$0xff] %v727
        %813 = vst [vmem:[%s484 + $0x28] sm:$0xff] %v729
        %814 = vst [vmem:[%s484 + $0x30] sm:$0xff] %v804
        %815 = vst [vmem:[%s484 + $0x38] sm:$0xff] %v806
        %s816 = sand.u32 %s114, 1
        %s817 = sand.u32 %s114, 1
        %s818 = smul.addr %s817, 64
        %s819 = scalar_lea.vmem [#allocation3], %s818
        // Predicated region
        $region56: #{resnet_lstm_forward.9} parent=50 // pred_check
          %p820 = pneg %p124
        $region57: #{resnet_lstm_forward.9} parent=50 // pred_check_branch
          %822 = sbr.rel (%p820) target = $region59
        $region58: #{resnet_lstm_forward.9} parent=50 // pred_region
          %s823 = smul.u32 2, %s18
          %s824 = smul.u32 4, %s19
          %s825 = smul.addr %s823, 8
          %s826 = sadd.s32 %s824, %s825
          %s827 = smul.addr %s826, 8
          %s828 = scalar_lea.vmem %s3, %s827
          // Predicated region
          $region60: #{resnet_lstm_forward.9} parent=58 // pred_check
            _
          $region61: #{resnet_lstm_forward.9} parent=58 // pred_check_branch
            %830 = sbr.rel (0) target = $region63
          $region62: #{resnet_lstm_forward.9} parent=58 // pred_region
            // Predicated region
            $region64: #{resnet_lstm_forward.9} parent=62 // pred_check
              _
            $region65: #{resnet_lstm_forward.9} parent=62 // pred_check_branch
              %832 = sbr.rel (0) target = $region67
            $region66: #{resnet_lstm_forward.9} parent=62 // pred_region
              loop: start=0, step=1, limit=1
              $region68: #{resnet_lstm_forward.9} parent=66 // loop_pre_header
                _
              $region69: #{resnet_lstm_forward.9} parent=66 // loop_header
                %s834 = sphi 0, %s838
                %p835 = scmp.ge.s32.totalorder %s834, 1
                %s839 = sphi %s819, %s819
                %s840 = sphi %s828, %s828
              $region70: #{resnet_lstm_forward.9} parent=66 // loop_header_branch
                %837 = sbr.rel (%p835) target = $region74
              $region71: #{resnet_lstm_forward.9} parent=66 // loop_body
                %v841 = vld [vmem:[%s839] sm:$0xff]
                %842 = vst [vmem:[%s840] sm:$0xff] %v841
                %v843 = vld [vmem:[%s839 + $0x8] sm:$0xff]
                %844 = vst [vmem:[%s840 + $0x8] sm:$0xff] %v843
                %v845 = vld [vmem:[%s839 + $0x10] sm:$0xff]
                %846 = vst [vmem:[%s840 + $0x10] sm:$0xff] %v845
                %v847 = vld [vmem:[%s839 + $0x18] sm:$0xff]
                %848 = vst [vmem:[%s840 + $0x18] sm:$0xff] %v847
                %v849 = vld [vmem:[%s839 + $0x20] sm:$0xff]
                %850 = vst [vmem:[%s840 + $0x40] sm:$0xff] %v849
                %v851 = vld [vmem:[%s839 + $0x28] sm:$0xff]
                %852 = vst [vmem:[%s840 + $0x48] sm:$0xff] %v851
                %v853 = vld [vmem:[%s839 + $0x30] sm:$0xff]
                %854 = vst [vmem:[%s840 + $0x50] sm:$0xff] %v853
                %v855 = vld [vmem:[%s839 + $0x38] sm:$0xff]
                %856 = vst [vmem:[%s840 + $0x58] sm:$0xff] %v855
              $region72: #{resnet_lstm_forward.9} parent=66 // loop_footer
                %s838 = sadd.s32 1, %s834
              $region73: #{resnet_lstm_forward.9} parent=66 // loop_footer_branch
                %833 = sbr.rel target = $region69
              $region74: #{resnet_lstm_forward.9} parent=66 // loop_exit
                _
            $region67: #{resnet_lstm_forward.9} parent=62 // pred_fallthru
              _
            // Predicated region
            $region75: #{resnet_lstm_forward.9} parent=62 // pred_check
              _
            $region76: #{resnet_lstm_forward.9} parent=62 // pred_check_branch
              %858 = sbr.rel target = $region78
            $region77: #{resnet_lstm_forward.9} parent=62 // pred_region
              _
            $region78: #{resnet_lstm_forward.9} parent=62 // pred_fallthru
              _
          $region63: #{resnet_lstm_forward.9} parent=58 // pred_fallthru
            _
          %859 = vnop
        $region59: #{resnet_lstm_forward.9} parent=50 // pred_fallthru
          _
      $region51: #{resnet_lstm_forward.9} parent=5 // pred_fallthru
        _
      %p860 = scmp.le.s32.totalorder 2, %s9
      // Predicated region
      $region79: #{resnet_lstm_forward.9} parent=5 // pred_check
        %p861 = pneg %p860
      $region80: #{resnet_lstm_forward.9} parent=5 // pred_check_branch
        %863 = sbr.rel (%p861) target = $region82
      $region81: #{resnet_lstm_forward.9} parent=5 // pred_region
        %s864 = ssub.s32 %s9, 2
        // Predicated region
        $region83: #{resnet_lstm_forward.9} parent=81 // pred_check
          %p865 = pneg %p130
        $region84: #{resnet_lstm_forward.9} parent=81 // pred_check_branch
          %867 = sbr.rel (%p865) target = $region86
        $region85: #{resnet_lstm_forward.9} parent=81 // pred_region
          %s868 = sand.u32 %s115, 1
          %s869 = sand.u32 %s115, 1
          %s870 = smul.addr %s869, 64
          %s871 = scalar_lea.vmem [#allocation3], %s870
        $region86: #{resnet_lstm_forward.9} parent=81 // pred_fallthru
          _
      $region82: #{resnet_lstm_forward.9} parent=5 // pred_fallthru
        _
    $region6: #{resnet_lstm_forward.9} parent=1 // loop_footer
      %s13 = sadd.s32 1, %s9
    $region7: #{resnet_lstm_forward.9} parent=1 // loop_footer_branch
      %8 = sbr.rel target = $region3
    $region8: #{resnet_lstm_forward.9} parent=1 // loop_exit
      _

// kernel: resnet_lstm_forward.11
$region0: #{resnet_lstm_forward.11}
  #allocation0 [shape = 'u32[]', space=smem, size = 0x4, offset = 0x4, fixed_abs, tag = 'smem constant byte address 0x4 - core index']
  #allocation1 [shape = 'u32[144,128]{1,0:T(1,128)}', space=vmem, size = 0x12000, scoped, tag = 'internal scratch']
  %s0 = inlined_call_operand.vmem [shape: f32[8,2,256], index: 0, kind: input, shape index: {}]
  %s1 = inlined_call_operand.vmem [shape: f32[256,128], index: 1, kind: input, shape index: {}]
  %s2 = inlined_call_operand.vmem [shape: f32[1,128], index: 2, kind: input, shape index: {}]
  %s3 = inlined_call_operand.hbm [shape: f32[2,128], index: 3, kind: output, shape index: {}]
  %s4 = sld [smem:[#allocation0]]
  $region22: #{resnet_lstm_forward.11} parent=0
    _
  %s6 = ssub.s32 1, %s4
  %s7 = scalar_select 0, %s6, %s4
  $region1: #{resnet_lstm_forward.11} parent=0
    #allocation2 [shape = 'u8[1024]{0}', space=vmem, size = 0x400, scoped, tag = 'output window, operand 0, single buffered']
    #allocation3 [shape = 's32[1]{0}', space=sflag, size = 0x4, scoped, tag = 'scoped memory for resnet_lstm_forward.11']
    %8 = vsyncpa [#allocation3], 0
    // Predicated region
    $region2: #{resnet_lstm_forward.11} parent=1 // pred_check
      _
    $region3: #{resnet_lstm_forward.11} parent=1 // pred_check_branch
      %10 = sbr.rel (0) target = $region5
    $region4: #{resnet_lstm_forward.11} parent=1 // pred_region
      _
    $region5: #{resnet_lstm_forward.11} parent=1 // pred_fallthru
      _
    // Predicated region
    $region6: #{resnet_lstm_forward.11} parent=1 // pred_check
      _
    $region7: #{resnet_lstm_forward.11} parent=1 // pred_check_branch
      %12 = sbr.rel (0) target = $region9
    $region8: #{resnet_lstm_forward.11} parent=1 // pred_region
      _
    $region9: #{resnet_lstm_forward.11} parent=1 // pred_fallthru
      _
    // Predicated region
    $region10: #{resnet_lstm_forward.11} parent=1 // pred_check
      _
    $region11: #{resnet_lstm_forward.11} parent=1 // pred_check_branch
      %14 = sbr.rel (0) target = $region13
    $region12: #{resnet_lstm_forward.11} parent=1 // pred_region
      _
    $region13: #{resnet_lstm_forward.11} parent=1 // pred_fallthru
      _
    %v15 = vld [vmem:[%s0] sm:$0xf]
    %v16 = vld [vmem:[%s0 + $0x4] sm:$0xf]
    %v17 = vld [vmem:[%s0 + $0x8] sm:$0xf]
    %v18 = vld [vmem:[%s0 + $0xc] sm:$0xf]
    %v19 = vld [vmem:[%s0 + $0x10] sm:$0xf]
    %v20 = vld [vmem:[%s0 + $0x14] sm:$0xf]
    %v21 = vld [vmem:[%s0 + $0x18] sm:$0xf]
    %v22 = vld [vmem:[%s0 + $0x1c] sm:$0xf]
    %v32 = vunpack.c.l.s4 1983009808
    %v33 = vunpack.c.0.s8 %v32
    %v34 = vlaneseq
    %v35 = vshrl.u32 %v34, 7
    %v36 = vsub.s32 %v33, %v35
    %v37 = vrot.slane %v15, %v36
    %v38 = vcombine.high %v37, %v37
    %v40 = vunpack.c.l.s4 1983009808
    %v41 = vunpack.c.0.s8 %v40
    %v42 = vlaneseq
    %v43 = vshrl.u32 %v42, 7
    %v44 = vsub.s32 %v41, %v43
    %v45 = vrot.slane %v16, %v44
    %v46 = vcombine.high %v45, %v45
    %v48 = vunpack.c.l.s4 1983009808
    %v49 = vunpack.c.0.s8 %v48
    %v50 = vlaneseq
    %v51 = vshrl.u32 %v50, 7
    %v52 = vsub.s32 %v49, %v51
    %v53 = vrot.slane %v17, %v52
    %v54 = vcombine.high %v53, %v53
    %v56 = vunpack.c.l.s4 1983009808
    %v57 = vunpack.c.0.s8 %v56
    %v58 = vlaneseq
    %v59 = vshrl.u32 %v58, 7
    %v60 = vsub.s32 %v57, %v59
    %v61 = vrot.slane %v18, %v60
    %v62 = vcombine.high %v61, %v61
    %v64 = vunpack.c.l.s4 1983009808
    %v65 = vunpack.c.0.s8 %v64
    %v66 = vlaneseq
    %v67 = vshrl.u32 %v66, 7
    %v68 = vsub.s32 %v65, %v67
    %v69 = vrot.slane %v19, %v68
    %v70 = vcombine.high %v69, %v69
    %v72 = vunpack.c.l.s4 1983009808
    %v73 = vunpack.c.0.s8 %v72
    %v74 = vlaneseq
    %v75 = vshrl.u32 %v74, 7
    %v76 = vsub.s32 %v73, %v75
    %v77 = vrot.slane %v20, %v76
    %v78 = vcombine.high %v77, %v77
    %v80 = vunpack.c.l.s4 1983009808
    %v81 = vunpack.c.0.s8 %v80
    %v82 = vlaneseq
    %v83 = vshrl.u32 %v82, 7
    %v84 = vsub.s32 %v81, %v83
    %v85 = vrot.slane %v21, %v84
    %v86 = vcombine.high %v85, %v85
    %v88 = vunpack.c.l.s4 1983009808
    %v89 = vunpack.c.0.s8 %v88
    %v90 = vlaneseq
    %v91 = vshrl.u32 %v90, 7
    %v92 = vsub.s32 %v89, %v91
    %v93 = vrot.slane %v22, %v92
    %v94 = vcombine.high %v93, %v93
    %vm111 = vcmask 1041408
    %v112 = vsel %vm111, %v37, 0.0
    %v113 = vsel %vm111, %v45, 0.0
    %v114 = vadd.f32 %v112, %v113
    %v115 = vsel %vm111, %v53, 0.0
    %v116 = vadd.f32 %v114, %v115
    %v117 = vsel %vm111, %v61, 0.0
    %v118 = vadd.f32 %v116, %v117
    %v119 = vsel %vm111, %v69, 0.0
    %v120 = vadd.f32 %v118, %v119
    %v121 = vsel %vm111, %v77, 0.0
    %v122 = vadd.f32 %v120, %v121
    %v123 = vsel %vm111, %v85, 0.0
    %v124 = vadd.f32 %v122, %v123
    %v125 = vsel %vm111, %v93, 0.0
    %v126 = vadd.f32 %v124, %v125
    %v127 = vsel %vm111, %v38, 0.0
    %v128 = vsel %vm111, %v46, 0.0
    %v129 = vadd.f32 %v127, %v128
    %v130 = vsel %vm111, %v54, 0.0
    %v131 = vadd.f32 %v129, %v130
    %v132 = vsel %vm111, %v62, 0.0
    %v133 = vadd.f32 %v131, %v132
    %v134 = vsel %vm111, %v70, 0.0
    %v135 = vadd.f32 %v133, %v134
    %v136 = vsel %vm111, %v78, 0.0
    %v137 = vadd.f32 %v135, %v136
    %v138 = vsel %vm111, %v86, 0.0
    %v139 = vadd.f32 %v137, %v138
    %v140 = vsel %vm111, %v94, 0.0
    %v141 = vadd.f32 %v139, %v140
    %v142 = vrcp.pop 8.0
    %v143 = vmul.f32 %v126, %v142
    %v144 = vmul.f32 %v141, %v142
    %v145 = vld [vmem:[%s1] sm:$0xff]
    %v146 = vld [vmem:[%s1 + $0x8] sm:$0xff]
    %v147 = vld [vmem:[%s1 + $0x10] sm:$0xff]
    %v148 = vld [vmem:[%s1 + $0x18] sm:$0xff]
    %v149 = vld [vmem:[%s1 + $0x20] sm:$0xff]
    %v150 = vld [vmem:[%s1 + $0x28] sm:$0xff]
    %v151 = vld [vmem:[%s1 + $0x30] sm:$0xff]
    %v152 = vld [vmem:[%s1 + $0x38] sm:$0xff]
    %v153 = vld [vmem:[%s1 + $0x40] sm:$0xff]
    %v154 = vld [vmem:[%s1 + $0x48] sm:$0xff]
    %v155 = vld [vmem:[%s1 + $0x50] sm:$0xff]
    %v156 = vld [vmem:[%s1 + $0x58] sm:$0xff]
    %v157 = vld [vmem:[%s1 + $0x60] sm:$0xff]
    %v158 = vld [vmem:[%s1 + $0x68] sm:$0xff]
    %v159 = vld [vmem:[%s1 + $0x70] sm:$0xff]
    %v160 = vld [vmem:[%s1 + $0x78] sm:$0xff]
    %v161 = vld [vmem:[%s1 + $0x80] sm:$0xff]
    %v162 = vld [vmem:[%s1 + $0x88] sm:$0xff]
    %v163 = vld [vmem:[%s1 + $0x90] sm:$0xff]
    %v164 = vld [vmem:[%s1 + $0x98] sm:$0xff]
    %v165 = vld [vmem:[%s1 + $0xa0] sm:$0xff]
    %v166 = vld [vmem:[%s1 + $0xa8] sm:$0xff]
    %v167 = vld [vmem:[%s1 + $0xb0] sm:$0xff]
    %v168 = vld [vmem:[%s1 + $0xb8] sm:$0xff]
    %v169 = vld [vmem:[%s1 + $0xc0] sm:$0xff]
    %v170 = vld [vmem:[%s1 + $0xc8] sm:$0xff]
    %v171 = vld [vmem:[%s1 + $0xd0] sm:$0xff]
    %v172 = vld [vmem:[%s1 + $0xd8] sm:$0xff]
    %v173 = vld [vmem:[%s1 + $0xe0] sm:$0xff]
    %v174 = vld [vmem:[%s1 + $0xe8] sm:$0xff]
    %v175 = vld [vmem:[%s1 + $0xf0] sm:$0xff]
    %v176 = vld [vmem:[%s1 + $0xf8] sm:$0xff]
    %v177 = vld [vmem:[%s2] sm:$0x1]
    %v179 = vlaneseq
    %v180 = vshrl.u32 %v179, 7
    %v181 = vsub.s32 0, %v180
    %v182 = vrot.slane %v177, %v181
    %184 = vmatprep.subr.mxu0 0.0
    %185 = vmatpush1.msra.mxu0 %v145
    %186 = vmatprep.subr.mxu0 0.0
    %187 = vmatpush1.msra.mxu0 %v146
    %188 = vmatprep.subr.mxu0 0.0
    %189 = vmatpush1.msra.mxu0 %v147
    %190 = vmatprep.subr.mxu0 0.0
    %191 = vmatpush1.msra.mxu0 %v148
    %192 = vmatprep.subr.mxu0 0.0
    %193 = vmatpush1.msra.mxu0 %v149
    %194 = vmatprep.subr.mxu0 0.0
    %195 = vmatpush1.msra.mxu0 %v150
    %196 = vmatprep.subr.mxu0 0.0
    %197 = vmatpush1.msra.mxu0 %v151
    %198 = vmatprep.subr.mxu0 0.0
    %199 = vmatpush1.msra.mxu0 %v152
    %200 = vmatprep.subr.mxu0 0.0
    %201 = vmatpush1.msra.mxu0 %v153
    %202 = vmatprep.subr.mxu0 0.0
    %203 = vmatpush1.msra.mxu0 %v154
    %204 = vmatprep.subr.mxu0 0.0
    %205 = vmatpush1.msra.mxu0 %v155
    %206 = vmatprep.subr.mxu0 0.0
    %207 = vmatpush1.msra.mxu0 %v156
    %208 = vmatprep.subr.mxu0 0.0
    %209 = vmatpush1.msra.mxu0 %v157
    %210 = vmatprep.subr.mxu0 0.0
    %211 = vmatpush1.msra.mxu0 %v158
    %212 = vmatprep.subr.mxu0 0.0
    %213 = vmatpush1.msra.mxu0 %v159
    %214 = vmatprep.subr.mxu0 0.0
    %215 = vmatpush1.msra.mxu0 %v160
    %216 = vmatprep.subr.mxu0 0.0
    %217 = vmatpush1.msra.mxu0 %v161
    %218 = vmatprep.subr.mxu0 0.0
    %219 = vmatpush1.msra.mxu0 %v162
    %220 = vmatprep.subr.mxu0 0.0
    %221 = vmatpush1.msra.mxu0 %v163
    %222 = vmatprep.subr.mxu0 0.0
    %223 = vmatpush1.msra.mxu0 %v164
    %224 = vmatprep.subr.mxu0 0.0
    %225 = vmatpush1.msra.mxu0 %v165
    %226 = vmatprep.subr.mxu0 0.0
    %227 = vmatpush1.msra.mxu0 %v166
    %228 = vmatprep.subr.mxu0 0.0
    %229 = vmatpush1.msra.mxu0 %v167
    %230 = vmatprep.subr.mxu0 0.0
    %231 = vmatpush1.msra.mxu0 %v168
    %232 = vmatprep.subr.mxu0 0.0
    %233 = vmatpush1.msra.mxu0 %v169
    %234 = vmatprep.subr.mxu0 0.0
    %235 = vmatpush1.msra.mxu0 %v170
    %236 = vmatprep.subr.mxu0 0.0
    %237 = vmatpush1.msra.mxu0 %v171
    %238 = vmatprep.subr.mxu0 0.0
    %239 = vmatpush1.msra.mxu0 %v172
    %240 = vmatprep.subr.mxu0 0.0
    %241 = vmatpush1.msra.mxu0 %v173
    %242 = vmatprep.subr.mxu0 0.0
    %243 = vmatpush1.msra.mxu0 %v174
    %244 = vmatprep.subr.mxu0 0.0
    %245 = vmatpush1.msra.mxu0 %v175
    %246 = vmatprep.subr.mxu0 0.0
    %247 = vmatpush1.msra.mxu0 %v176
    %248 = vmatprep.mubr.f32.mxu0 %v144
    %249 = vmatmul.mubr.f32.gmra.mrb[0].mxu0 %v143
    %v250 = vpop.f32.mrb[0].mxu0
    %v251 = vadd.f32 %v182, %v250
    %v252 = vpop.f32.mrb[0].mxu0
    %253 = vdwg.mxu0
    %254 = vst [vmem:[#allocation2] sm:$0x3] %v251
    // Predicated region
    $region14: #{resnet_lstm_forward.11} parent=1 // pred_check
      _
    $region15: #{resnet_lstm_forward.11} parent=1 // pred_check_branch
      %256 = sbr.rel (0) target = $region17
    $region16: #{resnet_lstm_forward.11} parent=1 // pred_region
      %s258 = ssub.s32 32, 32
      %259 = vsyncadd [#allocation3], %s258
      %s261 = sshll.u32 [#allocation2], 4
      %s262 = int_to_ptr.vmem [resolvable:$true] %s261
      %264 = dma.vmem_to_hbm [thread:$0]  %s262, 32, %s3, [#allocation3]
    $region17: #{resnet_lstm_forward.11} parent=1 // pred_fallthru
      _
    // Predicated region
    $region18: #{resnet_lstm_forward.11} parent=1 // pred_check
      _
    $region19: #{resnet_lstm_forward.11} parent=1 // pred_check_branch
      %266 = sbr.rel (0) target = $region21
    $region20: #{resnet_lstm_forward.11} parent=1 // pred_region
      %267 = dma.done [#allocation3], 32
    $region21: #{resnet_lstm_forward.11} parent=1 // pred_fallthru
      _
    %268 = vsyncpa [#allocation3], 1

</llo_original>
